<compile_context>
chip_gen: v7x
topology: tpu7x:2x2x1
jax: 0.10.0
libtpu: 0.0.40
codegen_flags: <defaults>
</compile_context>

<pallas_src>
import functools

import jax
import jax.numpy as jnp
from jax.experimental import pallas as pl
from jax.experimental.pallas import tpu as pltpu

LANE = 128
SUB = 8


def _round_up(x, m):
    return ((x + m - 1) // m) * m


# ----------------------------------------------------------------------------
# Pallas kernel: fused MLP + mask + hard-clip + per-row squared-error sums
# ----------------------------------------------------------------------------
def _fcnet_kernel(dim,
                  alpha_ref,                       # SMEM (3,) PReLU slopes
                  inp_ref, mask_ref, b_ref, z_ref,
                  w1_ref, b1_ref, w2_ref, b2_ref,
                  we1_ref, be1_ref, we2_ref, be2_ref,
                  xest_ref, rowsq_ref):
    a1 = alpha_ref[0]
    a2 = alpha_ref[1]
    ae = alpha_ref[2]

    # layer1: Linear (+ folded BN) + PReLU   (Dropout = identity in eval).
    # Contraction is over the true in_dim; Mosaic pads to MXU tiles internally.
    h = jnp.dot(inp_ref[...], w1_ref[...],
                preferred_element_type=jnp.float32) + b1_ref[...]
    h = jnp.where(h > 0, h, a1 * h)

    # layer2
    h = jnp.dot(h, w2_ref[...], preferred_element_type=jnp.float32) + b2_ref[...]
    h = jnp.where(h > 0, h, a2 * h)

    # layer_end: Linear (+BN) + PReLU + Linear
    h = jnp.dot(h, we1_ref[...], preferred_element_type=jnp.float32) + be1_ref[...]
    h = jnp.where(h > 0, h, ae * h)
    h = jnp.dot(h, we2_ref[...], preferred_element_type=jnp.float32) + be2_ref[...]

    # mask + hard clip:  -1 + relu(x+.5)/.5 - relu(x-.5)/.5  ==  clip(2x, -1, 1)
    xt = h[:, :dim] * mask_ref[...]                          # (tile, dim)
    x_est = jnp.minimum(jnp.maximum(2.0 * xt, -1.0), 1.0)
    xest_ref[...] = x_est

    # pred[n, p] = sum_d x_est[n, d] * B[n, d, p], p = (m, k) flattened (P = dim*K)
    pred = jnp.sum(x_est[:, :, None] * b_ref[...], axis=1)   # (tile, P)
    diff = z_ref[...] - pred
    # per-row squared-error sums; padded batch rows (if any) are exactly zero
    rowsq_ref[...] = jnp.sum(diff * diff, axis=1, keepdims=True)


# ----------------------------------------------------------------------------
# One-time parameter padding (weights/biases are call-invariant, VMEM-resident)
# ----------------------------------------------------------------------------
def prepare_params(folded, dim):
    in_dim = dim * (dim + 1)
    d2 = dim * dim
    INp = _round_up(in_dim, LANE)
    D2p = _round_up(d2, LANE)
    Dp = _round_up(dim, LANE)

    (W1, b1), (W2, b2), (We1, be1), (We2, be2) = folded

    def pad2(a, r, c):
        return jnp.pad(a, ((0, r - a.shape[0]), (0, c - a.shape[1])))

    def padb(b, c):
        return jnp.pad(b, (0, c - b.shape[0]))[None, :]

    # W1 keeps its true input dim (the activations stream unpadded); all
    # downstream weights are 128-padded so the hidden activations stay at
    # proven MXU-friendly widths.  Padded rows/cols/biases are zero.
    return (pad2(W1, in_dim, INp), padb(b1, INp),
            pad2(W2, INp, D2p), padb(b2, D2p),
            pad2(We1, D2p, Dp), padb(be1, Dp),
            pad2(We2, Dp, Dp), padb(be2, Dp))


# ----------------------------------------------------------------------------
# Wrapper: batch-tiled pallas_call, no lane padding, batch pad only if needed
# ----------------------------------------------------------------------------
def fcnet_pallas_forward(inp, x_target, z, B, Mask, padded_params, alphas,
                         *, dim, num_subcarriers, loss_scalar=1.0, tile_n=512):
    # x_target only feeds the (buggy) supervised branch of the original module.
    del x_target
    N, in_dim = inp.shape
    K = num_subcarriers
    P = dim * K

    INp = _round_up(in_dim, LANE)
    D2p = _round_up(dim * dim, LANE)
    Dp = _round_up(dim, LANE)

    # Batch tile: multiple of 8 sublanes; aim for >= 2 grid steps so the
    # "parallel" axis has work for both TensorCores on v7x.
    tile = min(int(tile_n), _round_up((N + 1) // 2, SUB))
    tile = max(SUB, (tile // SUB) * SUB)
    Np = _round_up(N, tile)
    G = Np // tile

    w1, b1, w2, b2, we1, be1, we2, be2 = padded_params

    # No lane padding anywhere (full-extent last-dim blocks).  Batch-axis
    # zero-pad only when the tile does not divide N; zero Mask/z/B rows make
    # the padded rows' loss contribution exactly zero.
    inp_r = inp
    mask_r = Mask
    b_r = B.reshape(N, dim, P)      # contiguous reshape of (N, dim, dim, K) -> no copy
    z_r = z.reshape(N, P)
    if Np != N:
        inp_r = jnp.pad(inp_r, ((0, Np - N), (0, 0)))
        mask_r = jnp.pad(mask_r, ((0, Np - N), (0, 0)))
        b_r = jnp.pad(b_r, ((0, Np - N), (0, 0), (0, 0)))
        z_r = jnp.pad(z_r, ((0, Np - N), (0, 0)))

    smem_spec = pl.BlockSpec(memory_space=pltpu.MemorySpace.SMEM)
    row2 = lambda i: (i, 0)          # batch-tiled 2-D operands
    row3 = lambda i: (i, 0, 0)       # batch-tiled 3-D operand (B)
    const2 = lambda i: (0, 0)        # resident weights / biases

    # VMEM budget: double-buffered streaming blocks in (8,128)-tiled layout.
    lane_tiles = lambda w: _round_up(w, LANE) // LANE
    per_row = 512 * (_round_up(dim, SUB) * lane_tiles(P)        # B block
                     + lane_tiles(in_dim) + lane_tiles(dim)     # inp, Mask
                     + lane_tiles(P)                            # z
                     + lane_tiles(dim) + 1)                     # x_est, rowsq
    est = 2 * tile * per_row + (4 << 20)                        # + weights/headroom
    vmem_limit = int(min(64 << 20, max(32 << 20, 2 * est)))

    kernel = functools.partial(_fcnet_kernel, dim)

    x_est_p, rowsq = pl.pallas_call(
        kernel,
        grid=(G,),
        in_specs=[
            smem_spec,                                       # alphas
            pl.BlockSpec((tile, in_dim), row2),              # inp   (no lane pad)
            pl.BlockSpec((tile, dim), row2),                 # Mask  (no lane pad)
            pl.BlockSpec((tile, dim, P), row3),              # B     (no lane pad)
            pl.BlockSpec((tile, P), row2),                   # z     (no lane pad)
            pl.BlockSpec((in_dim, INp), const2),             # W1
            pl.BlockSpec((1, INp), const2),                  # b1
            pl.BlockSpec((INp, D2p), const2),                # W2
            pl.BlockSpec((1, D2p), const2),                  # b2
            pl.BlockSpec((D2p, Dp), const2),                 # We1
            pl.BlockSpec((1, Dp), const2),                   # be1
            pl.BlockSpec((Dp, Dp), const2),                  # We2
            pl.BlockSpec((1, Dp), const2),                   # be2
        ],
        out_specs=(
            pl.BlockSpec((tile, dim), row2),                 # x_est (dim lanes only)
            pl.BlockSpec((tile, 1), row2),                   # per-row sq-err sums
        ),
        out_shape=(jax.ShapeDtypeStruct((Np, dim), jnp.float32),
                   jax.ShapeDtypeStruct((Np, 1), jnp.float32)),
        compiler_params=pltpu.CompilerParams(
            dimension_semantics=("parallel",),
            vmem_limit_bytes=vmem_limit),
    )(alphas, inp_r, mask_r, b_r, z_r, w1, b1, w2, b2, we1, be1, we2, be2)

    # loss = scalar * sum_k mean_{n,m} diff^2 = scalar/(N*dim) * total_sum
    loss = (loss_scalar / float(N * dim)) * jnp.sum(rowsq[:N])
    return x_est_p[:N], loss


# ----------------------------------------------------------------------------
# Deterministic parameter init (synthetic; BN folded into preceding Linear)
# ----------------------------------------------------------------------------
def init_params(key, dim):
    in_dim = dim * (dim + 1)
    d2 = dim * dim
    eps = 1e-5

    def linear(k, fi, fo):
        kw, kb = jax.random.split(k)
        bound = 1.0 / jnp.sqrt(fi)
        W = jax.random.uniform(kw, (fi, fo), jnp.float32, -bound, bound)
        b = jax.random.uniform(kb, (fo,), jnp.float32, -bound, bound)
        return W, b

    def bn(k, f):
        k1, k2, k3, k4 = jax.random.split(k, 4)
        gamma = 1.0 + 0.1 * jax.random.normal(k1, (f,), jnp.float32)
        beta = 0.1 * jax.random.normal(k2, (f,), jnp.float32)
        rm = 0.1 * jax.random.normal(k3, (f,), jnp.float32)
        rv = 1.0 + 0.1 * jax.random.uniform(k4, (f,), jnp.float32)
        return gamma, beta, rm, rv

    def fold(W, b, bn_params):
        gamma, beta, rm, rv = bn_params
        scale = gamma / jnp.sqrt(rv + eps)
        return W * scale[None, :], (b - rm) * scale + beta

    ks = jax.random.split(key, 8)
    W1, b1 = linear(ks[0], in_dim, in_dim)
    W1, b1 = fold(W1, b1, bn(ks[1], in_dim))
    W2, b2 = linear(ks[2], in_dim, d2)
    W2, b2 = fold(W2, b2, bn(ks[3], d2))
    We1, be1 = linear(ks[4], d2, dim)
    We1, be1 = fold(We1, be1, bn(ks[5], dim))
    We2, be2 = linear(ks[6], dim, dim)
    # PReLU default init: single slope 0.25 per PReLU module
    alphas = jnp.array([0.25, 0.25, 0.25], dtype=jnp.float32)
    # NOTE: layer3 exists in __init__ but is not used in forward -> not created.
    return ((W1, b1), (W2, b2), (We1, be1), (We2, be2)), alphas


# ----------------------------------------------------------------------------
# Pure-JAX reference (for correctness check)
# ----------------------------------------------------------------------------
def reference_forward(inp, z, B, Mask, folded, alphas, dim, K, loss_scalar=1.0):
    (W1, b1), (W2, b2), (We1, be1), (We2, be2) = folded
    a1, a2, ae = alphas

    def prelu(x, a):
        return jnp.where(x > 0, x, a * x)

    h = prelu(inp @ W1 + b1, a1)
    h = prelu(h @ W2 + b2, a2)
    h = prelu(h @ We1 + be1, ae)
    h = h @ We2 + be2
    xt = h * Mask
    x_est = -1.0 + jnp.maximum(xt + 0.5, 0.0) / 0.5 - jnp.maximum(xt - 0.5, 0.0) / 0.5
    dis_sum = 0.0
    for k in range(K):
        pred = jnp.einsum('nd,ndm->nm', x_est, B[:, :, :, k])
        diff = z[:, :, k] - pred
        dis_sum = dis_sum + jnp.mean(diff ** 2)
    return x_est, loss_scalar * dis_sum


if __name__ == "__main__":
    # Small shapes consistent with the module: dim=4 -> in_dim = dim*(dim+1) = 20
    dim, K, N = 4, 6, 200
    in_dim = dim * (dim + 1)

    key = jax.random.PRNGKey(0)
    k_inp, k_x, k_z, k_B, k_mask, k_par = jax.random.split(key, 6)

    inp = jax.random.normal(k_inp, (N, in_dim), jnp.float32)
    x_t = jax.random.normal(k_x, (N, dim), jnp.float32)          # supervised target (unused)
    z = jax.random.normal(k_z, (N, dim, K), jnp.float32)
    B = jax.random.normal(k_B, (N, dim, dim, K), jnp.float32)
    Mask = (jax.random.uniform(k_mask, (N, dim)) > 0.3).astype(jnp.float32)

    folded, alphas = init_params(k_par, dim)
    padded = prepare_params(folded, dim)     # one-time weight/bias padding

    # TODO(synk): supervised branch of the original forward references an
    # undefined `dis_sum` (NameError in PyTorch) -> only unsupervised path here.
    fwd = jax.jit(functools.partial(
        fcnet_pallas_forward,
        dim=dim, num_subcarriers=K, loss_scalar=1.0))

    x_est, loss = fwd(inp, x_t, z, B, Mask, padded, alphas)
    jax.block_until_ready((x_est, loss))

    x_ref, loss_ref = reference_forward(inp, z, B, Mask, folded, alphas, dim, K, 1.0)
    assert jnp.allclose(x_est, x_ref, atol=1e-2, rtol=1e-2), "x_est mismatch"
    assert jnp.allclose(loss, loss_ref, atol=1e-2, rtol=1e-2), "loss mismatch"

    print("KERNEL_OK")
</pallas_src>

<mosaic_0001>
module attributes {stable_mosaic.version = 11 : i64} {
  func.func @_fcnet_kernel(%arg0: i32, %arg1: memref<3xf32, #tpu.memory_space<smem>>, %arg2: memref<104x20xf32, #tpu.memory_space<vmem>>, %arg3: memref<104x4xf32, #tpu.memory_space<vmem>>, %arg4: memref<104x4x24xf32, #tpu.memory_space<vmem>>, %arg5: memref<104x24xf32, #tpu.memory_space<vmem>>, %arg6: memref<20x128xf32, #tpu.memory_space<vmem>>, %arg7: memref<1x128xf32, #tpu.memory_space<vmem>>, %arg8: memref<128x128xf32, #tpu.memory_space<vmem>>, %arg9: memref<1x128xf32, #tpu.memory_space<vmem>>, %arg10: memref<128x128xf32, #tpu.memory_space<vmem>>, %arg11: memref<1x128xf32, #tpu.memory_space<vmem>>, %arg12: memref<128x128xf32, #tpu.memory_space<vmem>>, %arg13: memref<1x128xf32, #tpu.memory_space<vmem>>, %arg14: memref<104x4xf32, #tpu.memory_space<vmem>>, %arg15: memref<104x1xf32, #tpu.memory_space<vmem>>) attributes {dimension_semantics = [#tpu.dimension_semantics<parallel>], iteration_bounds = array<i64: 2>, scalar_prefetch = 0 : i64, scratch_operands = 0 : i64, tpu.core_type = #tpu.core_type<tc>, window_params = [{transform_indices = @transform_0, window_bounds = array<i64: 3>}, {transform_indices = @transform_1, window_bounds = array<i64: 104, 20>}, {transform_indices = @transform_2, window_bounds = array<i64: 104, 4>}, {transform_indices = @transform_3, window_bounds = array<i64: 104, 4, 24>}, {transform_indices = @transform_4, window_bounds = array<i64: 104, 24>}, {pipeline_mode = #tpu.pipeline_mode<synchronous>, transform_indices = @transform_5, window_bounds = array<i64: 20, 128>}, {pipeline_mode = #tpu.pipeline_mode<synchronous>, transform_indices = @transform_6, window_bounds = array<i64: 1, 128>}, {pipeline_mode = #tpu.pipeline_mode<synchronous>, transform_indices = @transform_7, window_bounds = array<i64: 128, 128>}, {pipeline_mode = #tpu.pipeline_mode<synchronous>, transform_indices = @transform_8, window_bounds = array<i64: 1, 128>}, {pipeline_mode = #tpu.pipeline_mode<synchronous>, transform_indices = @transform_9, window_bounds = array<i64: 128, 128>}, {pipeline_mode = #tpu.pipeline_mode<synchronous>, transform_indices = @transform_10, window_bounds = array<i64: 1, 128>}, {pipeline_mode = #tpu.pipeline_mode<synchronous>, transform_indices = @transform_11, window_bounds = array<i64: 128, 128>}, {pipeline_mode = #tpu.pipeline_mode<synchronous>, transform_indices = @transform_12, window_bounds = array<i64: 1, 128>}, {transform_indices = @transform_13, window_bounds = array<i64: 104, 4>}, {transform_indices = @transform_14, window_bounds = array<i64: 104, 1>}]} {
    %c0 = arith.constant 0 : index
    %0 = memref.load %arg1[%c0] : memref<3xf32, #tpu.memory_space<smem>>
    %c1 = arith.constant 1 : index
    %1 = memref.load %arg1[%c1] : memref<3xf32, #tpu.memory_space<smem>>
    %c2 = arith.constant 2 : index
    %2 = memref.load %arg1[%c2] : memref<3xf32, #tpu.memory_space<smem>>
    %c0_0 = arith.constant 0 : index
    %c0_1 = arith.constant 0 : index
    %3 = vector.load %arg2[%c0_0, %c0_1] : memref<104x20xf32, #tpu.memory_space<vmem>>, vector<104x20xf32>
    %c0_2 = arith.constant 0 : index
    %c0_3 = arith.constant 0 : index
    %4 = vector.load %arg6[%c0_2, %c0_3] : memref<20x128xf32, #tpu.memory_space<vmem>>, vector<20x128xf32>
    %cst = arith.constant dense<0.000000e+00> : vector<104x128xf32>
    %5 = tpu.matmul %3, %4, %cst {dimension_numbers = #tpu.dot_dimension_numbers<[1], [0], [0], [1], [0, 0, 1, 1], [], []>} : vector<104x20xf32>, vector<20x128xf32>, vector<104x128xf32> -> vector<104x128xf32>
    %c0_4 = arith.constant 0 : index
    %c0_5 = arith.constant 0 : index
    %6 = vector.load %arg7[%c0_4, %c0_5] : memref<1x128xf32, #tpu.memory_space<vmem>>, vector<1x128xf32>
    %7 = vector.broadcast %6 : vector<1x128xf32> to vector<104x128xf32>
    %8 = arith.addf %5, %7 : vector<104x128xf32>
    %cst_6 = arith.constant 0.000000e+00 : f32
    %9 = vector.broadcast %cst_6 : f32 to vector<104x128xf32>
    %10 = arith.cmpf ogt, %8, %9 : vector<104x128xf32>
    %11 = vector.broadcast %0 : f32 to vector<104x128xf32>
    %12 = arith.mulf %11, %8 : vector<104x128xf32>
    %13 = arith.select %10, %8, %12 : vector<104x128xi1>, vector<104x128xf32>
    %c0_7 = arith.constant 0 : index
    %c0_8 = arith.constant 0 : index
    %14 = vector.load %arg8[%c0_7, %c0_8] : memref<128x128xf32, #tpu.memory_space<vmem>>, vector<128x128xf32>
    %cst_9 = arith.constant dense<0.000000e+00> : vector<104x128xf32>
    %15 = tpu.matmul %13, %14, %cst_9 {dimension_numbers = #tpu.dot_dimension_numbers<[1], [0], [0], [1], [0, 0, 1, 1], [], []>} : vector<104x128xf32>, vector<128x128xf32>, vector<104x128xf32> -> vector<104x128xf32>
    %c0_10 = arith.constant 0 : index
    %c0_11 = arith.constant 0 : index
    %16 = vector.load %arg9[%c0_10, %c0_11] : memref<1x128xf32, #tpu.memory_space<vmem>>, vector<1x128xf32>
    %17 = vector.broadcast %16 : vector<1x128xf32> to vector<104x128xf32>
    %18 = arith.addf %15, %17 : vector<104x128xf32>
    %cst_12 = arith.constant 0.000000e+00 : f32
    %19 = vector.broadcast %cst_12 : f32 to vector<104x128xf32>
    %20 = arith.cmpf ogt, %18, %19 : vector<104x128xf32>
    %21 = vector.broadcast %1 : f32 to vector<104x128xf32>
    %22 = arith.mulf %21, %18 : vector<104x128xf32>
    %23 = arith.select %20, %18, %22 : vector<104x128xi1>, vector<104x128xf32>
    %c0_13 = arith.constant 0 : index
    %c0_14 = arith.constant 0 : index
    %24 = vector.load %arg10[%c0_13, %c0_14] : memref<128x128xf32, #tpu.memory_space<vmem>>, vector<128x128xf32>
    %cst_15 = arith.constant dense<0.000000e+00> : vector<104x128xf32>
    %25 = tpu.matmul %23, %24, %cst_15 {dimension_numbers = #tpu.dot_dimension_numbers<[1], [0], [0], [1], [0, 0, 1, 1], [], []>} : vector<104x128xf32>, vector<128x128xf32>, vector<104x128xf32> -> vector<104x128xf32>
    %c0_16 = arith.constant 0 : index
    %c0_17 = arith.constant 0 : index
    %26 = vector.load %arg11[%c0_16, %c0_17] : memref<1x128xf32, #tpu.memory_space<vmem>>, vector<1x128xf32>
    %27 = vector.broadcast %26 : vector<1x128xf32> to vector<104x128xf32>
    %28 = arith.addf %25, %27 : vector<104x128xf32>
    %cst_18 = arith.constant 0.000000e+00 : f32
    %29 = vector.broadcast %cst_18 : f32 to vector<104x128xf32>
    %30 = arith.cmpf ogt, %28, %29 : vector<104x128xf32>
    %31 = vector.broadcast %2 : f32 to vector<104x128xf32>
    %32 = arith.mulf %31, %28 : vector<104x128xf32>
    %33 = arith.select %30, %28, %32 : vector<104x128xi1>, vector<104x128xf32>
    %c0_19 = arith.constant 0 : index
    %c0_20 = arith.constant 0 : index
    %34 = vector.load %arg12[%c0_19, %c0_20] : memref<128x128xf32, #tpu.memory_space<vmem>>, vector<128x128xf32>
    %cst_21 = arith.constant dense<0.000000e+00> : vector<104x128xf32>
    %35 = tpu.matmul %33, %34, %cst_21 {dimension_numbers = #tpu.dot_dimension_numbers<[1], [0], [0], [1], [0, 0, 1, 1], [], []>} : vector<104x128xf32>, vector<128x128xf32>, vector<104x128xf32> -> vector<104x128xf32>
    %c0_22 = arith.constant 0 : index
    %c0_23 = arith.constant 0 : index
    %36 = vector.load %arg13[%c0_22, %c0_23] : memref<1x128xf32, #tpu.memory_space<vmem>>, vector<1x128xf32>
    %37 = vector.broadcast %36 : vector<1x128xf32> to vector<104x128xf32>
    %38 = arith.addf %35, %37 : vector<104x128xf32>
    %39 = vector.extract_strided_slice %38 {offsets = [0, 0], sizes = [104, 4], strides = [1, 1]} : vector<104x128xf32> to vector<104x4xf32>
    %c0_24 = arith.constant 0 : index
    %c0_25 = arith.constant 0 : index
    %40 = vector.load %arg3[%c0_24, %c0_25] : memref<104x4xf32, #tpu.memory_space<vmem>>, vector<104x4xf32>
    %41 = arith.mulf %39, %40 : vector<104x4xf32>
    %cst_26 = arith.constant 2.000000e+00 : f32
    %42 = vector.broadcast %cst_26 : f32 to vector<104x4xf32>
    %43 = arith.mulf %42, %41 : vector<104x4xf32>
    %cst_27 = arith.constant -1.000000e+00 : f32
    %44 = vector.broadcast %cst_27 : f32 to vector<104x4xf32>
    %45 = arith.maximumf %43, %44 : vector<104x4xf32>
    %cst_28 = arith.constant 1.000000e+00 : f32
    %46 = vector.broadcast %cst_28 : f32 to vector<104x4xf32>
    %47 = arith.minimumf %45, %46 : vector<104x4xf32>
    %c0_29 = arith.constant 0 : index
    %c0_30 = arith.constant 0 : index
    %48 = vector.load %arg14[%c0_29, %c0_30] : memref<104x4xf32, #tpu.memory_space<vmem>>, vector<104x4xf32>
    tpu.vector_store %arg14[%c0_29, %c0_30], %47 {strides = array<i32>} : memref<104x4xf32, #tpu.memory_space<vmem>>, vector<104x4xf32>,
    %49 = vector.shape_cast %47 : vector<104x4xf32> to vector<104x4x1xf32>
    %c0_31 = arith.constant 0 : index
    %c0_32 = arith.constant 0 : index
    %c0_33 = arith.constant 0 : index
    %50 = vector.load %arg4[%c0_31, %c0_32, %c0_33] : memref<104x4x24xf32, #tpu.memory_space<vmem>>, vector<104x4x24xf32>
    %51 = vector.broadcast %49 : vector<104x4x1xf32> to vector<104x4x24xf32>
    %52 = arith.mulf %51, %50 : vector<104x4x24xf32>
    %cst_34 = arith.constant dense<0.000000e+00> : vector<104x24xf32>
    %53 = vector.multi_reduction <add>, %52, %cst_34 [1] : vector<104x4x24xf32> to vector<104x24xf32>
    %c0_35 = arith.constant 0 : index
    %c0_36 = arith.constant 0 : index
    %54 = vector.load %arg5[%c0_35, %c0_36] : memref<104x24xf32, #tpu.memory_space<vmem>>, vector<104x24xf32>
    %55 = arith.subf %54, %53 : vector<104x24xf32>
    %56 = arith.mulf %55, %55 : vector<104x24xf32>
    %cst_37 = arith.constant dense<0.000000e+00> : vector<104xf32>
    %57 = vector.multi_reduction <add>, %56, %cst_37 [1] : vector<104x24xf32> to vector<104xf32>
    %58 = vector.shape_cast %57 : vector<104xf32> to vector<104x1xf32>
    %c0_38 = arith.constant 0 : index
    %c0_39 = arith.constant 0 : index
    %59 = vector.load %arg15[%c0_38, %c0_39] : memref<104x1xf32, #tpu.memory_space<vmem>>, vector<104x1xf32>
    tpu.vector_store %arg15[%c0_38, %c0_39], %58 {strides = array<i32>} : memref<104x1xf32, #tpu.memory_space<vmem>>, vector<104x1xf32>,
    return
  }
  func.func @transform_0(%arg0: i32) -> i32 {
    %c0_i32 = arith.constant 0 : i32
    %c0_i32_0 = arith.constant 0 : i32
    return %c0_i32 : i32
  }
  func.func @transform_1(%arg0: i32) -> (i32, i32) {
    %c0_i32 = arith.constant 0 : i32
    %c0_i32_0 = arith.constant 0 : i32
    return %arg0, %c0_i32 : i32, i32
  }
  func.func @transform_2(%arg0: i32) -> (i32, i32) {
    %c0_i32 = arith.constant 0 : i32
    %c0_i32_0 = arith.constant 0 : i32
    return %arg0, %c0_i32 : i32, i32
  }
  func.func @transform_3(%arg0: i32) -> (i32, i32, i32) {
    %c0_i32 = arith.constant 0 : i32
    %c0_i32_0 = arith.constant 0 : i32
    %c0_i32_1 = arith.constant 0 : i32
    return %arg0, %c0_i32, %c0_i32_0 : i32, i32, i32
  }
  func.func @transform_4(%arg0: i32) -> (i32, i32) {
    %c0_i32 = arith.constant 0 : i32
    %c0_i32_0 = arith.constant 0 : i32
    return %arg0, %c0_i32 : i32, i32
  }
  func.func @transform_5(%arg0: i32) -> (i32, i32) {
    %c0_i32 = arith.constant 0 : i32
    %c0_i32_0 = arith.constant 0 : i32
    %c0_i32_1 = arith.constant 0 : i32
    return %c0_i32, %c0_i32_0 : i32, i32
  }
  func.func @transform_6(%arg0: i32) -> (i32, i32) {
    %c0_i32 = arith.constant 0 : i32
    %c0_i32_0 = arith.constant 0 : i32
    %c0_i32_1 = arith.constant 0 : i32
    return %c0_i32, %c0_i32_0 : i32, i32
  }
  func.func @transform_7(%arg0: i32) -> (i32, i32) {
    %c0_i32 = arith.constant 0 : i32
    %c0_i32_0 = arith.constant 0 : i32
    %c0_i32_1 = arith.constant 0 : i32
    return %c0_i32, %c0_i32_0 : i32, i32
  }
  func.func @transform_8(%arg0: i32) -> (i32, i32) {
    %c0_i32 = arith.constant 0 : i32
    %c0_i32_0 = arith.constant 0 : i32
    %c0_i32_1 = arith.constant 0 : i32
    return %c0_i32, %c0_i32_0 : i32, i32
  }
  func.func @transform_9(%arg0: i32) -> (i32, i32) {
    %c0_i32 = arith.constant 0 : i32
    %c0_i32_0 = arith.constant 0 : i32
    %c0_i32_1 = arith.constant 0 : i32
    return %c0_i32, %c0_i32_0 : i32, i32
  }
  func.func @transform_10(%arg0: i32) -> (i32, i32) {
    %c0_i32 = arith.constant 0 : i32
    %c0_i32_0 = arith.constant 0 : i32
    %c0_i32_1 = arith.constant 0 : i32
    return %c0_i32, %c0_i32_0 : i32, i32
  }
  func.func @transform_11(%arg0: i32) -> (i32, i32) {
    %c0_i32 = arith.constant 0 : i32
    %c0_i32_0 = arith.constant 0 : i32
    %c0_i32_1 = arith.constant 0 : i32
    return %c0_i32, %c0_i32_0 : i32, i32
  }
  func.func @transform_12(%arg0: i32) -> (i32, i32) {
    %c0_i32 = arith.constant 0 : i32
    %c0_i32_0 = arith.constant 0 : i32
    %c0_i32_1 = arith.constant 0 : i32
    return %c0_i32, %c0_i32_0 : i32, i32
  }
  func.func @transform_13(%arg0: i32) -> (i32, i32) {
    %c0_i32 = arith.constant 0 : i32
    %c0_i32_0 = arith.constant 0 : i32
    return %arg0, %c0_i32 : i32, i32
  }
  func.func @transform_14(%arg0: i32) -> (i32, i32) {
    %c0_i32 = arith.constant 0 : i32
    %c0_i32_0 = arith.constant 0 : i32
    return %arg0, %c0_i32 : i32, i32
  }
}

</mosaic_0001>

<llo_original>
// kernel: fcnet_pallas_forward.1
$region0: #{fcnet_pallas_forward.1}
  #allocation0 [shape = 'u32[]', space=smem, size = 0x4, offset = 0x4, fixed_abs, tag = 'smem constant byte address 0x4 - core index']
  #allocation1 [shape = 'u32[144,128]{1,0:T(1,128)}', space=vmem, size = 0x12000, scoped, tag = 'internal scratch']
  %s0 = inlined_call_operand.vmem [shape: f32[3], index: 0, kind: input, shape index: {}]
  %s1 = inlined_call_operand.vmem [shape: f32[208,20], index: 1, kind: input, shape index: {}]
  %s2 = inlined_call_operand.vmem [shape: f32[208,4], index: 2, kind: input, shape index: {}]
  %s3 = inlined_call_operand.vmem [shape: f32[208,4,24], index: 3, kind: input, shape index: {}]
  %s4 = inlined_call_operand.vmem [shape: f32[208,24], index: 4, kind: input, shape index: {}]
  %s5 = inlined_call_operand.vmem [shape: f32[20,128], index: 5, kind: input, shape index: {}]
  %s6 = inlined_call_operand.vmem [shape: f32[1,128], index: 6, kind: input, shape index: {}]
  %s7 = inlined_call_operand.vmem [shape: f32[128,128], index: 7, kind: input, shape index: {}]
  %s8 = inlined_call_operand.vmem [shape: f32[1,128], index: 8, kind: input, shape index: {}]
  %s9 = inlined_call_operand.vmem [shape: f32[128,128], index: 9, kind: input, shape index: {}]
  %s10 = inlined_call_operand.vmem [shape: f32[1,128], index: 10, kind: input, shape index: {}]
  %s11 = inlined_call_operand.vmem [shape: f32[128,128], index: 11, kind: input, shape index: {}]
  %s12 = inlined_call_operand.vmem [shape: f32[1,128], index: 12, kind: input, shape index: {}]
  %s13 = inlined_call_operand.vmem [shape: f32[208,4], index: 13, kind: output, shape index: {0}]
  %s14 = inlined_call_operand.vmem [shape: f32[208,1], index: 14, kind: output, shape index: {1}]
  %15 = xla_tuple %s13, %s14
  %s16 = sld [smem:[#allocation0]]
  $region97: #{fcnet_pallas_forward.1} parent=0
    _
  %s18 = ssub.s32 1, %s16
  %s19 = scalar_select 0, %s18, %s16
  $region1: #{fcnet_pallas_forward.1} parent=0
    #allocation2 [shape = 'u8[512]{0}', space=smem, size = 0x200, scoped, tag = 'input window, operand 0, single buffered']
    #allocation3 [shape = 's32[2]{0}', space=sflag, size = 0x8, scoped, tag = 'scoped memory for fcnet_pallas_forward.1']
    %20 = vsyncpa [#allocation3], 0
    loop: start=0, step=1, limit=4
    $region2: #{fcnet_pallas_forward.1} parent=1 // loop_pre_header
      _
    $region3: #{fcnet_pallas_forward.1} parent=1 // loop_header
      %s22 = sphi 0, %s26
      %p23 = scmp.ge.s32.totalorder %s22, 4
      %s30 = sphi 0, %s30
      %s32 = sphi 0, %s30
      %s33 = sphi 0, %s32
      %s47 = sphi 0, %s33
      %s53 = sphi 0, %s55
      %s56 = sphi 0, %s53
      %s57 = sphi 0, %s56
      %s73 = sphi 0, %s57
      %s79 = sphi 0, %s81
      %s82 = sphi 0, %s79
      %s83 = sphi 0, %s82
      %s99 = sphi 0, %s83
      %s105 = sphi 0, %s107
      %s108 = sphi 0, %s105
      %s109 = sphi 0, %s108
      %s125 = sphi 0, %s109
      %s131 = sphi 0, %s133
      %s134 = sphi 0, %s131
      %s135 = sphi 0, %s134
      %s151 = sphi 0, %s135
      %s155 = sphi 0, %s155
      %s157 = sphi 0, %s155
      %s158 = sphi 0, %s157
      %s172 = sphi 0, %s158
      %s176 = sphi 0, %s176
      %s178 = sphi 0, %s176
      %s179 = sphi 0, %s178
      %s193 = sphi 0, %s179
      %s197 = sphi 0, %s197
      %s199 = sphi 0, %s197
      %s200 = sphi 0, %s199
      %s214 = sphi 0, %s200
      %s218 = sphi 0, %s218
      %s220 = sphi 0, %s218
      %s221 = sphi 0, %s220
      %s235 = sphi 0, %s221
      %s239 = sphi 0, %s239
      %s241 = sphi 0, %s239
      %s242 = sphi 0, %s241
      %s256 = sphi 0, %s242
      %s260 = sphi 0, %s260
      %s262 = sphi 0, %s260
      %s263 = sphi 0, %s262
      %s277 = sphi 0, %s263
      %s281 = sphi 0, %s281
      %s283 = sphi 0, %s281
      %s284 = sphi 0, %s283
      %s298 = sphi 0, %s284
      %s302 = sphi 0, %s302
      %s304 = sphi 0, %s302
      %s305 = sphi 0, %s304
      %s319 = sphi 0, %s305
      %s325 = sphi 0, %s327
      %s328 = sphi 0, %s325
      %s329 = sphi 0, %s328
      %s345 = sphi 0, %s329
      %s351 = sphi 0, %s353
      %s354 = sphi 0, %s351
      %s355 = sphi 0, %s354
      %s371 = sphi 0, %s355
    $region4: #{fcnet_pallas_forward.1} parent=1 // loop_header_branch
      %25 = sbr.rel (%p23) target = $region8
    $region5: #{fcnet_pallas_forward.1} parent=1 // loop_body
      %s27 = ssub.s32 %s22, 1
      %s28 = ssub.s32 %s22, 2
      %s29 = sadd.s32 %s22, 1
      %s31 = sadd.s32 %s30, 1
      %p34 = scmp.eq.s32.totalorder %s22, 1
      %p35 = scmp.ne.s32.totalorder %s30, %s32
      %p36 = scmp.eq.s32.totalorder %s22, 0
      %p37 = por %p35, %p36
      %p38 = scmp.ne.s32.totalorder %s30, %s32
      %p39 = scmp.eq.s32.totalorder %s27, 1
      %p40 = por %p38, %p39
      %p41 = scmp.ne.s32.totalorder %s32, %s33
      %p42 = scmp.eq.s32.totalorder %s27, 0
      %p43 = por %p41, %p42
      %p44 = scmp.ne.s32.totalorder %s32, %s33
      %p45 = scmp.eq.s32.totalorder %s28, 1
      %p46 = por %p44, %p45
      %p48 = scmp.ne.s32.totalorder %s33, %s47
      %p49 = scmp.eq.s32.totalorder %s28, 0
      %p50 = por %p48, %p49
      %s51 = ssub.s32 %s22, %s29
      %p52 = scmp.eq.s32.totalorder %s51, 0
      %s54 = sadd.s32 %s53, 1
      %s55 = scalar_select %p52, %s53, %s54
      %p58 = pneg %p52
      %p59 = scmp.eq.s32.totalorder %s22, 1
      %p60 = por %p58, %p59
      %p61 = scmp.ne.s32.totalorder %s53, %s56
      %p62 = scmp.eq.s32.totalorder %s22, 0
      %p63 = por %p61, %p62
      %p64 = scmp.ne.s32.totalorder %s53, %s56
      %p65 = scmp.eq.s32.totalorder %s27, 1
      %p66 = por %p64, %p65
      %p67 = scmp.ne.s32.totalorder %s56, %s57
      %p68 = scmp.eq.s32.totalorder %s27, 0
      %p69 = por %p67, %p68
      %p70 = scmp.ne.s32.totalorder %s56, %s57
      %p71 = scmp.eq.s32.totalorder %s28, 1
      %p72 = por %p70, %p71
      %p74 = scmp.ne.s32.totalorder %s57, %s73
      %p75 = scmp.eq.s32.totalorder %s28, 0
      %p76 = por %p74, %p75
      %s77 = ssub.s32 %s22, %s29
      %p78 = scmp.eq.s32.totalorder %s77, 0
      %s80 = sadd.s32 %s79, 1
      %s81 = scalar_select %p78, %s79, %s80
      %p84 = pneg %p78
      %p85 = scmp.eq.s32.totalorder %s22, 1
      %p86 = por %p84, %p85
      %p87 = scmp.ne.s32.totalorder %s79, %s82
      %p88 = scmp.eq.s32.totalorder %s22, 0
      %p89 = por %p87, %p88
      %p90 = scmp.ne.s32.totalorder %s79, %s82
      %p91 = scmp.eq.s32.totalorder %s27, 1
      %p92 = por %p90, %p91
      %p93 = scmp.ne.s32.totalorder %s82, %s83
      %p94 = scmp.eq.s32.totalorder %s27, 0
      %p95 = por %p93, %p94
      %p96 = scmp.ne.s32.totalorder %s82, %s83
      %p97 = scmp.eq.s32.totalorder %s28, 1
      %p98 = por %p96, %p97
      %p100 = scmp.ne.s32.totalorder %s83, %s99
      %p101 = scmp.eq.s32.totalorder %s28, 0
      %p102 = por %p100, %p101
      %s103 = ssub.s32 %s22, %s29
      %p104 = scmp.eq.s32.totalorder %s103, 0
      %s106 = sadd.s32 %s105, 1
      %s107 = scalar_select %p104, %s105, %s106
      %p110 = pneg %p104
      %p111 = scmp.eq.s32.totalorder %s22, 1
      %p112 = por %p110, %p111
      %p113 = scmp.ne.s32.totalorder %s105, %s108
      %p114 = scmp.eq.s32.totalorder %s22, 0
      %p115 = por %p113, %p114
      %p116 = scmp.ne.s32.totalorder %s105, %s108
      %p117 = scmp.eq.s32.totalorder %s27, 1
      %p118 = por %p116, %p117
      %p119 = scmp.ne.s32.totalorder %s108, %s109
      %p120 = scmp.eq.s32.totalorder %s27, 0
      %p121 = por %p119, %p120
      %p122 = scmp.ne.s32.totalorder %s108, %s109
      %p123 = scmp.eq.s32.totalorder %s28, 1
      %p124 = por %p122, %p123
      %p126 = scmp.ne.s32.totalorder %s109, %s125
      %p127 = scmp.eq.s32.totalorder %s28, 0
      %p128 = por %p126, %p127
      %s129 = ssub.s32 %s22, %s29
      %p130 = scmp.eq.s32.totalorder %s129, 0
      %s132 = sadd.s32 %s131, 1
      %s133 = scalar_select %p130, %s131, %s132
      %p136 = pneg %p130
      %p137 = scmp.eq.s32.totalorder %s22, 1
      %p138 = por %p136, %p137
      %p139 = scmp.ne.s32.totalorder %s131, %s134
      %p140 = scmp.eq.s32.totalorder %s22, 0
      %p141 = por %p139, %p140
      %p142 = scmp.ne.s32.totalorder %s131, %s134
      %p143 = scmp.eq.s32.totalorder %s27, 1
      %p144 = por %p142, %p143
      %p145 = scmp.ne.s32.totalorder %s134, %s135
      %p146 = scmp.eq.s32.totalorder %s27, 0
      %p147 = por %p145, %p146
      %p148 = scmp.ne.s32.totalorder %s134, %s135
      %p149 = scmp.eq.s32.totalorder %s28, 1
      %p150 = por %p148, %p149
      %p152 = scmp.ne.s32.totalorder %s135, %s151
      %p153 = scmp.eq.s32.totalorder %s28, 0
      %p154 = por %p152, %p153
      %s156 = sadd.s32 %s155, 1
      %p159 = scmp.eq.s32.totalorder %s22, 1
      %p160 = scmp.ne.s32.totalorder %s155, %s157
      %p161 = scmp.eq.s32.totalorder %s22, 0
      %p162 = por %p160, %p161
      %p163 = scmp.ne.s32.totalorder %s155, %s157
      %p164 = scmp.eq.s32.totalorder %s27, 1
      %p165 = por %p163, %p164
      %p166 = scmp.ne.s32.totalorder %s157, %s158
      %p167 = scmp.eq.s32.totalorder %s27, 0
      %p168 = por %p166, %p167
      %p169 = scmp.ne.s32.totalorder %s157, %s158
      %p170 = scmp.eq.s32.totalorder %s28, 1
      %p171 = por %p169, %p170
      %p173 = scmp.ne.s32.totalorder %s158, %s172
      %p174 = scmp.eq.s32.totalorder %s28, 0
      %p175 = por %p173, %p174
      %s177 = sadd.s32 %s176, 1
      %p180 = scmp.eq.s32.totalorder %s22, 1
      %p181 = scmp.ne.s32.totalorder %s176, %s178
      %p182 = scmp.eq.s32.totalorder %s22, 0
      %p183 = por %p181, %p182
      %p184 = scmp.ne.s32.totalorder %s176, %s178
      %p185 = scmp.eq.s32.totalorder %s27, 1
      %p186 = por %p184, %p185
      %p187 = scmp.ne.s32.totalorder %s178, %s179
      %p188 = scmp.eq.s32.totalorder %s27, 0
      %p189 = por %p187, %p188
      %p190 = scmp.ne.s32.totalorder %s178, %s179
      %p191 = scmp.eq.s32.totalorder %s28, 1
      %p192 = por %p190, %p191
      %p194 = scmp.ne.s32.totalorder %s179, %s193
      %p195 = scmp.eq.s32.totalorder %s28, 0
      %p196 = por %p194, %p195
      %s198 = sadd.s32 %s197, 1
      %p201 = scmp.eq.s32.totalorder %s22, 1
      %p202 = scmp.ne.s32.totalorder %s197, %s199
      %p203 = scmp.eq.s32.totalorder %s22, 0
      %p204 = por %p202, %p203
      %p205 = scmp.ne.s32.totalorder %s197, %s199
      %p206 = scmp.eq.s32.totalorder %s27, 1
      %p207 = por %p205, %p206
      %p208 = scmp.ne.s32.totalorder %s199, %s200
      %p209 = scmp.eq.s32.totalorder %s27, 0
      %p210 = por %p208, %p209
      %p211 = scmp.ne.s32.totalorder %s199, %s200
      %p212 = scmp.eq.s32.totalorder %s28, 1
      %p213 = por %p211, %p212
      %p215 = scmp.ne.s32.totalorder %s200, %s214
      %p216 = scmp.eq.s32.totalorder %s28, 0
      %p217 = por %p215, %p216
      %s219 = sadd.s32 %s218, 1
      %p222 = scmp.eq.s32.totalorder %s22, 1
      %p223 = scmp.ne.s32.totalorder %s218, %s220
      %p224 = scmp.eq.s32.totalorder %s22, 0
      %p225 = por %p223, %p224
      %p226 = scmp.ne.s32.totalorder %s218, %s220
      %p227 = scmp.eq.s32.totalorder %s27, 1
      %p228 = por %p226, %p227
      %p229 = scmp.ne.s32.totalorder %s220, %s221
      %p230 = scmp.eq.s32.totalorder %s27, 0
      %p231 = por %p229, %p230
      %p232 = scmp.ne.s32.totalorder %s220, %s221
      %p233 = scmp.eq.s32.totalorder %s28, 1
      %p234 = por %p232, %p233
      %p236 = scmp.ne.s32.totalorder %s221, %s235
      %p237 = scmp.eq.s32.totalorder %s28, 0
      %p238 = por %p236, %p237
      %s240 = sadd.s32 %s239, 1
      %p243 = scmp.eq.s32.totalorder %s22, 1
      %p244 = scmp.ne.s32.totalorder %s239, %s241
      %p245 = scmp.eq.s32.totalorder %s22, 0
      %p246 = por %p244, %p245
      %p247 = scmp.ne.s32.totalorder %s239, %s241
      %p248 = scmp.eq.s32.totalorder %s27, 1
      %p249 = por %p247, %p248
      %p250 = scmp.ne.s32.totalorder %s241, %s242
      %p251 = scmp.eq.s32.totalorder %s27, 0
      %p252 = por %p250, %p251
      %p253 = scmp.ne.s32.totalorder %s241, %s242
      %p254 = scmp.eq.s32.totalorder %s28, 1
      %p255 = por %p253, %p254
      %p257 = scmp.ne.s32.totalorder %s242, %s256
      %p258 = scmp.eq.s32.totalorder %s28, 0
      %p259 = por %p257, %p258
      %s261 = sadd.s32 %s260, 1
      %p264 = scmp.eq.s32.totalorder %s22, 1
      %p265 = scmp.ne.s32.totalorder %s260, %s262
      %p266 = scmp.eq.s32.totalorder %s22, 0
      %p267 = por %p265, %p266
      %p268 = scmp.ne.s32.totalorder %s260, %s262
      %p269 = scmp.eq.s32.totalorder %s27, 1
      %p270 = por %p268, %p269
      %p271 = scmp.ne.s32.totalorder %s262, %s263
      %p272 = scmp.eq.s32.totalorder %s27, 0
      %p273 = por %p271, %p272
      %p274 = scmp.ne.s32.totalorder %s262, %s263
      %p275 = scmp.eq.s32.totalorder %s28, 1
      %p276 = por %p274, %p275
      %p278 = scmp.ne.s32.totalorder %s263, %s277
      %p279 = scmp.eq.s32.totalorder %s28, 0
      %p280 = por %p278, %p279
      %s282 = sadd.s32 %s281, 1
      %p285 = scmp.eq.s32.totalorder %s22, 1
      %p286 = scmp.ne.s32.totalorder %s281, %s283
      %p287 = scmp.eq.s32.totalorder %s22, 0
      %p288 = por %p286, %p287
      %p289 = scmp.ne.s32.totalorder %s281, %s283
      %p290 = scmp.eq.s32.totalorder %s27, 1
      %p291 = por %p289, %p290
      %p292 = scmp.ne.s32.totalorder %s283, %s284
      %p293 = scmp.eq.s32.totalorder %s27, 0
      %p294 = por %p292, %p293
      %p295 = scmp.ne.s32.totalorder %s283, %s284
      %p296 = scmp.eq.s32.totalorder %s28, 1
      %p297 = por %p295, %p296
      %p299 = scmp.ne.s32.totalorder %s284, %s298
      %p300 = scmp.eq.s32.totalorder %s28, 0
      %p301 = por %p299, %p300
      %s303 = sadd.s32 %s302, 1
      %p306 = scmp.eq.s32.totalorder %s22, 1
      %p307 = scmp.ne.s32.totalorder %s302, %s304
      %p308 = scmp.eq.s32.totalorder %s22, 0
      %p309 = por %p307, %p308
      %p310 = scmp.ne.s32.totalorder %s302, %s304
      %p311 = scmp.eq.s32.totalorder %s27, 1
      %p312 = por %p310, %p311
      %p313 = scmp.ne.s32.totalorder %s304, %s305
      %p314 = scmp.eq.s32.totalorder %s27, 0
      %p315 = por %p313, %p314
      %p316 = scmp.ne.s32.totalorder %s304, %s305
      %p317 = scmp.eq.s32.totalorder %s28, 1
      %p318 = por %p316, %p317
      %p320 = scmp.ne.s32.totalorder %s305, %s319
      %p321 = scmp.eq.s32.totalorder %s28, 0
      %p322 = por %p320, %p321
      %s323 = ssub.s32 %s22, %s29
      %p324 = scmp.eq.s32.totalorder %s323, 0
      %s326 = sadd.s32 %s325, 1
      %s327 = scalar_select %p324, %s325, %s326
      %p330 = pneg %p324
      %p331 = scmp.eq.s32.totalorder %s22, 1
      %p332 = por %p330, %p331
      %p333 = scmp.ne.s32.totalorder %s325, %s328
      %p334 = scmp.eq.s32.totalorder %s22, 0
      %p335 = por %p333, %p334
      %p336 = scmp.ne.s32.totalorder %s325, %s328
      %p337 = scmp.eq.s32.totalorder %s27, 1
      %p338 = por %p336, %p337
      %p339 = scmp.ne.s32.totalorder %s328, %s329
      %p340 = scmp.eq.s32.totalorder %s27, 0
      %p341 = por %p339, %p340
      %p342 = scmp.ne.s32.totalorder %s328, %s329
      %p343 = scmp.eq.s32.totalorder %s28, 1
      %p344 = por %p342, %p343
      %p346 = scmp.ne.s32.totalorder %s329, %s345
      %p347 = scmp.eq.s32.totalorder %s28, 0
      %p348 = por %p346, %p347
      %s349 = ssub.s32 %s22, %s29
      %p350 = scmp.eq.s32.totalorder %s349, 0
      %s352 = sadd.s32 %s351, 1
      %s353 = scalar_select %p350, %s351, %s352
      %p356 = pneg %p350
      %p357 = scmp.eq.s32.totalorder %s22, 1
      %p358 = por %p356, %p357
      %p359 = scmp.ne.s32.totalorder %s351, %s354
      %p360 = scmp.eq.s32.totalorder %s22, 0
      %p361 = por %p359, %p360
      %p362 = scmp.ne.s32.totalorder %s351, %s354
      %p363 = scmp.eq.s32.totalorder %s27, 1
      %p364 = por %p362, %p363
      %p365 = scmp.ne.s32.totalorder %s354, %s355
      %p366 = scmp.eq.s32.totalorder %s27, 0
      %p367 = por %p365, %p366
      %p368 = scmp.ne.s32.totalorder %s354, %s355
      %p369 = scmp.eq.s32.totalorder %s28, 1
      %p370 = por %p368, %p369
      %p372 = scmp.ne.s32.totalorder %s355, %s371
      %p373 = scmp.eq.s32.totalorder %s28, 0
      %p374 = por %p372, %p373
      %p375 = scmp.le.s32.totalorder 1, %s22
      %p376 = scmp.lt.s32.totalorder %s22, 3
      %p377 = pnand %p375, %p376
      %p378 = pneg %p377
      // Predicated region
      $region9: #{fcnet_pallas_forward.1} parent=5 // pred_check
        _
      $region10: #{fcnet_pallas_forward.1} parent=5 // pred_check_branch
        %380 = sbr.rel (%p377) target = $region12
      $region11: #{fcnet_pallas_forward.1} parent=5 // pred_region
        %s381 = ssub.s32 %s22, 1
        // Predicated region
        $region13: #{fcnet_pallas_forward.1} parent=11 // pred_check
          %p382 = pneg %p43
        $region14: #{fcnet_pallas_forward.1} parent=11 // pred_check_branch
          %384 = sbr.rel (%p382) target = $region16
        $region15: #{fcnet_pallas_forward.1} parent=11 // pred_region
          %s386 = ssub.s32 16, 16
          %387 = vsyncadd [#allocation3], %s386
          %s389 = sshll.u32 %s0, 4
          %s390 = int_to_ptr.vmem [resolvable:$true] %s389
          %392 = dma.vmem_to_smem %s390, 16, [#allocation2], [#allocation3]
        $region16: #{fcnet_pallas_forward.1} parent=11 // pred_fallthru
          _
        // Predicated region
        $region17: #{fcnet_pallas_forward.1} parent=11 // pred_check
          %p393 = pneg %p168
        $region18: #{fcnet_pallas_forward.1} parent=11 // pred_check_branch
          %395 = sbr.rel (%p393) target = $region20
        $region19: #{fcnet_pallas_forward.1} parent=11 // pred_region
          _
        $region20: #{fcnet_pallas_forward.1} parent=11 // pred_fallthru
          _
        // Predicated region
        $region21: #{fcnet_pallas_forward.1} parent=11 // pred_check
          %p396 = pneg %p189
        $region22: #{fcnet_pallas_forward.1} parent=11 // pred_check_branch
          %398 = sbr.rel (%p396) target = $region24
        $region23: #{fcnet_pallas_forward.1} parent=11 // pred_region
          _
        $region24: #{fcnet_pallas_forward.1} parent=11 // pred_fallthru
          _
        // Predicated region
        $region25: #{fcnet_pallas_forward.1} parent=11 // pred_check
          %p399 = pneg %p210
        $region26: #{fcnet_pallas_forward.1} parent=11 // pred_check_branch
          %401 = sbr.rel (%p399) target = $region28
        $region27: #{fcnet_pallas_forward.1} parent=11 // pred_region
          _
        $region28: #{fcnet_pallas_forward.1} parent=11 // pred_fallthru
          _
        // Predicated region
        $region29: #{fcnet_pallas_forward.1} parent=11 // pred_check
          %p402 = pneg %p231
        $region30: #{fcnet_pallas_forward.1} parent=11 // pred_check_branch
          %404 = sbr.rel (%p402) target = $region32
        $region31: #{fcnet_pallas_forward.1} parent=11 // pred_region
          _
        $region32: #{fcnet_pallas_forward.1} parent=11 // pred_fallthru
          _
        // Predicated region
        $region33: #{fcnet_pallas_forward.1} parent=11 // pred_check
          %p405 = pneg %p252
        $region34: #{fcnet_pallas_forward.1} parent=11 // pred_check_branch
          %407 = sbr.rel (%p405) target = $region36
        $region35: #{fcnet_pallas_forward.1} parent=11 // pred_region
          _
        $region36: #{fcnet_pallas_forward.1} parent=11 // pred_fallthru
          _
        // Predicated region
        $region37: #{fcnet_pallas_forward.1} parent=11 // pred_check
          %p408 = pneg %p273
        $region38: #{fcnet_pallas_forward.1} parent=11 // pred_check_branch
          %410 = sbr.rel (%p408) target = $region40
        $region39: #{fcnet_pallas_forward.1} parent=11 // pred_region
          _
        $region40: #{fcnet_pallas_forward.1} parent=11 // pred_fallthru
          _
        // Predicated region
        $region41: #{fcnet_pallas_forward.1} parent=11 // pred_check
          %p411 = pneg %p294
        $region42: #{fcnet_pallas_forward.1} parent=11 // pred_check_branch
          %413 = sbr.rel (%p411) target = $region44
        $region43: #{fcnet_pallas_forward.1} parent=11 // pred_region
          _
        $region44: #{fcnet_pallas_forward.1} parent=11 // pred_fallthru
          _
        // Predicated region
        $region45: #{fcnet_pallas_forward.1} parent=11 // pred_check
          %p414 = pneg %p315
        $region46: #{fcnet_pallas_forward.1} parent=11 // pred_check_branch
          %416 = sbr.rel (%p414) target = $region48
        $region47: #{fcnet_pallas_forward.1} parent=11 // pred_region
          _
        $region48: #{fcnet_pallas_forward.1} parent=11 // pred_fallthru
          _
      $region12: #{fcnet_pallas_forward.1} parent=5 // pred_fallthru
        _
      %p417 = scmp.lt.s32.totalorder %s22, 2
      // Predicated region
      $region49: #{fcnet_pallas_forward.1} parent=5 // pred_check
        %p418 = pneg %p417
      $region50: #{fcnet_pallas_forward.1} parent=5 // pred_check_branch
        %420 = sbr.rel (%p418) target = $region52
      $region51: #{fcnet_pallas_forward.1} parent=5 // pred_region
        // Predicated region
        $region53: #{fcnet_pallas_forward.1} parent=51 // pred_check
          %p421 = pneg %p63
        $region54: #{fcnet_pallas_forward.1} parent=51 // pred_check_branch
          %423 = sbr.rel (%p421) target = $region56
        $region55: #{fcnet_pallas_forward.1} parent=51 // pred_region
          %s424 = smul.u32 13, %s22
          %p425 = scmp.lt.s32.totalorder %s424, 25
          %s426 = scalar_select %p425, %s424, 25
          %s427 = smul.addr %s426, 8
          %s428 = scalar_lea.vmem %s1, %s427
          %s429 = smul.u32 13, %s22
        $region56: #{fcnet_pallas_forward.1} parent=51 // pred_fallthru
          _
        // Predicated region
        $region57: #{fcnet_pallas_forward.1} parent=51 // pred_check
          %p430 = pneg %p89
        $region58: #{fcnet_pallas_forward.1} parent=51 // pred_check_branch
          %432 = sbr.rel (%p430) target = $region60
        $region59: #{fcnet_pallas_forward.1} parent=51 // pred_region
          %s433 = smul.u32 13, %s22
          %p434 = scmp.lt.s32.totalorder %s433, 25
          %s435 = scalar_select %p434, %s433, 25
          %s436 = smul.addr %s435, 8
          %s437 = scalar_lea.vmem %s2, %s436
          %s438 = smul.u32 13, %s22
        $region60: #{fcnet_pallas_forward.1} parent=51 // pred_fallthru
          _
        // Predicated region
        $region61: #{fcnet_pallas_forward.1} parent=51 // pred_check
          %p439 = pneg %p115
        $region62: #{fcnet_pallas_forward.1} parent=51 // pred_check_branch
          %441 = sbr.rel (%p439) target = $region64
        $region63: #{fcnet_pallas_forward.1} parent=51 // pred_region
          %s442 = smul.u32 104, %s22
          %p443 = scmp.lt.s32.totalorder %s442, 207
          %s444 = scalar_select %p443, %s442, 207
          %s445 = smul.addr %s444, 4
          %s446 = scalar_lea.vmem %s3, %s445
          %s447 = smul.u32 104, %s22
        $region64: #{fcnet_pallas_forward.1} parent=51 // pred_fallthru
          _
        // Predicated region
        $region65: #{fcnet_pallas_forward.1} parent=51 // pred_check
          %p448 = pneg %p141
        $region66: #{fcnet_pallas_forward.1} parent=51 // pred_check_branch
          %450 = sbr.rel (%p448) target = $region68
        $region67: #{fcnet_pallas_forward.1} parent=51 // pred_region
          %s451 = smul.u32 13, %s22
          %p452 = scmp.lt.s32.totalorder %s451, 25
          %s453 = scalar_select %p452, %s451, 25
          %s454 = smul.addr %s453, 8
          %s455 = scalar_lea.vmem %s4, %s454
          %s456 = smul.u32 13, %s22
        $region68: #{fcnet_pallas_forward.1} parent=51 // pred_fallthru
          _
      $region52: #{fcnet_pallas_forward.1} parent=5 // pred_fallthru
        _
      %p457 = scmp.le.s32.totalorder 1, %s22
      %p458 = scmp.lt.s32.totalorder %s22, 3
      %p459 = pnand %p457, %p458
      %p460 = pneg %p459
      // Predicated region
      $region69: #{fcnet_pallas_forward.1} parent=5 // pred_check
        _
      $region70: #{fcnet_pallas_forward.1} parent=5 // pred_check_branch
        %462 = sbr.rel (%p459) target = $region72
      $region71: #{fcnet_pallas_forward.1} parent=5 // pred_region
        %s463 = ssub.s32 %s22, 1
        // Predicated region
        $region73: #{fcnet_pallas_forward.1} parent=71 // pred_check
          %p464 = pneg %p43
        $region74: #{fcnet_pallas_forward.1} parent=71 // pred_check_branch
          %466 = sbr.rel (%p464) target = $region76
        $region75: #{fcnet_pallas_forward.1} parent=71 // pred_region
          %467 = dma.done [#allocation3], 16
        $region76: #{fcnet_pallas_forward.1} parent=71 // pred_fallthru
          _
        %468 = sfence
        %p469 = pneg %p43
        %p470 = pneg %p40
        %s471 = smul.u32 13, %s27
        %p472 = scmp.lt.s32.totalorder %s471, 25
        %s473 = scalar_select %p472, %s471, 25
        %s474 = smul.addr %s473, 8
        %s475 = scalar_lea.vmem %s1, %s474
        %p476 = pneg %p69
        %p477 = pneg %p66
        %s478 = smul.u32 13, %s27
        %p479 = scmp.lt.s32.totalorder %s478, 25
        %s480 = scalar_select %p479, %s478, 25
        %s481 = smul.addr %s480, 8
        %s482 = scalar_lea.vmem %s2, %s481
        %p483 = pneg %p95
        %p484 = pneg %p92
        %s485 = smul.u32 104, %s27
        %p486 = scmp.lt.s32.totalorder %s485, 207
        %s487 = scalar_select %p486, %s485, 207
        %s488 = smul.addr %s487, 4
        %s489 = scalar_lea.vmem %s3, %s488
        %p490 = pneg %p121
        %p491 = pneg %p118
        %s492 = smul.u32 13, %s27
        %p493 = scmp.lt.s32.totalorder %s492, 25
        %s494 = scalar_select %p493, %s492, 25
        %s495 = smul.addr %s494, 8
        %s496 = scalar_lea.vmem %s4, %s495
        %p497 = pneg %p147
        %p498 = pneg %p144
        %p499 = pneg %p168
        %p500 = pneg %p165
        %p501 = pneg %p189
        %p502 = pneg %p186
        %p503 = pneg %p210
        %p504 = pneg %p207
        %p505 = pneg %p231
        %p506 = pneg %p228
        %p507 = pneg %p252
        %p508 = pneg %p249
        %p509 = pneg %p273
        %p510 = pneg %p270
        %p511 = pneg %p294
        %p512 = pneg %p291
        %p513 = pneg %p315
        %p514 = pneg %p312
        %p515 = pneg %p341
        %p516 = pneg %p338
        %s517 = smul.u32 13, %s27
        %p518 = scmp.lt.s32.totalorder %s517, 25
        %s519 = scalar_select %p518, %s517, 25
        %s520 = smul.addr %s519, 8
        %s521 = scalar_lea.vmem %s13, %s520
        %p522 = pneg %p367
        %p523 = pneg %p364
        %s524 = smul.u32 13, %s27
        %p525 = scmp.lt.s32.totalorder %s524, 25
        %s526 = scalar_select %p525, %s524, 25
        %s527 = smul.addr %s526, 8
        %s528 = scalar_lea.vmem %s14, %s527
        %s529 = smul.u32 13, %s27
        %p530 = scmp.lt.s32.totalorder %s529, 25
        %s531 = scalar_select %p530, %s529, 25
        %s532 = smul.addr %s531, 8
        %s533 = scalar_lea.vmem %s1, %s532
        %s534 = smul.u32 13, %s27
        %s535 = smul.u32 13, %s27
        %p536 = scmp.lt.s32.totalorder %s535, 25
        %s537 = scalar_select %p536, %s535, 25
        %s538 = smul.addr %s537, 8
        %s539 = scalar_lea.vmem %s2, %s538
        %s540 = smul.u32 13, %s27
        %s541 = smul.u32 104, %s27
        %p542 = scmp.lt.s32.totalorder %s541, 207
        %s543 = scalar_select %p542, %s541, 207
        %s544 = smul.addr %s543, 4
        %s545 = scalar_lea.vmem %s3, %s544
        %s546 = smul.u32 104, %s27
        %s547 = smul.u32 13, %s27
        %p548 = scmp.lt.s32.totalorder %s547, 25
        %s549 = scalar_select %p548, %s547, 25
        %s550 = smul.addr %s549, 8
        %s551 = scalar_lea.vmem %s4, %s550
        %s552 = smul.u32 13, %s27
        %s553 = smul.u32 13, %s27
        %p554 = scmp.lt.s32.totalorder %s553, 25
        %s555 = scalar_select %p554, %s553, 25
        %s556 = smul.addr %s555, 8
        %s557 = scalar_lea.vmem %s13, %s556
        %s558 = smul.u32 13, %s27
        %s559 = smul.u32 13, %s27
        %p560 = scmp.lt.s32.totalorder %s559, 25
        %s561 = scalar_select %p560, %s559, 25
        %s562 = smul.addr %s561, 8
        %s563 = scalar_lea.vmem %s14, %s562
        %s564 = smul.u32 13, %s27
        %s565 = sld [smem:[#allocation2]]
        %s566 = sld [smem:[#allocation2 + $0x1]]
        %s567 = sld [smem:[#allocation2 + $0x2]]
        %v568 = vld [vmem:[%s533] sm:$0xff]
        %v569 = vld [vmem:[%s533 + $0x8] sm:$0xff]
        %v570 = vld [vmem:[%s533 + $0x10] sm:$0xff]
        %v571 = vld [vmem:[%s533 + $0x18] sm:$0xff]
        %v572 = vld [vmem:[%s533 + $0x20] sm:$0xff]
        %v573 = vld [vmem:[%s533 + $0x28] sm:$0xff]
        %v574 = vld [vmem:[%s533 + $0x30] sm:$0xff]
        %v575 = vld [vmem:[%s533 + $0x38] sm:$0xff]
        %v576 = vld [vmem:[%s533 + $0x40] sm:$0xff]
        %v577 = vld [vmem:[%s533 + $0x48] sm:$0xff]
        %v578 = vld [vmem:[%s533 + $0x50] sm:$0xff]
        %v579 = vld [vmem:[%s533 + $0x58] sm:$0xff]
        %v580 = vld [vmem:[%s533 + $0x60] sm:$0xff]
        %v581 = vld [vmem:[%s5] sm:$0xff]
        %v582 = vld [vmem:[%s5 + $0x8] sm:$0xff]
        %v583 = vld [vmem:[%s5 + $0x10] sm:$0xf]
        %v584 = vld [vmem:[%s6] sm:$0x1]
        %v586 = vlaneseq
        %v587 = vshrl.u32 %v586, 7
        %v588 = vsub.s32 0, %v587
        %v589 = vrot.slane %v584, %v588
        %vm591 = vcmask 162816
        %v593 = vsel %vm591, %v568, 0
        %v596 = vsel %vm591, %v569, 0
        %v599 = vsel %vm591, %v570, 0
        %v602 = vsel %vm591, %v571, 0
        %v605 = vsel %vm591, %v572, 0
        %v608 = vsel %vm591, %v573, 0
        %v611 = vsel %vm591, %v574, 0
        %v614 = vsel %vm591, %v575, 0
        %v617 = vsel %vm591, %v576, 0
        %v620 = vsel %vm591, %v577, 0
        %v623 = vsel %vm591, %v578, 0
        %v626 = vsel %vm591, %v579, 0
        %v629 = vsel %vm591, %v580, 0
        %vm631 = vcmask 1043456
        %v633 = vsel %vm631, %v583, 0
        %635 = vmatprep.subr.mxu0 0.0
        %636 = vmatpush1.msra.mxu0 %v581
        %637 = vmatprep.subr.mxu0 0.0
        %638 = vmatpush1.msra.mxu0 %v582
        %639 = vmatprep.subr.mxu0 0.0
        %640 = vmatpush1.msra.mxu0 %v633
        %641 = vmatprep.subr.mxu0 0.0
        %642 = vmatpush1.msra.mxu0 0.0
        %643 = vmatprep.subr.mxu0 0.0
        %644 = vmatpush1.msra.mxu0 0.0
        %645 = vmatprep.subr.mxu0 0.0
        %646 = vmatpush1.msra.mxu0 0.0
        %647 = vmatprep.subr.mxu0 0.0
        %648 = vmatpush1.msra.mxu0 0.0
        %649 = vmatprep.subr.mxu0 0.0
        %650 = vmatpush1.msra.mxu0 0.0
        %651 = vmatprep.subr.mxu0 0.0
        %652 = vmatpush1.msra.mxu0 0.0
        %653 = vmatprep.subr.mxu0 0.0
        %654 = vmatpush1.msra.mxu0 0.0
        %655 = vmatprep.subr.mxu0 0.0
        %656 = vmatpush1.msra.mxu0 0.0
        %657 = vmatprep.subr.mxu0 0.0
        %658 = vmatpush1.msra.mxu0 0.0
        %659 = vmatprep.subr.mxu0 0.0
        %660 = vmatpush1.msra.mxu0 0.0
        %661 = vmatprep.subr.mxu0 0.0
        %662 = vmatpush1.msra.mxu0 0.0
        %663 = vmatprep.subr.mxu0 0.0
        %664 = vmatpush1.msra.mxu0 0.0
        %665 = vmatprep.subr.mxu0 0.0
        %666 = vmatpush1.msra.mxu0 0.0
        %667 = vmatprep.subr.mxu0 0.0
        %668 = vmatpush1.msra.mxu0 0.0
        %669 = vmatprep.subr.mxu0 0.0
        %670 = vmatpush1.msra.mxu0 0.0
        %671 = vmatprep.subr.mxu0 0.0
        %672 = vmatpush1.msra.mxu0 0.0
        %673 = vmatprep.subr.mxu0 0.0
        %674 = vmatpush1.msra.mxu0 0.0
        %675 = vmatprep.subr.mxu0 0.0
        %676 = vmatpush1.msra.mxu0 0.0
        %677 = vmatprep.subr.mxu0 0.0
        %678 = vmatpush1.msra.mxu0 0.0
        %679 = vmatprep.subr.mxu0 0.0
        %680 = vmatpush1.msra.mxu0 0.0
        %681 = vmatprep.subr.mxu0 0.0
        %682 = vmatpush1.msra.mxu0 0.0
        %683 = vmatprep.subr.mxu0 0.0
        %684 = vmatpush1.msra.mxu0 0.0
        %685 = vmatprep.subr.mxu0 0.0
        %686 = vmatpush1.msra.mxu0 0.0
        %687 = vmatprep.subr.mxu0 0.0
        %688 = vmatpush1.msra.mxu0 0.0
        %689 = vmatprep.subr.mxu0 0.0
        %690 = vmatpush1.msra.mxu0 0.0
        %691 = vmatprep.subr.mxu0 0.0
        %692 = vmatpush1.msra.mxu0 0.0
        %693 = vmatprep.subr.mxu0 0.0
        %694 = vmatpush1.msra.mxu0 0.0
        %695 = vmatprep.subr.mxu0 0.0
        %696 = vmatpush1.msra.mxu0 0.0
        %697 = vmatprep.subr.mxu0 0.0
        %698 = vmatpush1.msra.mxu0 0.0
        %699 = vmatprep.mubr.f32.mxu0 0.0
        %700 = vmatmul.mubr.f32.gmra.mrb[0].mxu0 %v593
        %v701 = vpop.f32.mrb[0].mxu0
        %v702 = vadd.f32 %v589, %v701
        %v703 = vpop.f32.mrb[0].mxu0
        %704 = vmatprep.mubr.f32.mxu0 0.0
        %705 = vmatmul.mubr.f32.gmra.mrb[0].mxu0 %v596
        %v706 = vpop.f32.mrb[0].mxu0
        %v707 = vadd.f32 %v589, %v706
        %v708 = vpop.f32.mrb[0].mxu0
        %709 = vmatprep.mubr.f32.mxu0 0.0
        %710 = vmatmul.mubr.f32.gmra.mrb[0].mxu0 %v599
        %v711 = vpop.f32.mrb[0].mxu0
        %v712 = vadd.f32 %v589, %v711
        %v713 = vpop.f32.mrb[0].mxu0
        %714 = vmatprep.mubr.f32.mxu0 0.0
        %715 = vmatmul.mubr.f32.gmra.mrb[0].mxu0 %v602
        %v716 = vpop.f32.mrb[0].mxu0
        %v717 = vadd.f32 %v589, %v716
        %v718 = vpop.f32.mrb[0].mxu0
        %719 = vmatprep.mubr.f32.mxu0 0.0
        %720 = vmatmul.mubr.f32.gmra.mrb[0].mxu0 %v605
        %v721 = vpop.f32.mrb[0].mxu0
        %v722 = vadd.f32 %v589, %v721
        %v723 = vpop.f32.mrb[0].mxu0
        %724 = vmatprep.mubr.f32.mxu0 0.0
        %725 = vmatmul.mubr.f32.gmra.mrb[0].mxu0 %v608
        %v726 = vpop.f32.mrb[0].mxu0
        %v727 = vadd.f32 %v589, %v726
        %v728 = vpop.f32.mrb[0].mxu0
        %729 = vmatprep.mubr.f32.mxu0 0.0
        %730 = vmatmul.mubr.f32.gmra.mrb[0].mxu0 %v611
        %v731 = vpop.f32.mrb[0].mxu0
        %v732 = vadd.f32 %v589, %v731
        %v733 = vpop.f32.mrb[0].mxu0
        %734 = vmatprep.mubr.f32.mxu0 0.0
        %735 = vmatmul.mubr.f32.gmra.mrb[0].mxu0 %v614
        %v736 = vpop.f32.mrb[0].mxu0
        %v737 = vadd.f32 %v589, %v736
        %v738 = vpop.f32.mrb[0].mxu0
        %739 = vmatprep.mubr.f32.mxu0 0.0
        %740 = vmatmul.mubr.f32.gmra.mrb[0].mxu0 %v617
        %v741 = vpop.f32.mrb[0].mxu0
        %v742 = vadd.f32 %v589, %v741
        %v743 = vpop.f32.mrb[0].mxu0
        %744 = vmatprep.mubr.f32.mxu0 0.0
        %745 = vmatmul.mubr.f32.gmra.mrb[0].mxu0 %v620
        %v746 = vpop.f32.mrb[0].mxu0
        %v747 = vadd.f32 %v589, %v746
        %v748 = vpop.f32.mrb[0].mxu0
        %749 = vmatprep.mubr.f32.mxu0 0.0
        %750 = vmatmul.mubr.f32.gmra.mrb[0].mxu0 %v623
        %v751 = vpop.f32.mrb[0].mxu0
        %v752 = vadd.f32 %v589, %v751
        %v753 = vpop.f32.mrb[0].mxu0
        %754 = vmatprep.mubr.f32.mxu0 0.0
        %755 = vmatmul.mubr.f32.gmra.mrb[0].mxu0 %v626
        %v756 = vpop.f32.mrb[0].mxu0
        %v757 = vadd.f32 %v589, %v756
        %v758 = vpop.f32.mrb[0].mxu0
        %759 = vmatprep.mubr.f32.mxu0 0.0
        %760 = vmatmul.mubr.f32.gmra.mrb[0].mxu0 %v629
        %v761 = vpop.f32.mrb[0].mxu0
        %v762 = vadd.f32 %v589, %v761
        %v763 = vpop.f32.mrb[0].mxu0
        %764 = vdwg.mxu0
        %vm765 = vcmp.gt.f32.partialorder %v702, 0.0
        %vm766 = vcmp.gt.f32.partialorder %v707, 0.0
        %vm767 = vcmp.gt.f32.partialorder %v712, 0.0
        %vm768 = vcmp.gt.f32.partialorder %v717, 0.0
        %vm769 = vcmp.gt.f32.partialorder %v722, 0.0
        %vm770 = vcmp.gt.f32.partialorder %v727, 0.0
        %vm771 = vcmp.gt.f32.partialorder %v732, 0.0
        %vm772 = vcmp.gt.f32.partialorder %v737, 0.0
        %vm773 = vcmp.gt.f32.partialorder %v742, 0.0
        %vm774 = vcmp.gt.f32.partialorder %v747, 0.0
        %vm775 = vcmp.gt.f32.partialorder %v752, 0.0
        %vm776 = vcmp.gt.f32.partialorder %v757, 0.0
        %vm777 = vcmp.gt.f32.partialorder %v762, 0.0
        %v778 = vstv %s565
        %v779 = vmul.f32 %v778, %v702
        %v780 = vmul.f32 %v778, %v707
        %v781 = vmul.f32 %v778, %v712
        %v782 = vmul.f32 %v778, %v717
        %v783 = vmul.f32 %v778, %v722
        %v784 = vmul.f32 %v778, %v727
        %v785 = vmul.f32 %v778, %v732
        %v786 = vmul.f32 %v778, %v737
        %v787 = vmul.f32 %v778, %v742
        %v788 = vmul.f32 %v778, %v747
        %v789 = vmul.f32 %v778, %v752
        %v790 = vmul.f32 %v778, %v757
        %v791 = vmul.f32 %v778, %v762
        %v792 = vsel %vm765, %v702, %v779
        %v793 = vsel %vm766, %v707, %v780
        %v794 = vsel %vm767, %v712, %v781
        %v795 = vsel %vm768, %v717, %v782
        %v796 = vsel %vm769, %v722, %v783
        %v797 = vsel %vm770, %v727, %v784
        %v798 = vsel %vm771, %v732, %v785
        %v799 = vsel %vm772, %v737, %v786
        %v800 = vsel %vm773, %v742, %v787
        %v801 = vsel %vm774, %v747, %v788
        %v802 = vsel %vm775, %v752, %v789
        %v803 = vsel %vm776, %v757, %v790
        %v804 = vsel %vm777, %v762, %v791
        %v805 = vld [vmem:[%s7] sm:$0xff]
        %v806 = vld [vmem:[%s7 + $0x8] sm:$0xff]
        %v807 = vld [vmem:[%s7 + $0x10] sm:$0xff]
        %v808 = vld [vmem:[%s7 + $0x18] sm:$0xff]
        %v809 = vld [vmem:[%s7 + $0x20] sm:$0xff]
        %v810 = vld [vmem:[%s7 + $0x28] sm:$0xff]
        %v811 = vld [vmem:[%s7 + $0x30] sm:$0xff]
        %v812 = vld [vmem:[%s7 + $0x38] sm:$0xff]
        %v813 = vld [vmem:[%s7 + $0x40] sm:$0xff]
        %v814 = vld [vmem:[%s7 + $0x48] sm:$0xff]
        %v815 = vld [vmem:[%s7 + $0x50] sm:$0xff]
        %v816 = vld [vmem:[%s7 + $0x58] sm:$0xff]
        %v817 = vld [vmem:[%s7 + $0x60] sm:$0xff]
        %v818 = vld [vmem:[%s7 + $0x68] sm:$0xff]
        %v819 = vld [vmem:[%s7 + $0x70] sm:$0xff]
        %v820 = vld [vmem:[%s7 + $0x78] sm:$0xff]
        %v821 = vld [vmem:[%s8] sm:$0x1]
        %v823 = vlaneseq
        %v824 = vshrl.u32 %v823, 7
        %v825 = vsub.s32 0, %v824
        %v826 = vrot.slane %v821, %v825
        %828 = vmatprep.subr.mxu0 0.0
        %829 = vmatpush1.msra.mxu0 %v805
        %830 = vmatprep.subr.mxu0 0.0
        %831 = vmatpush1.msra.mxu0 %v806
        %832 = vmatprep.subr.mxu0 0.0
        %833 = vmatpush1.msra.mxu0 %v807
        %834 = vmatprep.subr.mxu0 0.0
        %835 = vmatpush1.msra.mxu0 %v808
        %836 = vmatprep.subr.mxu0 0.0
        %837 = vmatpush1.msra.mxu0 %v809
        %838 = vmatprep.subr.mxu0 0.0
        %839 = vmatpush1.msra.mxu0 %v810
        %840 = vmatprep.subr.mxu0 0.0
        %841 = vmatpush1.msra.mxu0 %v811
        %842 = vmatprep.subr.mxu0 0.0
        %843 = vmatpush1.msra.mxu0 %v812
        %844 = vmatprep.subr.mxu0 0.0
        %845 = vmatpush1.msra.mxu0 %v813
        %846 = vmatprep.subr.mxu0 0.0
        %847 = vmatpush1.msra.mxu0 %v814
        %848 = vmatprep.subr.mxu0 0.0
        %849 = vmatpush1.msra.mxu0 %v815
        %850 = vmatprep.subr.mxu0 0.0
        %851 = vmatpush1.msra.mxu0 %v816
        %852 = vmatprep.subr.mxu0 0.0
        %853 = vmatpush1.msra.mxu0 %v817
        %854 = vmatprep.subr.mxu0 0.0
        %855 = vmatpush1.msra.mxu0 %v818
        %856 = vmatprep.subr.mxu0 0.0
        %857 = vmatpush1.msra.mxu0 %v819
        %858 = vmatprep.subr.mxu0 0.0
        %859 = vmatpush1.msra.mxu0 %v820
        %860 = vmatprep.subr.mxu0 0.0
        %861 = vmatpush1.msra.mxu0 0.0
        %862 = vmatprep.subr.mxu0 0.0
        %863 = vmatpush1.msra.mxu0 0.0
        %864 = vmatprep.subr.mxu0 0.0
        %865 = vmatpush1.msra.mxu0 0.0
        %866 = vmatprep.subr.mxu0 0.0
        %867 = vmatpush1.msra.mxu0 0.0
        %868 = vmatprep.subr.mxu0 0.0
        %869 = vmatpush1.msra.mxu0 0.0
        %870 = vmatprep.subr.mxu0 0.0
        %871 = vmatpush1.msra.mxu0 0.0
        %872 = vmatprep.subr.mxu0 0.0
        %873 = vmatpush1.msra.mxu0 0.0
        %874 = vmatprep.subr.mxu0 0.0
        %875 = vmatpush1.msra.mxu0 0.0
        %876 = vmatprep.subr.mxu0 0.0
        %877 = vmatpush1.msra.mxu0 0.0
        %878 = vmatprep.subr.mxu0 0.0
        %879 = vmatpush1.msra.mxu0 0.0
        %880 = vmatprep.subr.mxu0 0.0
        %881 = vmatpush1.msra.mxu0 0.0
        %882 = vmatprep.subr.mxu0 0.0
        %883 = vmatpush1.msra.mxu0 0.0
        %884 = vmatprep.subr.mxu0 0.0
        %885 = vmatpush1.msra.mxu0 0.0
        %886 = vmatprep.subr.mxu0 0.0
        %887 = vmatpush1.msra.mxu0 0.0
        %888 = vmatprep.subr.mxu0 0.0
        %889 = vmatpush1.msra.mxu0 0.0
        %890 = vmatprep.subr.mxu0 0.0
        %891 = vmatpush1.msra.mxu0 0.0
        %892 = vmatprep.mubr.f32.mxu0 0.0
        %893 = vmatmul.mubr.f32.gmra.mrb[0].mxu0 %v792
        %v894 = vpop.f32.mrb[0].mxu0
        %v895 = vadd.f32 %v826, %v894
        %v896 = vpop.f32.mrb[0].mxu0
        %897 = vmatprep.mubr.f32.mxu0 0.0
        %898 = vmatmul.mubr.f32.gmra.mrb[0].mxu0 %v793
        %v899 = vpop.f32.mrb[0].mxu0
        %v900 = vadd.f32 %v826, %v899
        %v901 = vpop.f32.mrb[0].mxu0
        %902 = vmatprep.mubr.f32.mxu0 0.0
        %903 = vmatmul.mubr.f32.gmra.mrb[0].mxu0 %v794
        %v904 = vpop.f32.mrb[0].mxu0
        %v905 = vadd.f32 %v826, %v904
        %v906 = vpop.f32.mrb[0].mxu0
        %907 = vmatprep.mubr.f32.mxu0 0.0
        %908 = vmatmul.mubr.f32.gmra.mrb[0].mxu0 %v795
        %v909 = vpop.f32.mrb[0].mxu0
        %v910 = vadd.f32 %v826, %v909
        %v911 = vpop.f32.mrb[0].mxu0
        %912 = vmatprep.mubr.f32.mxu0 0.0
        %913 = vmatmul.mubr.f32.gmra.mrb[0].mxu0 %v796
        %v914 = vpop.f32.mrb[0].mxu0
        %v915 = vadd.f32 %v826, %v914
        %v916 = vpop.f32.mrb[0].mxu0
        %917 = vmatprep.mubr.f32.mxu0 0.0
        %918 = vmatmul.mubr.f32.gmra.mrb[0].mxu0 %v797
        %v919 = vpop.f32.mrb[0].mxu0
        %v920 = vadd.f32 %v826, %v919
        %v921 = vpop.f32.mrb[0].mxu0
        %922 = vmatprep.mubr.f32.mxu0 0.0
        %923 = vmatmul.mubr.f32.gmra.mrb[0].mxu0 %v798
        %v924 = vpop.f32.mrb[0].mxu0
        %v925 = vadd.f32 %v826, %v924
        %v926 = vpop.f32.mrb[0].mxu0
        %927 = vmatprep.mubr.f32.mxu0 0.0
        %928 = vmatmul.mubr.f32.gmra.mrb[0].mxu0 %v799
        %v929 = vpop.f32.mrb[0].mxu0
        %v930 = vadd.f32 %v826, %v929
        %v931 = vpop.f32.mrb[0].mxu0
        %932 = vmatprep.mubr.f32.mxu0 0.0
        %933 = vmatmul.mubr.f32.gmra.mrb[0].mxu0 %v800
        %v934 = vpop.f32.mrb[0].mxu0
        %v935 = vadd.f32 %v826, %v934
        %v936 = vpop.f32.mrb[0].mxu0
        %937 = vmatprep.mubr.f32.mxu0 0.0
        %938 = vmatmul.mubr.f32.gmra.mrb[0].mxu0 %v801
        %v939 = vpop.f32.mrb[0].mxu0
        %v940 = vadd.f32 %v826, %v939
        %v941 = vpop.f32.mrb[0].mxu0
        %942 = vmatprep.mubr.f32.mxu0 0.0
        %943 = vmatmul.mubr.f32.gmra.mrb[0].mxu0 %v802
        %v944 = vpop.f32.mrb[0].mxu0
        %v945 = vadd.f32 %v826, %v944
        %v946 = vpop.f32.mrb[0].mxu0
        %947 = vmatprep.mubr.f32.mxu0 0.0
        %948 = vmatmul.mubr.f32.gmra.mrb[0].mxu0 %v803
        %v949 = vpop.f32.mrb[0].mxu0
        %v950 = vadd.f32 %v826, %v949
        %v951 = vpop.f32.mrb[0].mxu0
        %952 = vmatprep.mubr.f32.mxu0 0.0
        %953 = vmatmul.mubr.f32.gmra.mrb[0].mxu0 %v804
        %v954 = vpop.f32.mrb[0].mxu0
        %v955 = vadd.f32 %v826, %v954
        %v956 = vpop.f32.mrb[0].mxu0
        %957 = vdwg.mxu0
        %vm958 = vcmp.gt.f32.partialorder %v895, 0.0
        %vm959 = vcmp.gt.f32.partialorder %v900, 0.0
        %vm960 = vcmp.gt.f32.partialorder %v905, 0.0
        %vm961 = vcmp.gt.f32.partialorder %v910, 0.0
        %vm962 = vcmp.gt.f32.partialorder %v915, 0.0
        %vm963 = vcmp.gt.f32.partialorder %v920, 0.0
        %vm964 = vcmp.gt.f32.partialorder %v925, 0.0
        %vm965 = vcmp.gt.f32.partialorder %v930, 0.0
        %vm966 = vcmp.gt.f32.partialorder %v935, 0.0
        %vm967 = vcmp.gt.f32.partialorder %v940, 0.0
        %vm968 = vcmp.gt.f32.partialorder %v945, 0.0
        %vm969 = vcmp.gt.f32.partialorder %v950, 0.0
        %vm970 = vcmp.gt.f32.partialorder %v955, 0.0
        %v971 = vstv %s566
        %v972 = vmul.f32 %v971, %v895
        %v973 = vmul.f32 %v971, %v900
        %v974 = vmul.f32 %v971, %v905
        %v975 = vmul.f32 %v971, %v910
        %v976 = vmul.f32 %v971, %v915
        %v977 = vmul.f32 %v971, %v920
        %v978 = vmul.f32 %v971, %v925
        %v979 = vmul.f32 %v971, %v930
        %v980 = vmul.f32 %v971, %v935
        %v981 = vmul.f32 %v971, %v940
        %v982 = vmul.f32 %v971, %v945
        %v983 = vmul.f32 %v971, %v950
        %v984 = vmul.f32 %v971, %v955
        %v985 = vsel %vm958, %v895, %v972
        %v986 = vsel %vm959, %v900, %v973
        %v987 = vsel %vm960, %v905, %v974
        %v988 = vsel %vm961, %v910, %v975
        %v989 = vsel %vm962, %v915, %v976
        %v990 = vsel %vm963, %v920, %v977
        %v991 = vsel %vm964, %v925, %v978
        %v992 = vsel %vm965, %v930, %v979
        %v993 = vsel %vm966, %v935, %v980
        %v994 = vsel %vm967, %v940, %v981
        %v995 = vsel %vm968, %v945, %v982
        %v996 = vsel %vm969, %v950, %v983
        %v997 = vsel %vm970, %v955, %v984
        %v998 = vld [vmem:[%s9] sm:$0xff]
        %v999 = vld [vmem:[%s9 + $0x8] sm:$0xff]
        %v1000 = vld [vmem:[%s9 + $0x10] sm:$0xff]
        %v1001 = vld [vmem:[%s9 + $0x18] sm:$0xff]
        %v1002 = vld [vmem:[%s9 + $0x20] sm:$0xff]
        %v1003 = vld [vmem:[%s9 + $0x28] sm:$0xff]
        %v1004 = vld [vmem:[%s9 + $0x30] sm:$0xff]
        %v1005 = vld [vmem:[%s9 + $0x38] sm:$0xff]
        %v1006 = vld [vmem:[%s9 + $0x40] sm:$0xff]
        %v1007 = vld [vmem:[%s9 + $0x48] sm:$0xff]
        %v1008 = vld [vmem:[%s9 + $0x50] sm:$0xff]
        %v1009 = vld [vmem:[%s9 + $0x58] sm:$0xff]
        %v1010 = vld [vmem:[%s9 + $0x60] sm:$0xff]
        %v1011 = vld [vmem:[%s9 + $0x68] sm:$0xff]
        %v1012 = vld [vmem:[%s9 + $0x70] sm:$0xff]
        %v1013 = vld [vmem:[%s9 + $0x78] sm:$0xff]
        %v1014 = vld [vmem:[%s10] sm:$0x1]
        %v1016 = vlaneseq
        %v1017 = vshrl.u32 %v1016, 7
        %v1018 = vsub.s32 0, %v1017
        %v1019 = vrot.slane %v1014, %v1018
        %1021 = vmatprep.subr.mxu0 0.0
        %1022 = vmatpush1.msra.mxu0 %v998
        %1023 = vmatprep.subr.mxu0 0.0
        %1024 = vmatpush1.msra.mxu0 %v999
        %1025 = vmatprep.subr.mxu0 0.0
        %1026 = vmatpush1.msra.mxu0 %v1000
        %1027 = vmatprep.subr.mxu0 0.0
        %1028 = vmatpush1.msra.mxu0 %v1001
        %1029 = vmatprep.subr.mxu0 0.0
        %1030 = vmatpush1.msra.mxu0 %v1002
        %1031 = vmatprep.subr.mxu0 0.0
        %1032 = vmatpush1.msra.mxu0 %v1003
        %1033 = vmatprep.subr.mxu0 0.0
        %1034 = vmatpush1.msra.mxu0 %v1004
        %1035 = vmatprep.subr.mxu0 0.0
        %1036 = vmatpush1.msra.mxu0 %v1005
        %1037 = vmatprep.subr.mxu0 0.0
        %1038 = vmatpush1.msra.mxu0 %v1006
        %1039 = vmatprep.subr.mxu0 0.0
        %1040 = vmatpush1.msra.mxu0 %v1007
        %1041 = vmatprep.subr.mxu0 0.0
        %1042 = vmatpush1.msra.mxu0 %v1008
        %1043 = vmatprep.subr.mxu0 0.0
        %1044 = vmatpush1.msra.mxu0 %v1009
        %1045 = vmatprep.subr.mxu0 0.0
        %1046 = vmatpush1.msra.mxu0 %v1010
        %1047 = vmatprep.subr.mxu0 0.0
        %1048 = vmatpush1.msra.mxu0 %v1011
        %1049 = vmatprep.subr.mxu0 0.0
        %1050 = vmatpush1.msra.mxu0 %v1012
        %1051 = vmatprep.subr.mxu0 0.0
        %1052 = vmatpush1.msra.mxu0 %v1013
        %1053 = vmatprep.subr.mxu0 0.0
        %1054 = vmatpush1.msra.mxu0 0.0
        %1055 = vmatprep.subr.mxu0 0.0
        %1056 = vmatpush1.msra.mxu0 0.0
        %1057 = vmatprep.subr.mxu0 0.0
        %1058 = vmatpush1.msra.mxu0 0.0
        %1059 = vmatprep.subr.mxu0 0.0
        %1060 = vmatpush1.msra.mxu0 0.0
        %1061 = vmatprep.subr.mxu0 0.0
        %1062 = vmatpush1.msra.mxu0 0.0
        %1063 = vmatprep.subr.mxu0 0.0
        %1064 = vmatpush1.msra.mxu0 0.0
        %1065 = vmatprep.subr.mxu0 0.0
        %1066 = vmatpush1.msra.mxu0 0.0
        %1067 = vmatprep.subr.mxu0 0.0
        %1068 = vmatpush1.msra.mxu0 0.0
        %1069 = vmatprep.subr.mxu0 0.0
        %1070 = vmatpush1.msra.mxu0 0.0
        %1071 = vmatprep.subr.mxu0 0.0
        %1072 = vmatpush1.msra.mxu0 0.0
        %1073 = vmatprep.subr.mxu0 0.0
        %1074 = vmatpush1.msra.mxu0 0.0
        %1075 = vmatprep.subr.mxu0 0.0
        %1076 = vmatpush1.msra.mxu0 0.0
        %1077 = vmatprep.subr.mxu0 0.0
        %1078 = vmatpush1.msra.mxu0 0.0
        %1079 = vmatprep.subr.mxu0 0.0
        %1080 = vmatpush1.msra.mxu0 0.0
        %1081 = vmatprep.subr.mxu0 0.0
        %1082 = vmatpush1.msra.mxu0 0.0
        %1083 = vmatprep.subr.mxu0 0.0
        %1084 = vmatpush1.msra.mxu0 0.0
        %1085 = vmatprep.mubr.f32.mxu0 0.0
        %1086 = vmatmul.mubr.f32.gmra.mrb[0].mxu0 %v985
        %v1087 = vpop.f32.mrb[0].mxu0
        %v1088 = vadd.f32 %v1019, %v1087
        %v1089 = vpop.f32.mrb[0].mxu0
        %1090 = vmatprep.mubr.f32.mxu0 0.0
        %1091 = vmatmul.mubr.f32.gmra.mrb[0].mxu0 %v986
        %v1092 = vpop.f32.mrb[0].mxu0
        %v1093 = vadd.f32 %v1019, %v1092
        %v1094 = vpop.f32.mrb[0].mxu0
        %1095 = vmatprep.mubr.f32.mxu0 0.0
        %1096 = vmatmul.mubr.f32.gmra.mrb[0].mxu0 %v987
        %v1097 = vpop.f32.mrb[0].mxu0
        %v1098 = vadd.f32 %v1019, %v1097
        %v1099 = vpop.f32.mrb[0].mxu0
        %1100 = vmatprep.mubr.f32.mxu0 0.0
        %1101 = vmatmul.mubr.f32.gmra.mrb[0].mxu0 %v988
        %v1102 = vpop.f32.mrb[0].mxu0
        %v1103 = vadd.f32 %v1019, %v1102
        %v1104 = vpop.f32.mrb[0].mxu0
        %1105 = vmatprep.mubr.f32.mxu0 0.0
        %1106 = vmatmul.mubr.f32.gmra.mrb[0].mxu0 %v989
        %v1107 = vpop.f32.mrb[0].mxu0
        %v1108 = vadd.f32 %v1019, %v1107
        %v1109 = vpop.f32.mrb[0].mxu0
        %1110 = vmatprep.mubr.f32.mxu0 0.0
        %1111 = vmatmul.mubr.f32.gmra.mrb[0].mxu0 %v990
        %v1112 = vpop.f32.mrb[0].mxu0
        %v1113 = vadd.f32 %v1019, %v1112
        %v1114 = vpop.f32.mrb[0].mxu0
        %1115 = vmatprep.mubr.f32.mxu0 0.0
        %1116 = vmatmul.mubr.f32.gmra.mrb[0].mxu0 %v991
        %v1117 = vpop.f32.mrb[0].mxu0
        %v1118 = vadd.f32 %v1019, %v1117
        %v1119 = vpop.f32.mrb[0].mxu0
        %1120 = vmatprep.mubr.f32.mxu0 0.0
        %1121 = vmatmul.mubr.f32.gmra.mrb[0].mxu0 %v992
        %v1122 = vpop.f32.mrb[0].mxu0
        %v1123 = vadd.f32 %v1019, %v1122
        %v1124 = vpop.f32.mrb[0].mxu0
        %1125 = vmatprep.mubr.f32.mxu0 0.0
        %1126 = vmatmul.mubr.f32.gmra.mrb[0].mxu0 %v993
        %v1127 = vpop.f32.mrb[0].mxu0
        %v1128 = vadd.f32 %v1019, %v1127
        %v1129 = vpop.f32.mrb[0].mxu0
        %1130 = vmatprep.mubr.f32.mxu0 0.0
        %1131 = vmatmul.mubr.f32.gmra.mrb[0].mxu0 %v994
        %v1132 = vpop.f32.mrb[0].mxu0
        %v1133 = vadd.f32 %v1019, %v1132
        %v1134 = vpop.f32.mrb[0].mxu0
        %1135 = vmatprep.mubr.f32.mxu0 0.0
        %1136 = vmatmul.mubr.f32.gmra.mrb[0].mxu0 %v995
        %v1137 = vpop.f32.mrb[0].mxu0
        %v1138 = vadd.f32 %v1019, %v1137
        %v1139 = vpop.f32.mrb[0].mxu0
        %1140 = vmatprep.mubr.f32.mxu0 0.0
        %1141 = vmatmul.mubr.f32.gmra.mrb[0].mxu0 %v996
        %v1142 = vpop.f32.mrb[0].mxu0
        %v1143 = vadd.f32 %v1019, %v1142
        %v1144 = vpop.f32.mrb[0].mxu0
        %1145 = vmatprep.mubr.f32.mxu0 0.0
        %1146 = vmatmul.mubr.f32.gmra.mrb[0].mxu0 %v997
        %v1147 = vpop.f32.mrb[0].mxu0
        %v1148 = vadd.f32 %v1019, %v1147
        %v1149 = vpop.f32.mrb[0].mxu0
        %1150 = vdwg.mxu0
        %vm1151 = vcmp.gt.f32.partialorder %v1088, 0.0
        %vm1152 = vcmp.gt.f32.partialorder %v1093, 0.0
        %vm1153 = vcmp.gt.f32.partialorder %v1098, 0.0
        %vm1154 = vcmp.gt.f32.partialorder %v1103, 0.0
        %vm1155 = vcmp.gt.f32.partialorder %v1108, 0.0
        %vm1156 = vcmp.gt.f32.partialorder %v1113, 0.0
        %vm1157 = vcmp.gt.f32.partialorder %v1118, 0.0
        %vm1158 = vcmp.gt.f32.partialorder %v1123, 0.0
        %vm1159 = vcmp.gt.f32.partialorder %v1128, 0.0
        %vm1160 = vcmp.gt.f32.partialorder %v1133, 0.0
        %vm1161 = vcmp.gt.f32.partialorder %v1138, 0.0
        %vm1162 = vcmp.gt.f32.partialorder %v1143, 0.0
        %vm1163 = vcmp.gt.f32.partialorder %v1148, 0.0
        %v1164 = vstv %s567
        %v1165 = vmul.f32 %v1164, %v1088
        %v1166 = vmul.f32 %v1164, %v1093
        %v1167 = vmul.f32 %v1164, %v1098
        %v1168 = vmul.f32 %v1164, %v1103
        %v1169 = vmul.f32 %v1164, %v1108
        %v1170 = vmul.f32 %v1164, %v1113
        %v1171 = vmul.f32 %v1164, %v1118
        %v1172 = vmul.f32 %v1164, %v1123
        %v1173 = vmul.f32 %v1164, %v1128
        %v1174 = vmul.f32 %v1164, %v1133
        %v1175 = vmul.f32 %v1164, %v1138
        %v1176 = vmul.f32 %v1164, %v1143
        %v1177 = vmul.f32 %v1164, %v1148
        %v1178 = vsel %vm1151, %v1088, %v1165
        %v1179 = vsel %vm1152, %v1093, %v1166
        %v1180 = vsel %vm1153, %v1098, %v1167
        %v1181 = vsel %vm1154, %v1103, %v1168
        %v1182 = vsel %vm1155, %v1108, %v1169
        %v1183 = vsel %vm1156, %v1113, %v1170
        %v1184 = vsel %vm1157, %v1118, %v1171
        %v1185 = vsel %vm1158, %v1123, %v1172
        %v1186 = vsel %vm1159, %v1128, %v1173
        %v1187 = vsel %vm1160, %v1133, %v1174
        %v1188 = vsel %vm1161, %v1138, %v1175
        %v1189 = vsel %vm1162, %v1143, %v1176
        %v1190 = vsel %vm1163, %v1148, %v1177
        %v1191 = vld [vmem:[%s11] sm:$0xff]
        %v1192 = vld [vmem:[%s11 + $0x8] sm:$0xff]
        %v1193 = vld [vmem:[%s11 + $0x10] sm:$0xff]
        %v1194 = vld [vmem:[%s11 + $0x18] sm:$0xff]
        %v1195 = vld [vmem:[%s11 + $0x20] sm:$0xff]
        %v1196 = vld [vmem:[%s11 + $0x28] sm:$0xff]
        %v1197 = vld [vmem:[%s11 + $0x30] sm:$0xff]
        %v1198 = vld [vmem:[%s11 + $0x38] sm:$0xff]
        %v1199 = vld [vmem:[%s11 + $0x40] sm:$0xff]
        %v1200 = vld [vmem:[%s11 + $0x48] sm:$0xff]
        %v1201 = vld [vmem:[%s11 + $0x50] sm:$0xff]
        %v1202 = vld [vmem:[%s11 + $0x58] sm:$0xff]
        %v1203 = vld [vmem:[%s11 + $0x60] sm:$0xff]
        %v1204 = vld [vmem:[%s11 + $0x68] sm:$0xff]
        %v1205 = vld [vmem:[%s11 + $0x70] sm:$0xff]
        %v1206 = vld [vmem:[%s11 + $0x78] sm:$0xff]
        %v1207 = vld [vmem:[%s12] sm:$0x1]
        %v1209 = vlaneseq
        %v1210 = vshrl.u32 %v1209, 7
        %v1211 = vsub.s32 0, %v1210
        %v1212 = vrot.slane %v1207, %v1211
        %1214 = vmatprep.subr.mxu0 0.0
        %1215 = vmatpush1.msra.mxu0 %v1191
        %1216 = vmatprep.subr.mxu0 0.0
        %1217 = vmatpush1.msra.mxu0 %v1192
        %1218 = vmatprep.subr.mxu0 0.0
        %1219 = vmatpush1.msra.mxu0 %v1193
        %1220 = vmatprep.subr.mxu0 0.0
        %1221 = vmatpush1.msra.mxu0 %v1194
        %1222 = vmatprep.subr.mxu0 0.0
        %1223 = vmatpush1.msra.mxu0 %v1195
        %1224 = vmatprep.subr.mxu0 0.0
        %1225 = vmatpush1.msra.mxu0 %v1196
        %1226 = vmatprep.subr.mxu0 0.0
        %1227 = vmatpush1.msra.mxu0 %v1197
        %1228 = vmatprep.subr.mxu0 0.0
        %1229 = vmatpush1.msra.mxu0 %v1198
        %1230 = vmatprep.subr.mxu0 0.0
        %1231 = vmatpush1.msra.mxu0 %v1199
        %1232 = vmatprep.subr.mxu0 0.0
        %1233 = vmatpush1.msra.mxu0 %v1200
        %1234 = vmatprep.subr.mxu0 0.0
        %1235 = vmatpush1.msra.mxu0 %v1201
        %1236 = vmatprep.subr.mxu0 0.0
        %1237 = vmatpush1.msra.mxu0 %v1202
        %1238 = vmatprep.subr.mxu0 0.0
        %1239 = vmatpush1.msra.mxu0 %v1203
        %1240 = vmatprep.subr.mxu0 0.0
        %1241 = vmatpush1.msra.mxu0 %v1204
        %1242 = vmatprep.subr.mxu0 0.0
        %1243 = vmatpush1.msra.mxu0 %v1205
        %1244 = vmatprep.subr.mxu0 0.0
        %1245 = vmatpush1.msra.mxu0 %v1206
        %1246 = vmatprep.subr.mxu0 0.0
        %1247 = vmatpush1.msra.mxu0 0.0
        %1248 = vmatprep.subr.mxu0 0.0
        %1249 = vmatpush1.msra.mxu0 0.0
        %1250 = vmatprep.subr.mxu0 0.0
        %1251 = vmatpush1.msra.mxu0 0.0
        %1252 = vmatprep.subr.mxu0 0.0
        %1253 = vmatpush1.msra.mxu0 0.0
        %1254 = vmatprep.subr.mxu0 0.0
        %1255 = vmatpush1.msra.mxu0 0.0
        %1256 = vmatprep.subr.mxu0 0.0
        %1257 = vmatpush1.msra.mxu0 0.0
        %1258 = vmatprep.subr.mxu0 0.0
        %1259 = vmatpush1.msra.mxu0 0.0
        %1260 = vmatprep.subr.mxu0 0.0
        %1261 = vmatpush1.msra.mxu0 0.0
        %1262 = vmatprep.subr.mxu0 0.0
        %1263 = vmatpush1.msra.mxu0 0.0
        %1264 = vmatprep.subr.mxu0 0.0
        %1265 = vmatpush1.msra.mxu0 0.0
        %1266 = vmatprep.subr.mxu0 0.0
        %1267 = vmatpush1.msra.mxu0 0.0
        %1268 = vmatprep.subr.mxu0 0.0
        %1269 = vmatpush1.msra.mxu0 0.0
        %1270 = vmatprep.subr.mxu0 0.0
        %1271 = vmatpush1.msra.mxu0 0.0
        %1272 = vmatprep.subr.mxu0 0.0
        %1273 = vmatpush1.msra.mxu0 0.0
        %1274 = vmatprep.subr.mxu0 0.0
        %1275 = vmatpush1.msra.mxu0 0.0
        %1276 = vmatprep.subr.mxu0 0.0
        %1277 = vmatpush1.msra.mxu0 0.0
        %1278 = vmatprep.mubr.f32.mxu0 0.0
        %1279 = vmatmul.mubr.f32.gmra.mrb[0].mxu0 %v1178
        %v1280 = vpop.f32.mrb[0].mxu0
        %v1281 = vadd.f32 %v1212, %v1280
        %v1282 = vpop.f32.mrb[0].mxu0
        %1283 = vmatprep.mubr.f32.mxu0 0.0
        %1284 = vmatmul.mubr.f32.gmra.mrb[0].mxu0 %v1179
        %v1285 = vpop.f32.mrb[0].mxu0
        %v1286 = vadd.f32 %v1212, %v1285
        %v1287 = vpop.f32.mrb[0].mxu0
        %1288 = vmatprep.mubr.f32.mxu0 0.0
        %1289 = vmatmul.mubr.f32.gmra.mrb[0].mxu0 %v1180
        %v1290 = vpop.f32.mrb[0].mxu0
        %v1291 = vadd.f32 %v1212, %v1290
        %v1292 = vpop.f32.mrb[0].mxu0
        %1293 = vmatprep.mubr.f32.mxu0 0.0
        %1294 = vmatmul.mubr.f32.gmra.mrb[0].mxu0 %v1181
        %v1295 = vpop.f32.mrb[0].mxu0
        %v1296 = vadd.f32 %v1212, %v1295
        %v1297 = vpop.f32.mrb[0].mxu0
        %1298 = vmatprep.mubr.f32.mxu0 0.0
        %1299 = vmatmul.mubr.f32.gmra.mrb[0].mxu0 %v1182
        %v1300 = vpop.f32.mrb[0].mxu0
        %v1301 = vadd.f32 %v1212, %v1300
        %v1302 = vpop.f32.mrb[0].mxu0
        %1303 = vmatprep.mubr.f32.mxu0 0.0
        %1304 = vmatmul.mubr.f32.gmra.mrb[0].mxu0 %v1183
        %v1305 = vpop.f32.mrb[0].mxu0
        %v1306 = vadd.f32 %v1212, %v1305
        %v1307 = vpop.f32.mrb[0].mxu0
        %1308 = vmatprep.mubr.f32.mxu0 0.0
        %1309 = vmatmul.mubr.f32.gmra.mrb[0].mxu0 %v1184
        %v1310 = vpop.f32.mrb[0].mxu0
        %v1311 = vadd.f32 %v1212, %v1310
        %v1312 = vpop.f32.mrb[0].mxu0
        %1313 = vmatprep.mubr.f32.mxu0 0.0
        %1314 = vmatmul.mubr.f32.gmra.mrb[0].mxu0 %v1185
        %v1315 = vpop.f32.mrb[0].mxu0
        %v1316 = vadd.f32 %v1212, %v1315
        %v1317 = vpop.f32.mrb[0].mxu0
        %1318 = vmatprep.mubr.f32.mxu0 0.0
        %1319 = vmatmul.mubr.f32.gmra.mrb[0].mxu0 %v1186
        %v1320 = vpop.f32.mrb[0].mxu0
        %v1321 = vadd.f32 %v1212, %v1320
        %v1322 = vpop.f32.mrb[0].mxu0
        %1323 = vmatprep.mubr.f32.mxu0 0.0
        %1324 = vmatmul.mubr.f32.gmra.mrb[0].mxu0 %v1187
        %v1325 = vpop.f32.mrb[0].mxu0
        %v1326 = vadd.f32 %v1212, %v1325
        %v1327 = vpop.f32.mrb[0].mxu0
        %1328 = vmatprep.mubr.f32.mxu0 0.0
        %1329 = vmatmul.mubr.f32.gmra.mrb[0].mxu0 %v1188
        %v1330 = vpop.f32.mrb[0].mxu0
        %v1331 = vadd.f32 %v1212, %v1330
        %v1332 = vpop.f32.mrb[0].mxu0
        %1333 = vmatprep.mubr.f32.mxu0 0.0
        %1334 = vmatmul.mubr.f32.gmra.mrb[0].mxu0 %v1189
        %v1335 = vpop.f32.mrb[0].mxu0
        %v1336 = vadd.f32 %v1212, %v1335
        %v1337 = vpop.f32.mrb[0].mxu0
        %1338 = vmatprep.mubr.f32.mxu0 0.0
        %1339 = vmatmul.mubr.f32.gmra.mrb[0].mxu0 %v1190
        %v1340 = vpop.f32.mrb[0].mxu0
        %v1341 = vadd.f32 %v1212, %v1340
        %v1342 = vpop.f32.mrb[0].mxu0
        %1343 = vdwg.mxu0
        %v1344 = vld [vmem:[%s539] sm:$0xff]
        %v1345 = vld [vmem:[%s539 + $0x8] sm:$0xff]
        %v1346 = vld [vmem:[%s539 + $0x10] sm:$0xff]
        %v1347 = vld [vmem:[%s539 + $0x18] sm:$0xff]
        %v1348 = vld [vmem:[%s539 + $0x20] sm:$0xff]
        %v1349 = vld [vmem:[%s539 + $0x28] sm:$0xff]
        %v1350 = vld [vmem:[%s539 + $0x30] sm:$0xff]
        %v1351 = vld [vmem:[%s539 + $0x38] sm:$0xff]
        %v1352 = vld [vmem:[%s539 + $0x40] sm:$0xff]
        %v1353 = vld [vmem:[%s539 + $0x48] sm:$0xff]
        %v1354 = vld [vmem:[%s539 + $0x50] sm:$0xff]
        %v1355 = vld [vmem:[%s539 + $0x58] sm:$0xff]
        %v1356 = vld [vmem:[%s539 + $0x60] sm:$0xff]
        %v1357 = vmul.f32 %v1281, %v1344
        %v1358 = vmul.f32 %v1286, %v1345
        %v1359 = vmul.f32 %v1291, %v1346
        %v1360 = vmul.f32 %v1296, %v1347
        %v1361 = vmul.f32 %v1301, %v1348
        %v1362 = vmul.f32 %v1306, %v1349
        %v1363 = vmul.f32 %v1311, %v1350
        %v1364 = vmul.f32 %v1316, %v1351
        %v1365 = vmul.f32 %v1321, %v1352
        %v1366 = vmul.f32 %v1326, %v1353
        %v1367 = vmul.f32 %v1331, %v1354
        %v1368 = vmul.f32 %v1336, %v1355
        %v1369 = vmul.f32 %v1341, %v1356
        %v1370 = vmul.f32 %v1357, 2.0
        %v1371 = vmul.f32 %v1358, 2.0
        %v1372 = vmul.f32 %v1359, 2.0
        %v1373 = vmul.f32 %v1360, 2.0
        %v1374 = vmul.f32 %v1361, 2.0
        %v1375 = vmul.f32 %v1362, 2.0
        %v1376 = vmul.f32 %v1363, 2.0
        %v1377 = vmul.f32 %v1364, 2.0
        %v1378 = vmul.f32 %v1365, 2.0
        %v1379 = vmul.f32 %v1366, 2.0
        %v1380 = vmul.f32 %v1367, 2.0
        %v1381 = vmul.f32 %v1368, 2.0
        %v1382 = vmul.f32 %v1369, 2.0
        %v1383 = vmax.f32 %v1370, -1.0
        %v1384 = vmax.f32 %v1371, -1.0
        %v1385 = vmax.f32 %v1372, -1.0
        %v1386 = vmax.f32 %v1373, -1.0
        %v1387 = vmax.f32 %v1374, -1.0
        %v1388 = vmax.f32 %v1375, -1.0
        %v1389 = vmax.f32 %v1376, -1.0
        %v1390 = vmax.f32 %v1377, -1.0
        %v1391 = vmax.f32 %v1378, -1.0
        %v1392 = vmax.f32 %v1379, -1.0
        %v1393 = vmax.f32 %v1380, -1.0
        %v1394 = vmax.f32 %v1381, -1.0
        %v1395 = vmax.f32 %v1382, -1.0
        %v1396 = vmin.f32 %v1383, 1.0
        %v1397 = vmin.f32 %v1384, 1.0
        %v1398 = vmin.f32 %v1385, 1.0
        %v1399 = vmin.f32 %v1386, 1.0
        %v1400 = vmin.f32 %v1387, 1.0
        %v1401 = vmin.f32 %v1388, 1.0
        %v1402 = vmin.f32 %v1389, 1.0
        %v1403 = vmin.f32 %v1390, 1.0
        %v1404 = vmin.f32 %v1391, 1.0
        %v1405 = vmin.f32 %v1392, 1.0
        %v1406 = vmin.f32 %v1393, 1.0
        %v1407 = vmin.f32 %v1394, 1.0
        %v1408 = vmin.f32 %v1395, 1.0
        %vm1409 = vcmask 31744
        %1410 = vst.msk [vmem:[%s557] sm:$0xff] %vm1409, %v1396
        %1411 = vst.msk [vmem:[%s557 + $0x8] sm:$0xff] %vm1409, %v1397
        %1412 = vst.msk [vmem:[%s557 + $0x10] sm:$0xff] %vm1409, %v1398
        %1413 = vst.msk [vmem:[%s557 + $0x18] sm:$0xff] %vm1409, %v1399
        %1414 = vst.msk [vmem:[%s557 + $0x20] sm:$0xff] %vm1409, %v1400
        %1415 = vst.msk [vmem:[%s557 + $0x28] sm:$0xff] %vm1409, %v1401
        %1416 = vst.msk [vmem:[%s557 + $0x30] sm:$0xff] %vm1409, %v1402
        %1417 = vst.msk [vmem:[%s557 + $0x38] sm:$0xff] %vm1409, %v1403
        %1418 = vst.msk [vmem:[%s557 + $0x40] sm:$0xff] %vm1409, %v1404
        %1419 = vst.msk [vmem:[%s557 + $0x48] sm:$0xff] %vm1409, %v1405
        %1420 = vst.msk [vmem:[%s557 + $0x50] sm:$0xff] %vm1409, %v1406
        %1421 = vst.msk [vmem:[%s557 + $0x58] sm:$0xff] %vm1409, %v1407
        %1422 = vst.msk [vmem:[%s557 + $0x60] sm:$0xff] %vm1409, %v1408
        %v1423 = vlaneseq
        %v1424 = vshrl.u32 %v1423, 7
        %v1425 = vsub.s32 0, %v1424
        %v1426 = vrot.slane %v1396, %v1425
        %1428 = vbcast.lane.b32.xlu0 %v1426, 256
        %v1429 = vpop.permute.xlu0 %1428
        %v1430 = vlaneseq
        %v1431 = vshrl.u32 %v1430, 7
        %v1432 = vsub.s32 1, %v1431
        %v1433 = vrot.slane %v1396, %v1432
        %1435 = vbcast.lane.b32.xlu0 %v1433, 256
        %v1436 = vpop.permute.xlu0 %1435
        %v1437 = vlaneseq
        %v1438 = vshrl.u32 %v1437, 7
        %v1439 = vsub.s32 2, %v1438
        %v1440 = vrot.slane %v1396, %v1439
        %1442 = vbcast.lane.b32.xlu0 %v1440, 256
        %v1443 = vpop.permute.xlu0 %1442
        %v1444 = vlaneseq
        %v1445 = vshrl.u32 %v1444, 7
        %v1446 = vsub.s32 3, %v1445
        %v1447 = vrot.slane %v1396, %v1446
        %1449 = vbcast.lane.b32.xlu0 %v1447, 256
        %v1450 = vpop.permute.xlu0 %1449
        %v1451 = vlaneseq
        %v1452 = vshrl.u32 %v1451, 7
        %v1453 = vsub.s32 4, %v1452
        %v1454 = vrot.slane %v1396, %v1453
        %1456 = vbcast.lane.b32.xlu0 %v1454, 256
        %v1457 = vpop.permute.xlu0 %1456
        %v1458 = vlaneseq
        %v1459 = vshrl.u32 %v1458, 7
        %v1460 = vsub.s32 5, %v1459
        %v1461 = vrot.slane %v1396, %v1460
        %1463 = vbcast.lane.b32.xlu0 %v1461, 256
        %v1464 = vpop.permute.xlu0 %1463
        %v1465 = vlaneseq
        %v1466 = vshrl.u32 %v1465, 7
        %v1467 = vsub.s32 6, %v1466
        %v1468 = vrot.slane %v1396, %v1467
        %1470 = vbcast.lane.b32.xlu0 %v1468, 256
        %v1471 = vpop.permute.xlu0 %1470
        %v1472 = vlaneseq
        %v1473 = vshrl.u32 %v1472, 7
        %v1474 = vsub.s32 7, %v1473
        %v1475 = vrot.slane %v1396, %v1474
        %1477 = vbcast.lane.b32.xlu0 %v1475, 256
        %v1478 = vpop.permute.xlu0 %1477
        %v1479 = vlaneseq
        %v1480 = vshrl.u32 %v1479, 7
        %v1481 = vsub.s32 0, %v1480
        %v1482 = vrot.slane %v1397, %v1481
        %1484 = vbcast.lane.b32.xlu0 %v1482, 256
        %v1485 = vpop.permute.xlu0 %1484
        %v1486 = vlaneseq
        %v1487 = vshrl.u32 %v1486, 7
        %v1488 = vsub.s32 1, %v1487
        %v1489 = vrot.slane %v1397, %v1488
        %1491 = vbcast.lane.b32.xlu0 %v1489, 256
        %v1492 = vpop.permute.xlu0 %1491
        %v1493 = vlaneseq
        %v1494 = vshrl.u32 %v1493, 7
        %v1495 = vsub.s32 2, %v1494
        %v1496 = vrot.slane %v1397, %v1495
        %1498 = vbcast.lane.b32.xlu0 %v1496, 256
        %v1499 = vpop.permute.xlu0 %1498
        %v1500 = vlaneseq
        %v1501 = vshrl.u32 %v1500, 7
        %v1502 = vsub.s32 3, %v1501
        %v1503 = vrot.slane %v1397, %v1502
        %1505 = vbcast.lane.b32.xlu0 %v1503, 256
        %v1506 = vpop.permute.xlu0 %1505
        %v1507 = vlaneseq
        %v1508 = vshrl.u32 %v1507, 7
        %v1509 = vsub.s32 4, %v1508
        %v1510 = vrot.slane %v1397, %v1509
        %1512 = vbcast.lane.b32.xlu0 %v1510, 256
        %v1513 = vpop.permute.xlu0 %1512
        %v1514 = vlaneseq
        %v1515 = vshrl.u32 %v1514, 7
        %v1516 = vsub.s32 5, %v1515
        %v1517 = vrot.slane %v1397, %v1516
        %1519 = vbcast.lane.b32.xlu0 %v1517, 256
        %v1520 = vpop.permute.xlu0 %1519
        %v1521 = vlaneseq
        %v1522 = vshrl.u32 %v1521, 7
        %v1523 = vsub.s32 6, %v1522
        %v1524 = vrot.slane %v1397, %v1523
        %1526 = vbcast.lane.b32.xlu0 %v1524, 256
        %v1527 = vpop.permute.xlu0 %1526
        %v1528 = vlaneseq
        %v1529 = vshrl.u32 %v1528, 7
        %v1530 = vsub.s32 7, %v1529
        %v1531 = vrot.slane %v1397, %v1530
        %1533 = vbcast.lane.b32.xlu0 %v1531, 256
        %v1534 = vpop.permute.xlu0 %1533
        %v1535 = vlaneseq
        %v1536 = vshrl.u32 %v1535, 7
        %v1537 = vsub.s32 0, %v1536
        %v1538 = vrot.slane %v1398, %v1537
        %1540 = vbcast.lane.b32.xlu0 %v1538, 256
        %v1541 = vpop.permute.xlu0 %1540
        %v1542 = vlaneseq
        %v1543 = vshrl.u32 %v1542, 7
        %v1544 = vsub.s32 1, %v1543
        %v1545 = vrot.slane %v1398, %v1544
        %1547 = vbcast.lane.b32.xlu0 %v1545, 256
        %v1548 = vpop.permute.xlu0 %1547
        %v1549 = vlaneseq
        %v1550 = vshrl.u32 %v1549, 7
        %v1551 = vsub.s32 2, %v1550
        %v1552 = vrot.slane %v1398, %v1551
        %1554 = vbcast.lane.b32.xlu0 %v1552, 256
        %v1555 = vpop.permute.xlu0 %1554
        %v1556 = vlaneseq
        %v1557 = vshrl.u32 %v1556, 7
        %v1558 = vsub.s32 3, %v1557
        %v1559 = vrot.slane %v1398, %v1558
        %1561 = vbcast.lane.b32.xlu0 %v1559, 256
        %v1562 = vpop.permute.xlu0 %1561
        %v1563 = vlaneseq
        %v1564 = vshrl.u32 %v1563, 7
        %v1565 = vsub.s32 4, %v1564
        %v1566 = vrot.slane %v1398, %v1565
        %1568 = vbcast.lane.b32.xlu0 %v1566, 256
        %v1569 = vpop.permute.xlu0 %1568
        %v1570 = vlaneseq
        %v1571 = vshrl.u32 %v1570, 7
        %v1572 = vsub.s32 5, %v1571
        %v1573 = vrot.slane %v1398, %v1572
        %1575 = vbcast.lane.b32.xlu0 %v1573, 256
        %v1576 = vpop.permute.xlu0 %1575
        %v1577 = vlaneseq
        %v1578 = vshrl.u32 %v1577, 7
        %v1579 = vsub.s32 6, %v1578
        %v1580 = vrot.slane %v1398, %v1579
        %1582 = vbcast.lane.b32.xlu0 %v1580, 256
        %v1583 = vpop.permute.xlu0 %1582
        %v1584 = vlaneseq
        %v1585 = vshrl.u32 %v1584, 7
        %v1586 = vsub.s32 7, %v1585
        %v1587 = vrot.slane %v1398, %v1586
        %1589 = vbcast.lane.b32.xlu0 %v1587, 256
        %v1590 = vpop.permute.xlu0 %1589
        %v1591 = vlaneseq
        %v1592 = vshrl.u32 %v1591, 7
        %v1593 = vsub.s32 0, %v1592
        %v1594 = vrot.slane %v1399, %v1593
        %1596 = vbcast.lane.b32.xlu0 %v1594, 256
        %v1597 = vpop.permute.xlu0 %1596
        %v1598 = vlaneseq
        %v1599 = vshrl.u32 %v1598, 7
        %v1600 = vsub.s32 1, %v1599
        %v1601 = vrot.slane %v1399, %v1600
        %1603 = vbcast.lane.b32.xlu0 %v1601, 256
        %v1604 = vpop.permute.xlu0 %1603
        %v1605 = vlaneseq
        %v1606 = vshrl.u32 %v1605, 7
        %v1607 = vsub.s32 2, %v1606
        %v1608 = vrot.slane %v1399, %v1607
        %1610 = vbcast.lane.b32.xlu0 %v1608, 256
        %v1611 = vpop.permute.xlu0 %1610
        %v1612 = vlaneseq
        %v1613 = vshrl.u32 %v1612, 7
        %v1614 = vsub.s32 3, %v1613
        %v1615 = vrot.slane %v1399, %v1614
        %1617 = vbcast.lane.b32.xlu0 %v1615, 256
        %v1618 = vpop.permute.xlu0 %1617
        %v1619 = vlaneseq
        %v1620 = vshrl.u32 %v1619, 7
        %v1621 = vsub.s32 4, %v1620
        %v1622 = vrot.slane %v1399, %v1621
        %1624 = vbcast.lane.b32.xlu0 %v1622, 256
        %v1625 = vpop.permute.xlu0 %1624
        %v1626 = vlaneseq
        %v1627 = vshrl.u32 %v1626, 7
        %v1628 = vsub.s32 5, %v1627
        %v1629 = vrot.slane %v1399, %v1628
        %1631 = vbcast.lane.b32.xlu0 %v1629, 256
        %v1632 = vpop.permute.xlu0 %1631
        %v1633 = vlaneseq
        %v1634 = vshrl.u32 %v1633, 7
        %v1635 = vsub.s32 6, %v1634
        %v1636 = vrot.slane %v1399, %v1635
        %1638 = vbcast.lane.b32.xlu0 %v1636, 256
        %v1639 = vpop.permute.xlu0 %1638
        %v1640 = vlaneseq
        %v1641 = vshrl.u32 %v1640, 7
        %v1642 = vsub.s32 7, %v1641
        %v1643 = vrot.slane %v1399, %v1642
        %1645 = vbcast.lane.b32.xlu0 %v1643, 256
        %v1646 = vpop.permute.xlu0 %1645
        %v1647 = vlaneseq
        %v1648 = vshrl.u32 %v1647, 7
        %v1649 = vsub.s32 0, %v1648
        %v1650 = vrot.slane %v1400, %v1649
        %1652 = vbcast.lane.b32.xlu0 %v1650, 256
        %v1653 = vpop.permute.xlu0 %1652
        %v1654 = vlaneseq
        %v1655 = vshrl.u32 %v1654, 7
        %v1656 = vsub.s32 1, %v1655
        %v1657 = vrot.slane %v1400, %v1656
        %1659 = vbcast.lane.b32.xlu0 %v1657, 256
        %v1660 = vpop.permute.xlu0 %1659
        %v1661 = vlaneseq
        %v1662 = vshrl.u32 %v1661, 7
        %v1663 = vsub.s32 2, %v1662
        %v1664 = vrot.slane %v1400, %v1663
        %1666 = vbcast.lane.b32.xlu0 %v1664, 256
        %v1667 = vpop.permute.xlu0 %1666
        %v1668 = vlaneseq
        %v1669 = vshrl.u32 %v1668, 7
        %v1670 = vsub.s32 3, %v1669
        %v1671 = vrot.slane %v1400, %v1670
        %1673 = vbcast.lane.b32.xlu0 %v1671, 256
        %v1674 = vpop.permute.xlu0 %1673
        %v1675 = vlaneseq
        %v1676 = vshrl.u32 %v1675, 7
        %v1677 = vsub.s32 4, %v1676
        %v1678 = vrot.slane %v1400, %v1677
        %1680 = vbcast.lane.b32.xlu0 %v1678, 256
        %v1681 = vpop.permute.xlu0 %1680
        %v1682 = vlaneseq
        %v1683 = vshrl.u32 %v1682, 7
        %v1684 = vsub.s32 5, %v1683
        %v1685 = vrot.slane %v1400, %v1684
        %1687 = vbcast.lane.b32.xlu0 %v1685, 256
        %v1688 = vpop.permute.xlu0 %1687
        %v1689 = vlaneseq
        %v1690 = vshrl.u32 %v1689, 7
        %v1691 = vsub.s32 6, %v1690
        %v1692 = vrot.slane %v1400, %v1691
        %1694 = vbcast.lane.b32.xlu0 %v1692, 256
        %v1695 = vpop.permute.xlu0 %1694
        %v1696 = vlaneseq
        %v1697 = vshrl.u32 %v1696, 7
        %v1698 = vsub.s32 7, %v1697
        %v1699 = vrot.slane %v1400, %v1698
        %1701 = vbcast.lane.b32.xlu0 %v1699, 256
        %v1702 = vpop.permute.xlu0 %1701
        %v1703 = vlaneseq
        %v1704 = vshrl.u32 %v1703, 7
        %v1705 = vsub.s32 0, %v1704
        %v1706 = vrot.slane %v1401, %v1705
        %1708 = vbcast.lane.b32.xlu0 %v1706, 256
        %v1709 = vpop.permute.xlu0 %1708
        %v1710 = vlaneseq
        %v1711 = vshrl.u32 %v1710, 7
        %v1712 = vsub.s32 1, %v1711
        %v1713 = vrot.slane %v1401, %v1712
        %1715 = vbcast.lane.b32.xlu0 %v1713, 256
        %v1716 = vpop.permute.xlu0 %1715
        %v1717 = vlaneseq
        %v1718 = vshrl.u32 %v1717, 7
        %v1719 = vsub.s32 2, %v1718
        %v1720 = vrot.slane %v1401, %v1719
        %1722 = vbcast.lane.b32.xlu0 %v1720, 256
        %v1723 = vpop.permute.xlu0 %1722
        %v1724 = vlaneseq
        %v1725 = vshrl.u32 %v1724, 7
        %v1726 = vsub.s32 3, %v1725
        %v1727 = vrot.slane %v1401, %v1726
        %1729 = vbcast.lane.b32.xlu0 %v1727, 256
        %v1730 = vpop.permute.xlu0 %1729
        %v1731 = vlaneseq
        %v1732 = vshrl.u32 %v1731, 7
        %v1733 = vsub.s32 4, %v1732
        %v1734 = vrot.slane %v1401, %v1733
        %1736 = vbcast.lane.b32.xlu0 %v1734, 256
        %v1737 = vpop.permute.xlu0 %1736
        %v1738 = vlaneseq
        %v1739 = vshrl.u32 %v1738, 7
        %v1740 = vsub.s32 5, %v1739
        %v1741 = vrot.slane %v1401, %v1740
        %1743 = vbcast.lane.b32.xlu0 %v1741, 256
        %v1744 = vpop.permute.xlu0 %1743
        %v1745 = vlaneseq
        %v1746 = vshrl.u32 %v1745, 7
        %v1747 = vsub.s32 6, %v1746
        %v1748 = vrot.slane %v1401, %v1747
        %1750 = vbcast.lane.b32.xlu0 %v1748, 256
        %v1751 = vpop.permute.xlu0 %1750
        %v1752 = vlaneseq
        %v1753 = vshrl.u32 %v1752, 7
        %v1754 = vsub.s32 7, %v1753
        %v1755 = vrot.slane %v1401, %v1754
        %1757 = vbcast.lane.b32.xlu0 %v1755, 256
        %v1758 = vpop.permute.xlu0 %1757
        %v1759 = vlaneseq
        %v1760 = vshrl.u32 %v1759, 7
        %v1761 = vsub.s32 0, %v1760
        %v1762 = vrot.slane %v1402, %v1761
        %1764 = vbcast.lane.b32.xlu0 %v1762, 256
        %v1765 = vpop.permute.xlu0 %1764
        %v1766 = vlaneseq
        %v1767 = vshrl.u32 %v1766, 7
        %v1768 = vsub.s32 1, %v1767
        %v1769 = vrot.slane %v1402, %v1768
        %1771 = vbcast.lane.b32.xlu0 %v1769, 256
        %v1772 = vpop.permute.xlu0 %1771
        %v1773 = vlaneseq
        %v1774 = vshrl.u32 %v1773, 7
        %v1775 = vsub.s32 2, %v1774
        %v1776 = vrot.slane %v1402, %v1775
        %1778 = vbcast.lane.b32.xlu0 %v1776, 256
        %v1779 = vpop.permute.xlu0 %1778
        %v1780 = vlaneseq
        %v1781 = vshrl.u32 %v1780, 7
        %v1782 = vsub.s32 3, %v1781
        %v1783 = vrot.slane %v1402, %v1782
        %1785 = vbcast.lane.b32.xlu0 %v1783, 256
        %v1786 = vpop.permute.xlu0 %1785
        %v1787 = vlaneseq
        %v1788 = vshrl.u32 %v1787, 7
        %v1789 = vsub.s32 4, %v1788
        %v1790 = vrot.slane %v1402, %v1789
        %1792 = vbcast.lane.b32.xlu0 %v1790, 256
        %v1793 = vpop.permute.xlu0 %1792
        %v1794 = vlaneseq
        %v1795 = vshrl.u32 %v1794, 7
        %v1796 = vsub.s32 5, %v1795
        %v1797 = vrot.slane %v1402, %v1796
        %1799 = vbcast.lane.b32.xlu0 %v1797, 256
        %v1800 = vpop.permute.xlu0 %1799
        %v1801 = vlaneseq
        %v1802 = vshrl.u32 %v1801, 7
        %v1803 = vsub.s32 6, %v1802
        %v1804 = vrot.slane %v1402, %v1803
        %1806 = vbcast.lane.b32.xlu0 %v1804, 256
        %v1807 = vpop.permute.xlu0 %1806
        %v1808 = vlaneseq
        %v1809 = vshrl.u32 %v1808, 7
        %v1810 = vsub.s32 7, %v1809
        %v1811 = vrot.slane %v1402, %v1810
        %1813 = vbcast.lane.b32.xlu0 %v1811, 256
        %v1814 = vpop.permute.xlu0 %1813
        %v1815 = vlaneseq
        %v1816 = vshrl.u32 %v1815, 7
        %v1817 = vsub.s32 0, %v1816
        %v1818 = vrot.slane %v1403, %v1817
        %1820 = vbcast.lane.b32.xlu0 %v1818, 256
        %v1821 = vpop.permute.xlu0 %1820
        %v1822 = vlaneseq
        %v1823 = vshrl.u32 %v1822, 7
        %v1824 = vsub.s32 1, %v1823
        %v1825 = vrot.slane %v1403, %v1824
        %1827 = vbcast.lane.b32.xlu0 %v1825, 256
        %v1828 = vpop.permute.xlu0 %1827
        %v1829 = vlaneseq
        %v1830 = vshrl.u32 %v1829, 7
        %v1831 = vsub.s32 2, %v1830
        %v1832 = vrot.slane %v1403, %v1831
        %1834 = vbcast.lane.b32.xlu0 %v1832, 256
        %v1835 = vpop.permute.xlu0 %1834
        %v1836 = vlaneseq
        %v1837 = vshrl.u32 %v1836, 7
        %v1838 = vsub.s32 3, %v1837
        %v1839 = vrot.slane %v1403, %v1838
        %1841 = vbcast.lane.b32.xlu0 %v1839, 256
        %v1842 = vpop.permute.xlu0 %1841
        %v1843 = vlaneseq
        %v1844 = vshrl.u32 %v1843, 7
        %v1845 = vsub.s32 4, %v1844
        %v1846 = vrot.slane %v1403, %v1845
        %1848 = vbcast.lane.b32.xlu0 %v1846, 256
        %v1849 = vpop.permute.xlu0 %1848
        %v1850 = vlaneseq
        %v1851 = vshrl.u32 %v1850, 7
        %v1852 = vsub.s32 5, %v1851
        %v1853 = vrot.slane %v1403, %v1852
        %1855 = vbcast.lane.b32.xlu0 %v1853, 256
        %v1856 = vpop.permute.xlu0 %1855
        %v1857 = vlaneseq
        %v1858 = vshrl.u32 %v1857, 7
        %v1859 = vsub.s32 6, %v1858
        %v1860 = vrot.slane %v1403, %v1859
        %1862 = vbcast.lane.b32.xlu0 %v1860, 256
        %v1863 = vpop.permute.xlu0 %1862
        %v1864 = vlaneseq
        %v1865 = vshrl.u32 %v1864, 7
        %v1866 = vsub.s32 7, %v1865
        %v1867 = vrot.slane %v1403, %v1866
        %1869 = vbcast.lane.b32.xlu0 %v1867, 256
        %v1870 = vpop.permute.xlu0 %1869
        %v1871 = vlaneseq
        %v1872 = vshrl.u32 %v1871, 7
        %v1873 = vsub.s32 0, %v1872
        %v1874 = vrot.slane %v1404, %v1873
        %1876 = vbcast.lane.b32.xlu0 %v1874, 256
        %v1877 = vpop.permute.xlu0 %1876
        %v1878 = vlaneseq
        %v1879 = vshrl.u32 %v1878, 7
        %v1880 = vsub.s32 1, %v1879
        %v1881 = vrot.slane %v1404, %v1880
        %1883 = vbcast.lane.b32.xlu0 %v1881, 256
        %v1884 = vpop.permute.xlu0 %1883
        %v1885 = vlaneseq
        %v1886 = vshrl.u32 %v1885, 7
        %v1887 = vsub.s32 2, %v1886
        %v1888 = vrot.slane %v1404, %v1887
        %1890 = vbcast.lane.b32.xlu0 %v1888, 256
        %v1891 = vpop.permute.xlu0 %1890
        %v1892 = vlaneseq
        %v1893 = vshrl.u32 %v1892, 7
        %v1894 = vsub.s32 3, %v1893
        %v1895 = vrot.slane %v1404, %v1894
        %1897 = vbcast.lane.b32.xlu0 %v1895, 256
        %v1898 = vpop.permute.xlu0 %1897
        %v1899 = vlaneseq
        %v1900 = vshrl.u32 %v1899, 7
        %v1901 = vsub.s32 4, %v1900
        %v1902 = vrot.slane %v1404, %v1901
        %1904 = vbcast.lane.b32.xlu0 %v1902, 256
        %v1905 = vpop.permute.xlu0 %1904
        %v1906 = vlaneseq
        %v1907 = vshrl.u32 %v1906, 7
        %v1908 = vsub.s32 5, %v1907
        %v1909 = vrot.slane %v1404, %v1908
        %1911 = vbcast.lane.b32.xlu0 %v1909, 256
        %v1912 = vpop.permute.xlu0 %1911
        %v1913 = vlaneseq
        %v1914 = vshrl.u32 %v1913, 7
        %v1915 = vsub.s32 6, %v1914
        %v1916 = vrot.slane %v1404, %v1915
        %1918 = vbcast.lane.b32.xlu0 %v1916, 256
        %v1919 = vpop.permute.xlu0 %1918
        %v1920 = vlaneseq
        %v1921 = vshrl.u32 %v1920, 7
        %v1922 = vsub.s32 7, %v1921
        %v1923 = vrot.slane %v1404, %v1922
        %1925 = vbcast.lane.b32.xlu0 %v1923, 256
        %v1926 = vpop.permute.xlu0 %1925
        %v1927 = vlaneseq
        %v1928 = vshrl.u32 %v1927, 7
        %v1929 = vsub.s32 0, %v1928
        %v1930 = vrot.slane %v1405, %v1929
        %1932 = vbcast.lane.b32.xlu0 %v1930, 256
        %v1933 = vpop.permute.xlu0 %1932
        %v1934 = vlaneseq
        %v1935 = vshrl.u32 %v1934, 7
        %v1936 = vsub.s32 1, %v1935
        %v1937 = vrot.slane %v1405, %v1936
        %1939 = vbcast.lane.b32.xlu0 %v1937, 256
        %v1940 = vpop.permute.xlu0 %1939
        %v1941 = vlaneseq
        %v1942 = vshrl.u32 %v1941, 7
        %v1943 = vsub.s32 2, %v1942
        %v1944 = vrot.slane %v1405, %v1943
        %1946 = vbcast.lane.b32.xlu0 %v1944, 256
        %v1947 = vpop.permute.xlu0 %1946
        %v1948 = vlaneseq
        %v1949 = vshrl.u32 %v1948, 7
        %v1950 = vsub.s32 3, %v1949
        %v1951 = vrot.slane %v1405, %v1950
        %1953 = vbcast.lane.b32.xlu0 %v1951, 256
        %v1954 = vpop.permute.xlu0 %1953
        %v1955 = vlaneseq
        %v1956 = vshrl.u32 %v1955, 7
        %v1957 = vsub.s32 4, %v1956
        %v1958 = vrot.slane %v1405, %v1957
        %1960 = vbcast.lane.b32.xlu0 %v1958, 256
        %v1961 = vpop.permute.xlu0 %1960
        %v1962 = vlaneseq
        %v1963 = vshrl.u32 %v1962, 7
        %v1964 = vsub.s32 5, %v1963
        %v1965 = vrot.slane %v1405, %v1964
        %1967 = vbcast.lane.b32.xlu0 %v1965, 256
        %v1968 = vpop.permute.xlu0 %1967
        %v1969 = vlaneseq
        %v1970 = vshrl.u32 %v1969, 7
        %v1971 = vsub.s32 6, %v1970
        %v1972 = vrot.slane %v1405, %v1971
        %1974 = vbcast.lane.b32.xlu0 %v1972, 256
        %v1975 = vpop.permute.xlu0 %1974
        %v1976 = vlaneseq
        %v1977 = vshrl.u32 %v1976, 7
        %v1978 = vsub.s32 7, %v1977
        %v1979 = vrot.slane %v1405, %v1978
        %1981 = vbcast.lane.b32.xlu0 %v1979, 256
        %v1982 = vpop.permute.xlu0 %1981
        %v1983 = vlaneseq
        %v1984 = vshrl.u32 %v1983, 7
        %v1985 = vsub.s32 0, %v1984
        %v1986 = vrot.slane %v1406, %v1985
        %1988 = vbcast.lane.b32.xlu0 %v1986, 256
        %v1989 = vpop.permute.xlu0 %1988
        %v1990 = vlaneseq
        %v1991 = vshrl.u32 %v1990, 7
        %v1992 = vsub.s32 1, %v1991
        %v1993 = vrot.slane %v1406, %v1992
        %1995 = vbcast.lane.b32.xlu0 %v1993, 256
        %v1996 = vpop.permute.xlu0 %1995
        %v1997 = vlaneseq
        %v1998 = vshrl.u32 %v1997, 7
        %v1999 = vsub.s32 2, %v1998
        %v2000 = vrot.slane %v1406, %v1999
        %2002 = vbcast.lane.b32.xlu0 %v2000, 256
        %v2003 = vpop.permute.xlu0 %2002
        %v2004 = vlaneseq
        %v2005 = vshrl.u32 %v2004, 7
        %v2006 = vsub.s32 3, %v2005
        %v2007 = vrot.slane %v1406, %v2006
        %2009 = vbcast.lane.b32.xlu0 %v2007, 256
        %v2010 = vpop.permute.xlu0 %2009
        %v2011 = vlaneseq
        %v2012 = vshrl.u32 %v2011, 7
        %v2013 = vsub.s32 4, %v2012
        %v2014 = vrot.slane %v1406, %v2013
        %2016 = vbcast.lane.b32.xlu0 %v2014, 256
        %v2017 = vpop.permute.xlu0 %2016
        %v2018 = vlaneseq
        %v2019 = vshrl.u32 %v2018, 7
        %v2020 = vsub.s32 5, %v2019
        %v2021 = vrot.slane %v1406, %v2020
        %2023 = vbcast.lane.b32.xlu0 %v2021, 256
        %v2024 = vpop.permute.xlu0 %2023
        %v2025 = vlaneseq
        %v2026 = vshrl.u32 %v2025, 7
        %v2027 = vsub.s32 6, %v2026
        %v2028 = vrot.slane %v1406, %v2027
        %2030 = vbcast.lane.b32.xlu0 %v2028, 256
        %v2031 = vpop.permute.xlu0 %2030
        %v2032 = vlaneseq
        %v2033 = vshrl.u32 %v2032, 7
        %v2034 = vsub.s32 7, %v2033
        %v2035 = vrot.slane %v1406, %v2034
        %2037 = vbcast.lane.b32.xlu0 %v2035, 256
        %v2038 = vpop.permute.xlu0 %2037
        %v2039 = vlaneseq
        %v2040 = vshrl.u32 %v2039, 7
        %v2041 = vsub.s32 0, %v2040
        %v2042 = vrot.slane %v1407, %v2041
        %2044 = vbcast.lane.b32.xlu0 %v2042, 256
        %v2045 = vpop.permute.xlu0 %2044
        %v2046 = vlaneseq
        %v2047 = vshrl.u32 %v2046, 7
        %v2048 = vsub.s32 1, %v2047
        %v2049 = vrot.slane %v1407, %v2048
        %2051 = vbcast.lane.b32.xlu0 %v2049, 256
        %v2052 = vpop.permute.xlu0 %2051
        %v2053 = vlaneseq
        %v2054 = vshrl.u32 %v2053, 7
        %v2055 = vsub.s32 2, %v2054
        %v2056 = vrot.slane %v1407, %v2055
        %2058 = vbcast.lane.b32.xlu0 %v2056, 256
        %v2059 = vpop.permute.xlu0 %2058
        %v2060 = vlaneseq
        %v2061 = vshrl.u32 %v2060, 7
        %v2062 = vsub.s32 3, %v2061
        %v2063 = vrot.slane %v1407, %v2062
        %2065 = vbcast.lane.b32.xlu0 %v2063, 256
        %v2066 = vpop.permute.xlu0 %2065
        %v2067 = vlaneseq
        %v2068 = vshrl.u32 %v2067, 7
        %v2069 = vsub.s32 4, %v2068
        %v2070 = vrot.slane %v1407, %v2069
        %2072 = vbcast.lane.b32.xlu0 %v2070, 256
        %v2073 = vpop.permute.xlu0 %2072
        %v2074 = vlaneseq
        %v2075 = vshrl.u32 %v2074, 7
        %v2076 = vsub.s32 5, %v2075
        %v2077 = vrot.slane %v1407, %v2076
        %2079 = vbcast.lane.b32.xlu0 %v2077, 256
        %v2080 = vpop.permute.xlu0 %2079
        %v2081 = vlaneseq
        %v2082 = vshrl.u32 %v2081, 7
        %v2083 = vsub.s32 6, %v2082
        %v2084 = vrot.slane %v1407, %v2083
        %2086 = vbcast.lane.b32.xlu0 %v2084, 256
        %v2087 = vpop.permute.xlu0 %2086
        %v2088 = vlaneseq
        %v2089 = vshrl.u32 %v2088, 7
        %v2090 = vsub.s32 7, %v2089
        %v2091 = vrot.slane %v1407, %v2090
        %2093 = vbcast.lane.b32.xlu0 %v2091, 256
        %v2094 = vpop.permute.xlu0 %2093
        %v2095 = vlaneseq
        %v2096 = vshrl.u32 %v2095, 7
        %v2097 = vsub.s32 0, %v2096
        %v2098 = vrot.slane %v1408, %v2097
        %2100 = vbcast.lane.b32.xlu0 %v2098, 256
        %v2101 = vpop.permute.xlu0 %2100
        %v2102 = vlaneseq
        %v2103 = vshrl.u32 %v2102, 7
        %v2104 = vsub.s32 1, %v2103
        %v2105 = vrot.slane %v1408, %v2104
        %2107 = vbcast.lane.b32.xlu0 %v2105, 256
        %v2108 = vpop.permute.xlu0 %2107
        %v2109 = vlaneseq
        %v2110 = vshrl.u32 %v2109, 7
        %v2111 = vsub.s32 2, %v2110
        %v2112 = vrot.slane %v1408, %v2111
        %2114 = vbcast.lane.b32.xlu0 %v2112, 256
        %v2115 = vpop.permute.xlu0 %2114
        %v2116 = vlaneseq
        %v2117 = vshrl.u32 %v2116, 7
        %v2118 = vsub.s32 3, %v2117
        %v2119 = vrot.slane %v1408, %v2118
        %2121 = vbcast.lane.b32.xlu0 %v2119, 256
        %v2122 = vpop.permute.xlu0 %2121
        %v2123 = vlaneseq
        %v2124 = vshrl.u32 %v2123, 7
        %v2125 = vsub.s32 4, %v2124
        %v2126 = vrot.slane %v1408, %v2125
        %2128 = vbcast.lane.b32.xlu0 %v2126, 256
        %v2129 = vpop.permute.xlu0 %2128
        %v2130 = vlaneseq
        %v2131 = vshrl.u32 %v2130, 7
        %v2132 = vsub.s32 5, %v2131
        %v2133 = vrot.slane %v1408, %v2132
        %2135 = vbcast.lane.b32.xlu0 %v2133, 256
        %v2136 = vpop.permute.xlu0 %2135
        %v2137 = vlaneseq
        %v2138 = vshrl.u32 %v2137, 7
        %v2139 = vsub.s32 6, %v2138
        %v2140 = vrot.slane %v1408, %v2139
        %2142 = vbcast.lane.b32.xlu0 %v2140, 256
        %v2143 = vpop.permute.xlu0 %2142
        %v2144 = vlaneseq
        %v2145 = vshrl.u32 %v2144, 7
        %v2146 = vsub.s32 7, %v2145
        %v2147 = vrot.slane %v1408, %v2146
        %2149 = vbcast.lane.b32.xlu0 %v2147, 256
        %v2150 = vpop.permute.xlu0 %2149
        %v2151 = vld [vmem:[%s545] sm:$0xf]
        %v2152 = vld [vmem:[%s545 + $0x4] sm:$0xf]
        %v2153 = vld [vmem:[%s545 + $0x8] sm:$0xf]
        %v2154 = vld [vmem:[%s545 + $0xc] sm:$0xf]
        %v2155 = vld [vmem:[%s545 + $0x10] sm:$0xf]
        %v2156 = vld [vmem:[%s545 + $0x14] sm:$0xf]
        %v2157 = vld [vmem:[%s545 + $0x18] sm:$0xf]
        %v2158 = vld [vmem:[%s545 + $0x1c] sm:$0xf]
        %v2159 = vld [vmem:[%s545 + $0x20] sm:$0xf]
        %v2160 = vld [vmem:[%s545 + $0x24] sm:$0xf]
        %v2161 = vld [vmem:[%s545 + $0x28] sm:$0xf]
        %v2162 = vld [vmem:[%s545 + $0x2c] sm:$0xf]
        %v2163 = vld [vmem:[%s545 + $0x30] sm:$0xf]
        %v2164 = vld [vmem:[%s545 + $0x34] sm:$0xf]
        %v2165 = vld [vmem:[%s545 + $0x38] sm:$0xf]
        %v2166 = vld [vmem:[%s545 + $0x3c] sm:$0xf]
        %v2167 = vld [vmem:[%s545 + $0x40] sm:$0xf]
        %v2168 = vld [vmem:[%s545 + $0x44] sm:$0xf]
        %v2169 = vld [vmem:[%s545 + $0x48] sm:$0xf]
        %v2170 = vld [vmem:[%s545 + $0x4c] sm:$0xf]
        %v2171 = vld [vmem:[%s545 + $0x50] sm:$0xf]
        %v2172 = vld [vmem:[%s545 + $0x54] sm:$0xf]
        %v2173 = vld [vmem:[%s545 + $0x58] sm:$0xf]
        %v2174 = vld [vmem:[%s545 + $0x5c] sm:$0xf]
        %v2175 = vld [vmem:[%s545 + $0x60] sm:$0xf]
        %v2176 = vld [vmem:[%s545 + $0x64] sm:$0xf]
        %v2177 = vld [vmem:[%s545 + $0x68] sm:$0xf]
        %v2178 = vld [vmem:[%s545 + $0x6c] sm:$0xf]
        %v2179 = vld [vmem:[%s545 + $0x70] sm:$0xf]
        %v2180 = vld [vmem:[%s545 + $0x74] sm:$0xf]
        %v2181 = vld [vmem:[%s545 + $0x78] sm:$0xf]
        %v2182 = vld [vmem:[%s545 + $0x7c] sm:$0xf]
        %v2183 = vld [vmem:[%s545 + $0x80] sm:$0xf]
        %v2184 = vld [vmem:[%s545 + $0x84] sm:$0xf]
        %v2185 = vld [vmem:[%s545 + $0x88] sm:$0xf]
        %v2186 = vld [vmem:[%s545 + $0x8c] sm:$0xf]
        %v2187 = vld [vmem:[%s545 + $0x90] sm:$0xf]
        %v2188 = vld [vmem:[%s545 + $0x94] sm:$0xf]
        %v2189 = vld [vmem:[%s545 + $0x98] sm:$0xf]
        %v2190 = vld [vmem:[%s545 + $0x9c] sm:$0xf]
        %v2191 = vld [vmem:[%s545 + $0xa0] sm:$0xf]
        %v2192 = vld [vmem:[%s545 + $0xa4] sm:$0xf]
        %v2193 = vld [vmem:[%s545 + $0xa8] sm:$0xf]
        %v2194 = vld [vmem:[%s545 + $0xac] sm:$0xf]
        %v2195 = vld [vmem:[%s545 + $0xb0] sm:$0xf]
        %v2196 = vld [vmem:[%s545 + $0xb4] sm:$0xf]
        %v2197 = vld [vmem:[%s545 + $0xb8] sm:$0xf]
        %v2198 = vld [vmem:[%s545 + $0xbc] sm:$0xf]
        %v2199 = vld [vmem:[%s545 + $0xc0] sm:$0xf]
        %v2200 = vld [vmem:[%s545 + $0xc4] sm:$0xf]
        %v2201 = vld [vmem:[%s545 + $0xc8] sm:$0xf]
        %v2202 = vld [vmem:[%s545 + $0xcc] sm:$0xf]
        %v2203 = vld [vmem:[%s545 + $0xd0] sm:$0xf]
        %v2204 = vld [vmem:[%s545 + $0xd4] sm:$0xf]
        %v2205 = vld [vmem:[%s545 + $0xd8] sm:$0xf]
        %v2206 = vld [vmem:[%s545 + $0xdc] sm:$0xf]
        %v2207 = vld [vmem:[%s545 + $0xe0] sm:$0xf]
        %v2208 = vld [vmem:[%s545 + $0xe4] sm:$0xf]
        %v2209 = vld [vmem:[%s545 + $0xe8] sm:$0xf]
        %v2210 = vld [vmem:[%s545 + $0xec] sm:$0xf]
        %v2211 = vld [vmem:[%s545 + $0xf0] sm:$0xf]
        %v2212 = vld [vmem:[%s545 + $0xf4] sm:$0xf]
        %v2213 = vld [vmem:[%s545 + $0xf8] sm:$0xf]
        %v2214 = vld [vmem:[%s545 + $0xfc] sm:$0xf]
        %v2215 = vld [vmem:[%s545 + $0x100] sm:$0xf]
        %v2216 = vld [vmem:[%s545 + $0x104] sm:$0xf]
        %v2217 = vld [vmem:[%s545 + $0x108] sm:$0xf]
        %v2218 = vld [vmem:[%s545 + $0x10c] sm:$0xf]
        %v2219 = vld [vmem:[%s545 + $0x110] sm:$0xf]
        %v2220 = vld [vmem:[%s545 + $0x114] sm:$0xf]
        %v2221 = vld [vmem:[%s545 + $0x118] sm:$0xf]
        %v2222 = vld [vmem:[%s545 + $0x11c] sm:$0xf]
        %v2223 = vld [vmem:[%s545 + $0x120] sm:$0xf]
        %v2224 = vld [vmem:[%s545 + $0x124] sm:$0xf]
        %v2225 = vld [vmem:[%s545 + $0x128] sm:$0xf]
        %v2226 = vld [vmem:[%s545 + $0x12c] sm:$0xf]
        %v2227 = vld [vmem:[%s545 + $0x130] sm:$0xf]
        %v2228 = vld [vmem:[%s545 + $0x134] sm:$0xf]
        %v2229 = vld [vmem:[%s545 + $0x138] sm:$0xf]
        %v2230 = vld [vmem:[%s545 + $0x13c] sm:$0xf]
        %v2231 = vld [vmem:[%s545 + $0x140] sm:$0xf]
        %v2232 = vld [vmem:[%s545 + $0x144] sm:$0xf]
        %v2233 = vld [vmem:[%s545 + $0x148] sm:$0xf]
        %v2234 = vld [vmem:[%s545 + $0x14c] sm:$0xf]
        %v2235 = vld [vmem:[%s545 + $0x150] sm:$0xf]
        %v2236 = vld [vmem:[%s545 + $0x154] sm:$0xf]
        %v2237 = vld [vmem:[%s545 + $0x158] sm:$0xf]
        %v2238 = vld [vmem:[%s545 + $0x15c] sm:$0xf]
        %v2239 = vld [vmem:[%s545 + $0x160] sm:$0xf]
        %v2240 = vld [vmem:[%s545 + $0x164] sm:$0xf]
        %v2241 = vld [vmem:[%s545 + $0x168] sm:$0xf]
        %v2242 = vld [vmem:[%s545 + $0x16c] sm:$0xf]
        %v2243 = vld [vmem:[%s545 + $0x170] sm:$0xf]
        %v2244 = vld [vmem:[%s545 + $0x174] sm:$0xf]
        %v2245 = vld [vmem:[%s545 + $0x178] sm:$0xf]
        %v2246 = vld [vmem:[%s545 + $0x17c] sm:$0xf]
        %v2247 = vld [vmem:[%s545 + $0x180] sm:$0xf]
        %v2248 = vld [vmem:[%s545 + $0x184] sm:$0xf]
        %v2249 = vld [vmem:[%s545 + $0x188] sm:$0xf]
        %v2250 = vld [vmem:[%s545 + $0x18c] sm:$0xf]
        %v2251 = vld [vmem:[%s545 + $0x190] sm:$0xf]
        %v2252 = vld [vmem:[%s545 + $0x194] sm:$0xf]
        %v2253 = vld [vmem:[%s545 + $0x198] sm:$0xf]
        %v2254 = vld [vmem:[%s545 + $0x19c] sm:$0xf]
        %v2255 = vmul.f32 %v1429, %v2151
        %v2256 = vmul.f32 %v1436, %v2152
        %v2257 = vmul.f32 %v1443, %v2153
        %v2258 = vmul.f32 %v1450, %v2154
        %v2259 = vmul.f32 %v1457, %v2155
        %v2260 = vmul.f32 %v1464, %v2156
        %v2261 = vmul.f32 %v1471, %v2157
        %v2262 = vmul.f32 %v1478, %v2158
        %v2263 = vmul.f32 %v1485, %v2159
        %v2264 = vmul.f32 %v1492, %v2160
        %v2265 = vmul.f32 %v1499, %v2161
        %v2266 = vmul.f32 %v1506, %v2162
        %v2267 = vmul.f32 %v1513, %v2163
        %v2268 = vmul.f32 %v1520, %v2164
        %v2269 = vmul.f32 %v1527, %v2165
        %v2270 = vmul.f32 %v1534, %v2166
        %v2271 = vmul.f32 %v1541, %v2167
        %v2272 = vmul.f32 %v1548, %v2168
        %v2273 = vmul.f32 %v1555, %v2169
        %v2274 = vmul.f32 %v1562, %v2170
        %v2275 = vmul.f32 %v1569, %v2171
        %v2276 = vmul.f32 %v1576, %v2172
        %v2277 = vmul.f32 %v1583, %v2173
        %v2278 = vmul.f32 %v1590, %v2174
        %v2279 = vmul.f32 %v1597, %v2175
        %v2280 = vmul.f32 %v1604, %v2176
        %v2281 = vmul.f32 %v1611, %v2177
        %v2282 = vmul.f32 %v1618, %v2178
        %v2283 = vmul.f32 %v1625, %v2179
        %v2284 = vmul.f32 %v1632, %v2180
        %v2285 = vmul.f32 %v1639, %v2181
        %v2286 = vmul.f32 %v1646, %v2182
        %v2287 = vmul.f32 %v1653, %v2183
        %v2288 = vmul.f32 %v1660, %v2184
        %v2289 = vmul.f32 %v1667, %v2185
        %v2290 = vmul.f32 %v1674, %v2186
        %v2291 = vmul.f32 %v1681, %v2187
        %v2292 = vmul.f32 %v1688, %v2188
        %v2293 = vmul.f32 %v1695, %v2189
        %v2294 = vmul.f32 %v1702, %v2190
        %v2295 = vmul.f32 %v1709, %v2191
        %v2296 = vmul.f32 %v1716, %v2192
        %v2297 = vmul.f32 %v1723, %v2193
        %v2298 = vmul.f32 %v1730, %v2194
        %v2299 = vmul.f32 %v1737, %v2195
        %v2300 = vmul.f32 %v1744, %v2196
        %v2301 = vmul.f32 %v1751, %v2197
        %v2302 = vmul.f32 %v1758, %v2198
        %v2303 = vmul.f32 %v1765, %v2199
        %v2304 = vmul.f32 %v1772, %v2200
        %v2305 = vmul.f32 %v1779, %v2201
        %v2306 = vmul.f32 %v1786, %v2202
        %v2307 = vmul.f32 %v1793, %v2203
        %v2308 = vmul.f32 %v1800, %v2204
        %v2309 = vmul.f32 %v1807, %v2205
        %v2310 = vmul.f32 %v1814, %v2206
        %v2311 = vmul.f32 %v1821, %v2207
        %v2312 = vmul.f32 %v1828, %v2208
        %v2313 = vmul.f32 %v1835, %v2209
        %v2314 = vmul.f32 %v1842, %v2210
        %v2315 = vmul.f32 %v1849, %v2211
        %v2316 = vmul.f32 %v1856, %v2212
        %v2317 = vmul.f32 %v1863, %v2213
        %v2318 = vmul.f32 %v1870, %v2214
        %v2319 = vmul.f32 %v1877, %v2215
        %v2320 = vmul.f32 %v1884, %v2216
        %v2321 = vmul.f32 %v1891, %v2217
        %v2322 = vmul.f32 %v1898, %v2218
        %v2323 = vmul.f32 %v1905, %v2219
        %v2324 = vmul.f32 %v1912, %v2220
        %v2325 = vmul.f32 %v1919, %v2221
        %v2326 = vmul.f32 %v1926, %v2222
        %v2327 = vmul.f32 %v1933, %v2223
        %v2328 = vmul.f32 %v1940, %v2224
        %v2329 = vmul.f32 %v1947, %v2225
        %v2330 = vmul.f32 %v1954, %v2226
        %v2331 = vmul.f32 %v1961, %v2227
        %v2332 = vmul.f32 %v1968, %v2228
        %v2333 = vmul.f32 %v1975, %v2229
        %v2334 = vmul.f32 %v1982, %v2230
        %v2335 = vmul.f32 %v1989, %v2231
        %v2336 = vmul.f32 %v1996, %v2232
        %v2337 = vmul.f32 %v2003, %v2233
        %v2338 = vmul.f32 %v2010, %v2234
        %v2339 = vmul.f32 %v2017, %v2235
        %v2340 = vmul.f32 %v2024, %v2236
        %v2341 = vmul.f32 %v2031, %v2237
        %v2342 = vmul.f32 %v2038, %v2238
        %v2343 = vmul.f32 %v2045, %v2239
        %v2344 = vmul.f32 %v2052, %v2240
        %v2345 = vmul.f32 %v2059, %v2241
        %v2346 = vmul.f32 %v2066, %v2242
        %v2347 = vmul.f32 %v2073, %v2243
        %v2348 = vmul.f32 %v2080, %v2244
        %v2349 = vmul.f32 %v2087, %v2245
        %v2350 = vmul.f32 %v2094, %v2246
        %v2351 = vmul.f32 %v2101, %v2247
        %v2352 = vmul.f32 %v2108, %v2248
        %v2353 = vmul.f32 %v2115, %v2249
        %v2354 = vmul.f32 %v2122, %v2250
        %v2355 = vmul.f32 %v2129, %v2251
        %v2356 = vmul.f32 %v2136, %v2252
        %v2357 = vmul.f32 %v2143, %v2253
        %v2358 = vmul.f32 %v2150, %v2254
        %vm2359 = vcmask 191488
        %v2360 = vsel %vm2359, %v2255, 0.0
        %v2361 = vrot.slane %v2360, 4
        %v2362 = vadd.f32 %v2360, %v2361
        %v2363 = vrot.slane %v2362, 2
        %v2364 = vadd.f32 %v2362, %v2363
        %v2365 = vrot.slane %v2364, 1
        %v2366 = vadd.f32 %v2364, %v2365
        %v2367 = vsel %vm2359, %v2256, 0.0
        %v2368 = vrot.slane %v2367, 4
        %v2369 = vadd.f32 %v2367, %v2368
        %v2370 = vrot.slane %v2369, 2
        %v2371 = vadd.f32 %v2369, %v2370
        %v2372 = vrot.slane %v2371, 1
        %v2373 = vadd.f32 %v2371, %v2372
        %v2374 = vsel %vm2359, %v2257, 0.0
        %v2375 = vrot.slane %v2374, 4
        %v2376 = vadd.f32 %v2374, %v2375
        %v2377 = vrot.slane %v2376, 2
        %v2378 = vadd.f32 %v2376, %v2377
        %v2379 = vrot.slane %v2378, 1
        %v2380 = vadd.f32 %v2378, %v2379
        %v2381 = vsel %vm2359, %v2258, 0.0
        %v2382 = vrot.slane %v2381, 4
        %v2383 = vadd.f32 %v2381, %v2382
        %v2384 = vrot.slane %v2383, 2
        %v2385 = vadd.f32 %v2383, %v2384
        %v2386 = vrot.slane %v2385, 1
        %v2387 = vadd.f32 %v2385, %v2386
        %v2388 = vsel %vm2359, %v2259, 0.0
        %v2389 = vrot.slane %v2388, 4
        %v2390 = vadd.f32 %v2388, %v2389
        %v2391 = vrot.slane %v2390, 2
        %v2392 = vadd.f32 %v2390, %v2391
        %v2393 = vrot.slane %v2392, 1
        %v2394 = vadd.f32 %v2392, %v2393
        %v2395 = vsel %vm2359, %v2260, 0.0
        %v2396 = vrot.slane %v2395, 4
        %v2397 = vadd.f32 %v2395, %v2396
        %v2398 = vrot.slane %v2397, 2
        %v2399 = vadd.f32 %v2397, %v2398
        %v2400 = vrot.slane %v2399, 1
        %v2401 = vadd.f32 %v2399, %v2400
        %v2402 = vsel %vm2359, %v2261, 0.0
        %v2403 = vrot.slane %v2402, 4
        %v2404 = vadd.f32 %v2402, %v2403
        %v2405 = vrot.slane %v2404, 2
        %v2406 = vadd.f32 %v2404, %v2405
        %v2407 = vrot.slane %v2406, 1
        %v2408 = vadd.f32 %v2406, %v2407
        %v2409 = vsel %vm2359, %v2262, 0.0
        %v2410 = vrot.slane %v2409, 4
        %v2411 = vadd.f32 %v2409, %v2410
        %v2412 = vrot.slane %v2411, 2
        %v2413 = vadd.f32 %v2411, %v2412
        %v2414 = vrot.slane %v2413, 1
        %v2415 = vadd.f32 %v2413, %v2414
        %v2416 = vsel %vm2359, %v2263, 0.0
        %v2417 = vrot.slane %v2416, 4
        %v2418 = vadd.f32 %v2416, %v2417
        %v2419 = vrot.slane %v2418, 2
        %v2420 = vadd.f32 %v2418, %v2419
        %v2421 = vrot.slane %v2420, 1
        %v2422 = vadd.f32 %v2420, %v2421
        %v2423 = vsel %vm2359, %v2264, 0.0
        %v2424 = vrot.slane %v2423, 4
        %v2425 = vadd.f32 %v2423, %v2424
        %v2426 = vrot.slane %v2425, 2
        %v2427 = vadd.f32 %v2425, %v2426
        %v2428 = vrot.slane %v2427, 1
        %v2429 = vadd.f32 %v2427, %v2428
        %v2430 = vsel %vm2359, %v2265, 0.0
        %v2431 = vrot.slane %v2430, 4
        %v2432 = vadd.f32 %v2430, %v2431
        %v2433 = vrot.slane %v2432, 2
        %v2434 = vadd.f32 %v2432, %v2433
        %v2435 = vrot.slane %v2434, 1
        %v2436 = vadd.f32 %v2434, %v2435
        %v2437 = vsel %vm2359, %v2266, 0.0
        %v2438 = vrot.slane %v2437, 4
        %v2439 = vadd.f32 %v2437, %v2438
        %v2440 = vrot.slane %v2439, 2
        %v2441 = vadd.f32 %v2439, %v2440
        %v2442 = vrot.slane %v2441, 1
        %v2443 = vadd.f32 %v2441, %v2442
        %v2444 = vsel %vm2359, %v2267, 0.0
        %v2445 = vrot.slane %v2444, 4
        %v2446 = vadd.f32 %v2444, %v2445
        %v2447 = vrot.slane %v2446, 2
        %v2448 = vadd.f32 %v2446, %v2447
        %v2449 = vrot.slane %v2448, 1
        %v2450 = vadd.f32 %v2448, %v2449
        %v2451 = vsel %vm2359, %v2268, 0.0
        %v2452 = vrot.slane %v2451, 4
        %v2453 = vadd.f32 %v2451, %v2452
        %v2454 = vrot.slane %v2453, 2
        %v2455 = vadd.f32 %v2453, %v2454
        %v2456 = vrot.slane %v2455, 1
        %v2457 = vadd.f32 %v2455, %v2456
        %v2458 = vsel %vm2359, %v2269, 0.0
        %v2459 = vrot.slane %v2458, 4
        %v2460 = vadd.f32 %v2458, %v2459
        %v2461 = vrot.slane %v2460, 2
        %v2462 = vadd.f32 %v2460, %v2461
        %v2463 = vrot.slane %v2462, 1
        %v2464 = vadd.f32 %v2462, %v2463
        %v2465 = vsel %vm2359, %v2270, 0.0
        %v2466 = vrot.slane %v2465, 4
        %v2467 = vadd.f32 %v2465, %v2466
        %v2468 = vrot.slane %v2467, 2
        %v2469 = vadd.f32 %v2467, %v2468
        %v2470 = vrot.slane %v2469, 1
        %v2471 = vadd.f32 %v2469, %v2470
        %v2472 = vsel %vm2359, %v2271, 0.0
        %v2473 = vrot.slane %v2472, 4
        %v2474 = vadd.f32 %v2472, %v2473
        %v2475 = vrot.slane %v2474, 2
        %v2476 = vadd.f32 %v2474, %v2475
        %v2477 = vrot.slane %v2476, 1
        %v2478 = vadd.f32 %v2476, %v2477
        %v2479 = vsel %vm2359, %v2272, 0.0
        %v2480 = vrot.slane %v2479, 4
        %v2481 = vadd.f32 %v2479, %v2480
        %v2482 = vrot.slane %v2481, 2
        %v2483 = vadd.f32 %v2481, %v2482
        %v2484 = vrot.slane %v2483, 1
        %v2485 = vadd.f32 %v2483, %v2484
        %v2486 = vsel %vm2359, %v2273, 0.0
        %v2487 = vrot.slane %v2486, 4
        %v2488 = vadd.f32 %v2486, %v2487
        %v2489 = vrot.slane %v2488, 2
        %v2490 = vadd.f32 %v2488, %v2489
        %v2491 = vrot.slane %v2490, 1
        %v2492 = vadd.f32 %v2490, %v2491
        %v2493 = vsel %vm2359, %v2274, 0.0
        %v2494 = vrot.slane %v2493, 4
        %v2495 = vadd.f32 %v2493, %v2494
        %v2496 = vrot.slane %v2495, 2
        %v2497 = vadd.f32 %v2495, %v2496
        %v2498 = vrot.slane %v2497, 1
        %v2499 = vadd.f32 %v2497, %v2498
        %v2500 = vsel %vm2359, %v2275, 0.0
        %v2501 = vrot.slane %v2500, 4
        %v2502 = vadd.f32 %v2500, %v2501
        %v2503 = vrot.slane %v2502, 2
        %v2504 = vadd.f32 %v2502, %v2503
        %v2505 = vrot.slane %v2504, 1
        %v2506 = vadd.f32 %v2504, %v2505
        %v2507 = vsel %vm2359, %v2276, 0.0
        %v2508 = vrot.slane %v2507, 4
        %v2509 = vadd.f32 %v2507, %v2508
        %v2510 = vrot.slane %v2509, 2
        %v2511 = vadd.f32 %v2509, %v2510
        %v2512 = vrot.slane %v2511, 1
        %v2513 = vadd.f32 %v2511, %v2512
        %v2514 = vsel %vm2359, %v2277, 0.0
        %v2515 = vrot.slane %v2514, 4
        %v2516 = vadd.f32 %v2514, %v2515
        %v2517 = vrot.slane %v2516, 2
        %v2518 = vadd.f32 %v2516, %v2517
        %v2519 = vrot.slane %v2518, 1
        %v2520 = vadd.f32 %v2518, %v2519
        %v2521 = vsel %vm2359, %v2278, 0.0
        %v2522 = vrot.slane %v2521, 4
        %v2523 = vadd.f32 %v2521, %v2522
        %v2524 = vrot.slane %v2523, 2
        %v2525 = vadd.f32 %v2523, %v2524
        %v2526 = vrot.slane %v2525, 1
        %v2527 = vadd.f32 %v2525, %v2526
        %v2528 = vsel %vm2359, %v2279, 0.0
        %v2529 = vrot.slane %v2528, 4
        %v2530 = vadd.f32 %v2528, %v2529
        %v2531 = vrot.slane %v2530, 2
        %v2532 = vadd.f32 %v2530, %v2531
        %v2533 = vrot.slane %v2532, 1
        %v2534 = vadd.f32 %v2532, %v2533
        %v2535 = vsel %vm2359, %v2280, 0.0
        %v2536 = vrot.slane %v2535, 4
        %v2537 = vadd.f32 %v2535, %v2536
        %v2538 = vrot.slane %v2537, 2
        %v2539 = vadd.f32 %v2537, %v2538
        %v2540 = vrot.slane %v2539, 1
        %v2541 = vadd.f32 %v2539, %v2540
        %v2542 = vsel %vm2359, %v2281, 0.0
        %v2543 = vrot.slane %v2542, 4
        %v2544 = vadd.f32 %v2542, %v2543
        %v2545 = vrot.slane %v2544, 2
        %v2546 = vadd.f32 %v2544, %v2545
        %v2547 = vrot.slane %v2546, 1
        %v2548 = vadd.f32 %v2546, %v2547
        %v2549 = vsel %vm2359, %v2282, 0.0
        %v2550 = vrot.slane %v2549, 4
        %v2551 = vadd.f32 %v2549, %v2550
        %v2552 = vrot.slane %v2551, 2
        %v2553 = vadd.f32 %v2551, %v2552
        %v2554 = vrot.slane %v2553, 1
        %v2555 = vadd.f32 %v2553, %v2554
        %v2556 = vsel %vm2359, %v2283, 0.0
        %v2557 = vrot.slane %v2556, 4
        %v2558 = vadd.f32 %v2556, %v2557
        %v2559 = vrot.slane %v2558, 2
        %v2560 = vadd.f32 %v2558, %v2559
        %v2561 = vrot.slane %v2560, 1
        %v2562 = vadd.f32 %v2560, %v2561
        %v2563 = vsel %vm2359, %v2284, 0.0
        %v2564 = vrot.slane %v2563, 4
        %v2565 = vadd.f32 %v2563, %v2564
        %v2566 = vrot.slane %v2565, 2
        %v2567 = vadd.f32 %v2565, %v2566
        %v2568 = vrot.slane %v2567, 1
        %v2569 = vadd.f32 %v2567, %v2568
        %v2570 = vsel %vm2359, %v2285, 0.0
        %v2571 = vrot.slane %v2570, 4
        %v2572 = vadd.f32 %v2570, %v2571
        %v2573 = vrot.slane %v2572, 2
        %v2574 = vadd.f32 %v2572, %v2573
        %v2575 = vrot.slane %v2574, 1
        %v2576 = vadd.f32 %v2574, %v2575
        %v2577 = vsel %vm2359, %v2286, 0.0
        %v2578 = vrot.slane %v2577, 4
        %v2579 = vadd.f32 %v2577, %v2578
        %v2580 = vrot.slane %v2579, 2
        %v2581 = vadd.f32 %v2579, %v2580
        %v2582 = vrot.slane %v2581, 1
        %v2583 = vadd.f32 %v2581, %v2582
        %v2584 = vsel %vm2359, %v2287, 0.0
        %v2585 = vrot.slane %v2584, 4
        %v2586 = vadd.f32 %v2584, %v2585
        %v2587 = vrot.slane %v2586, 2
        %v2588 = vadd.f32 %v2586, %v2587
        %v2589 = vrot.slane %v2588, 1
        %v2590 = vadd.f32 %v2588, %v2589
        %v2591 = vsel %vm2359, %v2288, 0.0
        %v2592 = vrot.slane %v2591, 4
        %v2593 = vadd.f32 %v2591, %v2592
        %v2594 = vrot.slane %v2593, 2
        %v2595 = vadd.f32 %v2593, %v2594
        %v2596 = vrot.slane %v2595, 1
        %v2597 = vadd.f32 %v2595, %v2596
        %v2598 = vsel %vm2359, %v2289, 0.0
        %v2599 = vrot.slane %v2598, 4
        %v2600 = vadd.f32 %v2598, %v2599
        %v2601 = vrot.slane %v2600, 2
        %v2602 = vadd.f32 %v2600, %v2601
        %v2603 = vrot.slane %v2602, 1
        %v2604 = vadd.f32 %v2602, %v2603
        %v2605 = vsel %vm2359, %v2290, 0.0
        %v2606 = vrot.slane %v2605, 4
        %v2607 = vadd.f32 %v2605, %v2606
        %v2608 = vrot.slane %v2607, 2
        %v2609 = vadd.f32 %v2607, %v2608
        %v2610 = vrot.slane %v2609, 1
        %v2611 = vadd.f32 %v2609, %v2610
        %v2612 = vsel %vm2359, %v2291, 0.0
        %v2613 = vrot.slane %v2612, 4
        %v2614 = vadd.f32 %v2612, %v2613
        %v2615 = vrot.slane %v2614, 2
        %v2616 = vadd.f32 %v2614, %v2615
        %v2617 = vrot.slane %v2616, 1
        %v2618 = vadd.f32 %v2616, %v2617
        %v2619 = vsel %vm2359, %v2292, 0.0
        %v2620 = vrot.slane %v2619, 4
        %v2621 = vadd.f32 %v2619, %v2620
        %v2622 = vrot.slane %v2621, 2
        %v2623 = vadd.f32 %v2621, %v2622
        %v2624 = vrot.slane %v2623, 1
        %v2625 = vadd.f32 %v2623, %v2624
        %v2626 = vsel %vm2359, %v2293, 0.0
        %v2627 = vrot.slane %v2626, 4
        %v2628 = vadd.f32 %v2626, %v2627
        %v2629 = vrot.slane %v2628, 2
        %v2630 = vadd.f32 %v2628, %v2629
        %v2631 = vrot.slane %v2630, 1
        %v2632 = vadd.f32 %v2630, %v2631
        %v2633 = vsel %vm2359, %v2294, 0.0
        %v2634 = vrot.slane %v2633, 4
        %v2635 = vadd.f32 %v2633, %v2634
        %v2636 = vrot.slane %v2635, 2
        %v2637 = vadd.f32 %v2635, %v2636
        %v2638 = vrot.slane %v2637, 1
        %v2639 = vadd.f32 %v2637, %v2638
        %v2640 = vsel %vm2359, %v2295, 0.0
        %v2641 = vrot.slane %v2640, 4
        %v2642 = vadd.f32 %v2640, %v2641
        %v2643 = vrot.slane %v2642, 2
        %v2644 = vadd.f32 %v2642, %v2643
        %v2645 = vrot.slane %v2644, 1
        %v2646 = vadd.f32 %v2644, %v2645
        %v2647 = vsel %vm2359, %v2296, 0.0
        %v2648 = vrot.slane %v2647, 4
        %v2649 = vadd.f32 %v2647, %v2648
        %v2650 = vrot.slane %v2649, 2
        %v2651 = vadd.f32 %v2649, %v2650
        %v2652 = vrot.slane %v2651, 1
        %v2653 = vadd.f32 %v2651, %v2652
        %v2654 = vsel %vm2359, %v2297, 0.0
        %v2655 = vrot.slane %v2654, 4
        %v2656 = vadd.f32 %v2654, %v2655
        %v2657 = vrot.slane %v2656, 2
        %v2658 = vadd.f32 %v2656, %v2657
        %v2659 = vrot.slane %v2658, 1
        %v2660 = vadd.f32 %v2658, %v2659
        %v2661 = vsel %vm2359, %v2298, 0.0
        %v2662 = vrot.slane %v2661, 4
        %v2663 = vadd.f32 %v2661, %v2662
        %v2664 = vrot.slane %v2663, 2
        %v2665 = vadd.f32 %v2663, %v2664
        %v2666 = vrot.slane %v2665, 1
        %v2667 = vadd.f32 %v2665, %v2666
        %v2668 = vsel %vm2359, %v2299, 0.0
        %v2669 = vrot.slane %v2668, 4
        %v2670 = vadd.f32 %v2668, %v2669
        %v2671 = vrot.slane %v2670, 2
        %v2672 = vadd.f32 %v2670, %v2671
        %v2673 = vrot.slane %v2672, 1
        %v2674 = vadd.f32 %v2672, %v2673
        %v2675 = vsel %vm2359, %v2300, 0.0
        %v2676 = vrot.slane %v2675, 4
        %v2677 = vadd.f32 %v2675, %v2676
        %v2678 = vrot.slane %v2677, 2
        %v2679 = vadd.f32 %v2677, %v2678
        %v2680 = vrot.slane %v2679, 1
        %v2681 = vadd.f32 %v2679, %v2680
        %v2682 = vsel %vm2359, %v2301, 0.0
        %v2683 = vrot.slane %v2682, 4
        %v2684 = vadd.f32 %v2682, %v2683
        %v2685 = vrot.slane %v2684, 2
        %v2686 = vadd.f32 %v2684, %v2685
        %v2687 = vrot.slane %v2686, 1
        %v2688 = vadd.f32 %v2686, %v2687
        %v2689 = vsel %vm2359, %v2302, 0.0
        %v2690 = vrot.slane %v2689, 4
        %v2691 = vadd.f32 %v2689, %v2690
        %v2692 = vrot.slane %v2691, 2
        %v2693 = vadd.f32 %v2691, %v2692
        %v2694 = vrot.slane %v2693, 1
        %v2695 = vadd.f32 %v2693, %v2694
        %v2696 = vsel %vm2359, %v2303, 0.0
        %v2697 = vrot.slane %v2696, 4
        %v2698 = vadd.f32 %v2696, %v2697
        %v2699 = vrot.slane %v2698, 2
        %v2700 = vadd.f32 %v2698, %v2699
        %v2701 = vrot.slane %v2700, 1
        %v2702 = vadd.f32 %v2700, %v2701
        %v2703 = vsel %vm2359, %v2304, 0.0
        %v2704 = vrot.slane %v2703, 4
        %v2705 = vadd.f32 %v2703, %v2704
        %v2706 = vrot.slane %v2705, 2
        %v2707 = vadd.f32 %v2705, %v2706
        %v2708 = vrot.slane %v2707, 1
        %v2709 = vadd.f32 %v2707, %v2708
        %v2710 = vsel %vm2359, %v2305, 0.0
        %v2711 = vrot.slane %v2710, 4
        %v2712 = vadd.f32 %v2710, %v2711
        %v2713 = vrot.slane %v2712, 2
        %v2714 = vadd.f32 %v2712, %v2713
        %v2715 = vrot.slane %v2714, 1
        %v2716 = vadd.f32 %v2714, %v2715
        %v2717 = vsel %vm2359, %v2306, 0.0
        %v2718 = vrot.slane %v2717, 4
        %v2719 = vadd.f32 %v2717, %v2718
        %v2720 = vrot.slane %v2719, 2
        %v2721 = vadd.f32 %v2719, %v2720
        %v2722 = vrot.slane %v2721, 1
        %v2723 = vadd.f32 %v2721, %v2722
        %v2724 = vsel %vm2359, %v2307, 0.0
        %v2725 = vrot.slane %v2724, 4
        %v2726 = vadd.f32 %v2724, %v2725
        %v2727 = vrot.slane %v2726, 2
        %v2728 = vadd.f32 %v2726, %v2727
        %v2729 = vrot.slane %v2728, 1
        %v2730 = vadd.f32 %v2728, %v2729
        %v2731 = vsel %vm2359, %v2308, 0.0
        %v2732 = vrot.slane %v2731, 4
        %v2733 = vadd.f32 %v2731, %v2732
        %v2734 = vrot.slane %v2733, 2
        %v2735 = vadd.f32 %v2733, %v2734
        %v2736 = vrot.slane %v2735, 1
        %v2737 = vadd.f32 %v2735, %v2736
        %v2738 = vsel %vm2359, %v2309, 0.0
        %v2739 = vrot.slane %v2738, 4
        %v2740 = vadd.f32 %v2738, %v2739
        %v2741 = vrot.slane %v2740, 2
        %v2742 = vadd.f32 %v2740, %v2741
        %v2743 = vrot.slane %v2742, 1
        %v2744 = vadd.f32 %v2742, %v2743
        %v2745 = vsel %vm2359, %v2310, 0.0
        %v2746 = vrot.slane %v2745, 4
        %v2747 = vadd.f32 %v2745, %v2746
        %v2748 = vrot.slane %v2747, 2
        %v2749 = vadd.f32 %v2747, %v2748
        %v2750 = vrot.slane %v2749, 1
        %v2751 = vadd.f32 %v2749, %v2750
        %v2752 = vsel %vm2359, %v2311, 0.0
        %v2753 = vrot.slane %v2752, 4
        %v2754 = vadd.f32 %v2752, %v2753
        %v2755 = vrot.slane %v2754, 2
        %v2756 = vadd.f32 %v2754, %v2755
        %v2757 = vrot.slane %v2756, 1
        %v2758 = vadd.f32 %v2756, %v2757
        %v2759 = vsel %vm2359, %v2312, 0.0
        %v2760 = vrot.slane %v2759, 4
        %v2761 = vadd.f32 %v2759, %v2760
        %v2762 = vrot.slane %v2761, 2
        %v2763 = vadd.f32 %v2761, %v2762
        %v2764 = vrot.slane %v2763, 1
        %v2765 = vadd.f32 %v2763, %v2764
        %v2766 = vsel %vm2359, %v2313, 0.0
        %v2767 = vrot.slane %v2766, 4
        %v2768 = vadd.f32 %v2766, %v2767
        %v2769 = vrot.slane %v2768, 2
        %v2770 = vadd.f32 %v2768, %v2769
        %v2771 = vrot.slane %v2770, 1
        %v2772 = vadd.f32 %v2770, %v2771
        %v2773 = vsel %vm2359, %v2314, 0.0
        %v2774 = vrot.slane %v2773, 4
        %v2775 = vadd.f32 %v2773, %v2774
        %v2776 = vrot.slane %v2775, 2
        %v2777 = vadd.f32 %v2775, %v2776
        %v2778 = vrot.slane %v2777, 1
        %v2779 = vadd.f32 %v2777, %v2778
        %v2780 = vsel %vm2359, %v2315, 0.0
        %v2781 = vrot.slane %v2780, 4
        %v2782 = vadd.f32 %v2780, %v2781
        %v2783 = vrot.slane %v2782, 2
        %v2784 = vadd.f32 %v2782, %v2783
        %v2785 = vrot.slane %v2784, 1
        %v2786 = vadd.f32 %v2784, %v2785
        %v2787 = vsel %vm2359, %v2316, 0.0
        %v2788 = vrot.slane %v2787, 4
        %v2789 = vadd.f32 %v2787, %v2788
        %v2790 = vrot.slane %v2789, 2
        %v2791 = vadd.f32 %v2789, %v2790
        %v2792 = vrot.slane %v2791, 1
        %v2793 = vadd.f32 %v2791, %v2792
        %v2794 = vsel %vm2359, %v2317, 0.0
        %v2795 = vrot.slane %v2794, 4
        %v2796 = vadd.f32 %v2794, %v2795
        %v2797 = vrot.slane %v2796, 2
        %v2798 = vadd.f32 %v2796, %v2797
        %v2799 = vrot.slane %v2798, 1
        %v2800 = vadd.f32 %v2798, %v2799
        %v2801 = vsel %vm2359, %v2318, 0.0
        %v2802 = vrot.slane %v2801, 4
        %v2803 = vadd.f32 %v2801, %v2802
        %v2804 = vrot.slane %v2803, 2
        %v2805 = vadd.f32 %v2803, %v2804
        %v2806 = vrot.slane %v2805, 1
        %v2807 = vadd.f32 %v2805, %v2806
        %v2808 = vsel %vm2359, %v2319, 0.0
        %v2809 = vrot.slane %v2808, 4
        %v2810 = vadd.f32 %v2808, %v2809
        %v2811 = vrot.slane %v2810, 2
        %v2812 = vadd.f32 %v2810, %v2811
        %v2813 = vrot.slane %v2812, 1
        %v2814 = vadd.f32 %v2812, %v2813
        %v2815 = vsel %vm2359, %v2320, 0.0
        %v2816 = vrot.slane %v2815, 4
        %v2817 = vadd.f32 %v2815, %v2816
        %v2818 = vrot.slane %v2817, 2
        %v2819 = vadd.f32 %v2817, %v2818
        %v2820 = vrot.slane %v2819, 1
        %v2821 = vadd.f32 %v2819, %v2820
        %v2822 = vsel %vm2359, %v2321, 0.0
        %v2823 = vrot.slane %v2822, 4
        %v2824 = vadd.f32 %v2822, %v2823
        %v2825 = vrot.slane %v2824, 2
        %v2826 = vadd.f32 %v2824, %v2825
        %v2827 = vrot.slane %v2826, 1
        %v2828 = vadd.f32 %v2826, %v2827
        %v2829 = vsel %vm2359, %v2322, 0.0
        %v2830 = vrot.slane %v2829, 4
        %v2831 = vadd.f32 %v2829, %v2830
        %v2832 = vrot.slane %v2831, 2
        %v2833 = vadd.f32 %v2831, %v2832
        %v2834 = vrot.slane %v2833, 1
        %v2835 = vadd.f32 %v2833, %v2834
        %v2836 = vsel %vm2359, %v2323, 0.0
        %v2837 = vrot.slane %v2836, 4
        %v2838 = vadd.f32 %v2836, %v2837
        %v2839 = vrot.slane %v2838, 2
        %v2840 = vadd.f32 %v2838, %v2839
        %v2841 = vrot.slane %v2840, 1
        %v2842 = vadd.f32 %v2840, %v2841
        %v2843 = vsel %vm2359, %v2324, 0.0
        %v2844 = vrot.slane %v2843, 4
        %v2845 = vadd.f32 %v2843, %v2844
        %v2846 = vrot.slane %v2845, 2
        %v2847 = vadd.f32 %v2845, %v2846
        %v2848 = vrot.slane %v2847, 1
        %v2849 = vadd.f32 %v2847, %v2848
        %v2850 = vsel %vm2359, %v2325, 0.0
        %v2851 = vrot.slane %v2850, 4
        %v2852 = vadd.f32 %v2850, %v2851
        %v2853 = vrot.slane %v2852, 2
        %v2854 = vadd.f32 %v2852, %v2853
        %v2855 = vrot.slane %v2854, 1
        %v2856 = vadd.f32 %v2854, %v2855
        %v2857 = vsel %vm2359, %v2326, 0.0
        %v2858 = vrot.slane %v2857, 4
        %v2859 = vadd.f32 %v2857, %v2858
        %v2860 = vrot.slane %v2859, 2
        %v2861 = vadd.f32 %v2859, %v2860
        %v2862 = vrot.slane %v2861, 1
        %v2863 = vadd.f32 %v2861, %v2862
        %v2864 = vsel %vm2359, %v2327, 0.0
        %v2865 = vrot.slane %v2864, 4
        %v2866 = vadd.f32 %v2864, %v2865
        %v2867 = vrot.slane %v2866, 2
        %v2868 = vadd.f32 %v2866, %v2867
        %v2869 = vrot.slane %v2868, 1
        %v2870 = vadd.f32 %v2868, %v2869
        %v2871 = vsel %vm2359, %v2328, 0.0
        %v2872 = vrot.slane %v2871, 4
        %v2873 = vadd.f32 %v2871, %v2872
        %v2874 = vrot.slane %v2873, 2
        %v2875 = vadd.f32 %v2873, %v2874
        %v2876 = vrot.slane %v2875, 1
        %v2877 = vadd.f32 %v2875, %v2876
        %v2878 = vsel %vm2359, %v2329, 0.0
        %v2879 = vrot.slane %v2878, 4
        %v2880 = vadd.f32 %v2878, %v2879
        %v2881 = vrot.slane %v2880, 2
        %v2882 = vadd.f32 %v2880, %v2881
        %v2883 = vrot.slane %v2882, 1
        %v2884 = vadd.f32 %v2882, %v2883
        %v2885 = vsel %vm2359, %v2330, 0.0
        %v2886 = vrot.slane %v2885, 4
        %v2887 = vadd.f32 %v2885, %v2886
        %v2888 = vrot.slane %v2887, 2
        %v2889 = vadd.f32 %v2887, %v2888
        %v2890 = vrot.slane %v2889, 1
        %v2891 = vadd.f32 %v2889, %v2890
        %v2892 = vsel %vm2359, %v2331, 0.0
        %v2893 = vrot.slane %v2892, 4
        %v2894 = vadd.f32 %v2892, %v2893
        %v2895 = vrot.slane %v2894, 2
        %v2896 = vadd.f32 %v2894, %v2895
        %v2897 = vrot.slane %v2896, 1
        %v2898 = vadd.f32 %v2896, %v2897
        %v2899 = vsel %vm2359, %v2332, 0.0
        %v2900 = vrot.slane %v2899, 4
        %v2901 = vadd.f32 %v2899, %v2900
        %v2902 = vrot.slane %v2901, 2
        %v2903 = vadd.f32 %v2901, %v2902
        %v2904 = vrot.slane %v2903, 1
        %v2905 = vadd.f32 %v2903, %v2904
        %v2906 = vsel %vm2359, %v2333, 0.0
        %v2907 = vrot.slane %v2906, 4
        %v2908 = vadd.f32 %v2906, %v2907
        %v2909 = vrot.slane %v2908, 2
        %v2910 = vadd.f32 %v2908, %v2909
        %v2911 = vrot.slane %v2910, 1
        %v2912 = vadd.f32 %v2910, %v2911
        %v2913 = vsel %vm2359, %v2334, 0.0
        %v2914 = vrot.slane %v2913, 4
        %v2915 = vadd.f32 %v2913, %v2914
        %v2916 = vrot.slane %v2915, 2
        %v2917 = vadd.f32 %v2915, %v2916
        %v2918 = vrot.slane %v2917, 1
        %v2919 = vadd.f32 %v2917, %v2918
        %v2920 = vsel %vm2359, %v2335, 0.0
        %v2921 = vrot.slane %v2920, 4
        %v2922 = vadd.f32 %v2920, %v2921
        %v2923 = vrot.slane %v2922, 2
        %v2924 = vadd.f32 %v2922, %v2923
        %v2925 = vrot.slane %v2924, 1
        %v2926 = vadd.f32 %v2924, %v2925
        %v2927 = vsel %vm2359, %v2336, 0.0
        %v2928 = vrot.slane %v2927, 4
        %v2929 = vadd.f32 %v2927, %v2928
        %v2930 = vrot.slane %v2929, 2
        %v2931 = vadd.f32 %v2929, %v2930
        %v2932 = vrot.slane %v2931, 1
        %v2933 = vadd.f32 %v2931, %v2932
        %v2934 = vsel %vm2359, %v2337, 0.0
        %v2935 = vrot.slane %v2934, 4
        %v2936 = vadd.f32 %v2934, %v2935
        %v2937 = vrot.slane %v2936, 2
        %v2938 = vadd.f32 %v2936, %v2937
        %v2939 = vrot.slane %v2938, 1
        %v2940 = vadd.f32 %v2938, %v2939
        %v2941 = vsel %vm2359, %v2338, 0.0
        %v2942 = vrot.slane %v2941, 4
        %v2943 = vadd.f32 %v2941, %v2942
        %v2944 = vrot.slane %v2943, 2
        %v2945 = vadd.f32 %v2943, %v2944
        %v2946 = vrot.slane %v2945, 1
        %v2947 = vadd.f32 %v2945, %v2946
        %v2948 = vsel %vm2359, %v2339, 0.0
        %v2949 = vrot.slane %v2948, 4
        %v2950 = vadd.f32 %v2948, %v2949
        %v2951 = vrot.slane %v2950, 2
        %v2952 = vadd.f32 %v2950, %v2951
        %v2953 = vrot.slane %v2952, 1
        %v2954 = vadd.f32 %v2952, %v2953
        %v2955 = vsel %vm2359, %v2340, 0.0
        %v2956 = vrot.slane %v2955, 4
        %v2957 = vadd.f32 %v2955, %v2956
        %v2958 = vrot.slane %v2957, 2
        %v2959 = vadd.f32 %v2957, %v2958
        %v2960 = vrot.slane %v2959, 1
        %v2961 = vadd.f32 %v2959, %v2960
        %v2962 = vsel %vm2359, %v2341, 0.0
        %v2963 = vrot.slane %v2962, 4
        %v2964 = vadd.f32 %v2962, %v2963
        %v2965 = vrot.slane %v2964, 2
        %v2966 = vadd.f32 %v2964, %v2965
        %v2967 = vrot.slane %v2966, 1
        %v2968 = vadd.f32 %v2966, %v2967
        %v2969 = vsel %vm2359, %v2342, 0.0
        %v2970 = vrot.slane %v2969, 4
        %v2971 = vadd.f32 %v2969, %v2970
        %v2972 = vrot.slane %v2971, 2
        %v2973 = vadd.f32 %v2971, %v2972
        %v2974 = vrot.slane %v2973, 1
        %v2975 = vadd.f32 %v2973, %v2974
        %v2976 = vsel %vm2359, %v2343, 0.0
        %v2977 = vrot.slane %v2976, 4
        %v2978 = vadd.f32 %v2976, %v2977
        %v2979 = vrot.slane %v2978, 2
        %v2980 = vadd.f32 %v2978, %v2979
        %v2981 = vrot.slane %v2980, 1
        %v2982 = vadd.f32 %v2980, %v2981
        %v2983 = vsel %vm2359, %v2344, 0.0
        %v2984 = vrot.slane %v2983, 4
        %v2985 = vadd.f32 %v2983, %v2984
        %v2986 = vrot.slane %v2985, 2
        %v2987 = vadd.f32 %v2985, %v2986
        %v2988 = vrot.slane %v2987, 1
        %v2989 = vadd.f32 %v2987, %v2988
        %v2990 = vsel %vm2359, %v2345, 0.0
        %v2991 = vrot.slane %v2990, 4
        %v2992 = vadd.f32 %v2990, %v2991
        %v2993 = vrot.slane %v2992, 2
        %v2994 = vadd.f32 %v2992, %v2993
        %v2995 = vrot.slane %v2994, 1
        %v2996 = vadd.f32 %v2994, %v2995
        %v2997 = vsel %vm2359, %v2346, 0.0
        %v2998 = vrot.slane %v2997, 4
        %v2999 = vadd.f32 %v2997, %v2998
        %v3000 = vrot.slane %v2999, 2
        %v3001 = vadd.f32 %v2999, %v3000
        %v3002 = vrot.slane %v3001, 1
        %v3003 = vadd.f32 %v3001, %v3002
        %v3004 = vsel %vm2359, %v2347, 0.0
        %v3005 = vrot.slane %v3004, 4
        %v3006 = vadd.f32 %v3004, %v3005
        %v3007 = vrot.slane %v3006, 2
        %v3008 = vadd.f32 %v3006, %v3007
        %v3009 = vrot.slane %v3008, 1
        %v3010 = vadd.f32 %v3008, %v3009
        %v3011 = vsel %vm2359, %v2348, 0.0
        %v3012 = vrot.slane %v3011, 4
        %v3013 = vadd.f32 %v3011, %v3012
        %v3014 = vrot.slane %v3013, 2
        %v3015 = vadd.f32 %v3013, %v3014
        %v3016 = vrot.slane %v3015, 1
        %v3017 = vadd.f32 %v3015, %v3016
        %v3018 = vsel %vm2359, %v2349, 0.0
        %v3019 = vrot.slane %v3018, 4
        %v3020 = vadd.f32 %v3018, %v3019
        %v3021 = vrot.slane %v3020, 2
        %v3022 = vadd.f32 %v3020, %v3021
        %v3023 = vrot.slane %v3022, 1
        %v3024 = vadd.f32 %v3022, %v3023
        %v3025 = vsel %vm2359, %v2350, 0.0
        %v3026 = vrot.slane %v3025, 4
        %v3027 = vadd.f32 %v3025, %v3026
        %v3028 = vrot.slane %v3027, 2
        %v3029 = vadd.f32 %v3027, %v3028
        %v3030 = vrot.slane %v3029, 1
        %v3031 = vadd.f32 %v3029, %v3030
        %v3032 = vsel %vm2359, %v2351, 0.0
        %v3033 = vrot.slane %v3032, 4
        %v3034 = vadd.f32 %v3032, %v3033
        %v3035 = vrot.slane %v3034, 2
        %v3036 = vadd.f32 %v3034, %v3035
        %v3037 = vrot.slane %v3036, 1
        %v3038 = vadd.f32 %v3036, %v3037
        %v3039 = vsel %vm2359, %v2352, 0.0
        %v3040 = vrot.slane %v3039, 4
        %v3041 = vadd.f32 %v3039, %v3040
        %v3042 = vrot.slane %v3041, 2
        %v3043 = vadd.f32 %v3041, %v3042
        %v3044 = vrot.slane %v3043, 1
        %v3045 = vadd.f32 %v3043, %v3044
        %v3046 = vsel %vm2359, %v2353, 0.0
        %v3047 = vrot.slane %v3046, 4
        %v3048 = vadd.f32 %v3046, %v3047
        %v3049 = vrot.slane %v3048, 2
        %v3050 = vadd.f32 %v3048, %v3049
        %v3051 = vrot.slane %v3050, 1
        %v3052 = vadd.f32 %v3050, %v3051
        %v3053 = vsel %vm2359, %v2354, 0.0
        %v3054 = vrot.slane %v3053, 4
        %v3055 = vadd.f32 %v3053, %v3054
        %v3056 = vrot.slane %v3055, 2
        %v3057 = vadd.f32 %v3055, %v3056
        %v3058 = vrot.slane %v3057, 1
        %v3059 = vadd.f32 %v3057, %v3058
        %v3060 = vsel %vm2359, %v2355, 0.0
        %v3061 = vrot.slane %v3060, 4
        %v3062 = vadd.f32 %v3060, %v3061
        %v3063 = vrot.slane %v3062, 2
        %v3064 = vadd.f32 %v3062, %v3063
        %v3065 = vrot.slane %v3064, 1
        %v3066 = vadd.f32 %v3064, %v3065
        %v3067 = vsel %vm2359, %v2356, 0.0
        %v3068 = vrot.slane %v3067, 4
        %v3069 = vadd.f32 %v3067, %v3068
        %v3070 = vrot.slane %v3069, 2
        %v3071 = vadd.f32 %v3069, %v3070
        %v3072 = vrot.slane %v3071, 1
        %v3073 = vadd.f32 %v3071, %v3072
        %v3074 = vsel %vm2359, %v2357, 0.0
        %v3075 = vrot.slane %v3074, 4
        %v3076 = vadd.f32 %v3074, %v3075
        %v3077 = vrot.slane %v3076, 2
        %v3078 = vadd.f32 %v3076, %v3077
        %v3079 = vrot.slane %v3078, 1
        %v3080 = vadd.f32 %v3078, %v3079
        %v3081 = vsel %vm2359, %v2358, 0.0
        %v3082 = vrot.slane %v3081, 4
        %v3083 = vadd.f32 %v3081, %v3082
        %v3084 = vrot.slane %v3083, 2
        %v3085 = vadd.f32 %v3083, %v3084
        %v3086 = vrot.slane %v3085, 1
        %v3087 = vadd.f32 %v3085, %v3086
        %v3088 = vld [vmem:[%s551] sm:$0xff]
        %v3089 = vld [vmem:[%s551 + $0x8] sm:$0xff]
        %v3090 = vld [vmem:[%s551 + $0x10] sm:$0xff]
        %v3091 = vld [vmem:[%s551 + $0x18] sm:$0xff]
        %v3092 = vld [vmem:[%s551 + $0x20] sm:$0xff]
        %v3093 = vld [vmem:[%s551 + $0x28] sm:$0xff]
        %v3094 = vld [vmem:[%s551 + $0x30] sm:$0xff]
        %v3095 = vld [vmem:[%s551 + $0x38] sm:$0xff]
        %v3096 = vld [vmem:[%s551 + $0x40] sm:$0xff]
        %v3097 = vld [vmem:[%s551 + $0x48] sm:$0xff]
        %v3098 = vld [vmem:[%s551 + $0x50] sm:$0xff]
        %v3099 = vld [vmem:[%s551 + $0x58] sm:$0xff]
        %v3100 = vld [vmem:[%s551 + $0x60] sm:$0xff]
        %vm3205 = vcmask 1041409
        %v3206 = vsel %vm3205, %v2373, %v2366
        %vm3207 = vcmask 1042434
        %v3208 = vsel %vm3207, %v2380, %v3206
        %vm3209 = vcmask 1043459
        %v3210 = vsel %vm3209, %v2387, %v3208
        %vm3211 = vcmask 1044484
        %v3212 = vsel %vm3211, %v2394, %v3210
        %vm3213 = vcmask 1045509
        %v3214 = vsel %vm3213, %v2401, %v3212
        %vm3215 = vcmask 1046534
        %v3216 = vsel %vm3215, %v2408, %v3214
        %vm3217 = vcmask 1047559
        %v3218 = vsel %vm3217, %v2415, %v3216
        %v3219 = vsel %vm3205, %v2429, %v2422
        %v3220 = vsel %vm3207, %v2436, %v3219
        %v3221 = vsel %vm3209, %v2443, %v3220
        %v3222 = vsel %vm3211, %v2450, %v3221
        %v3223 = vsel %vm3213, %v2457, %v3222
        %v3224 = vsel %vm3215, %v2464, %v3223
        %v3225 = vsel %vm3217, %v2471, %v3224
        %v3226 = vsel %vm3205, %v2485, %v2478
        %v3227 = vsel %vm3207, %v2492, %v3226
        %v3228 = vsel %vm3209, %v2499, %v3227
        %v3229 = vsel %vm3211, %v2506, %v3228
        %v3230 = vsel %vm3213, %v2513, %v3229
        %v3231 = vsel %vm3215, %v2520, %v3230
        %v3232 = vsel %vm3217, %v2527, %v3231
        %v3233 = vsel %vm3205, %v2541, %v2534
        %v3234 = vsel %vm3207, %v2548, %v3233
        %v3235 = vsel %vm3209, %v2555, %v3234
        %v3236 = vsel %vm3211, %v2562, %v3235
        %v3237 = vsel %vm3213, %v2569, %v3236
        %v3238 = vsel %vm3215, %v2576, %v3237
        %v3239 = vsel %vm3217, %v2583, %v3238
        %v3240 = vsel %vm3205, %v2597, %v2590
        %v3241 = vsel %vm3207, %v2604, %v3240
        %v3242 = vsel %vm3209, %v2611, %v3241
        %v3243 = vsel %vm3211, %v2618, %v3242
        %v3244 = vsel %vm3213, %v2625, %v3243
        %v3245 = vsel %vm3215, %v2632, %v3244
        %v3246 = vsel %vm3217, %v2639, %v3245
        %v3247 = vsel %vm3205, %v2653, %v2646
        %v3248 = vsel %vm3207, %v2660, %v3247
        %v3249 = vsel %vm3209, %v2667, %v3248
        %v3250 = vsel %vm3211, %v2674, %v3249
        %v3251 = vsel %vm3213, %v2681, %v3250
        %v3252 = vsel %vm3215, %v2688, %v3251
        %v3253 = vsel %vm3217, %v2695, %v3252
        %v3254 = vsel %vm3205, %v2709, %v2702
        %v3255 = vsel %vm3207, %v2716, %v3254
        %v3256 = vsel %vm3209, %v2723, %v3255
        %v3257 = vsel %vm3211, %v2730, %v3256
        %v3258 = vsel %vm3213, %v2737, %v3257
        %v3259 = vsel %vm3215, %v2744, %v3258
        %v3260 = vsel %vm3217, %v2751, %v3259
        %v3261 = vsel %vm3205, %v2765, %v2758
        %v3262 = vsel %vm3207, %v2772, %v3261
        %v3263 = vsel %vm3209, %v2779, %v3262
        %v3264 = vsel %vm3211, %v2786, %v3263
        %v3265 = vsel %vm3213, %v2793, %v3264
        %v3266 = vsel %vm3215, %v2800, %v3265
        %v3267 = vsel %vm3217, %v2807, %v3266
        %v3268 = vsel %vm3205, %v2821, %v2814
        %v3269 = vsel %vm3207, %v2828, %v3268
        %v3270 = vsel %vm3209, %v2835, %v3269
        %v3271 = vsel %vm3211, %v2842, %v3270
        %v3272 = vsel %vm3213, %v2849, %v3271
        %v3273 = vsel %vm3215, %v2856, %v3272
        %v3274 = vsel %vm3217, %v2863, %v3273
        %v3275 = vsel %vm3205, %v2877, %v2870
        %v3276 = vsel %vm3207, %v2884, %v3275
        %v3277 = vsel %vm3209, %v2891, %v3276
        %v3278 = vsel %vm3211, %v2898, %v3277
        %v3279 = vsel %vm3213, %v2905, %v3278
        %v3280 = vsel %vm3215, %v2912, %v3279
        %v3281 = vsel %vm3217, %v2919, %v3280
        %v3282 = vsel %vm3205, %v2933, %v2926
        %v3283 = vsel %vm3207, %v2940, %v3282
        %v3284 = vsel %vm3209, %v2947, %v3283
        %v3285 = vsel %vm3211, %v2954, %v3284
        %v3286 = vsel %vm3213, %v2961, %v3285
        %v3287 = vsel %vm3215, %v2968, %v3286
        %v3288 = vsel %vm3217, %v2975, %v3287
        %v3289 = vsel %vm3205, %v2989, %v2982
        %v3290 = vsel %vm3207, %v2996, %v3289
        %v3291 = vsel %vm3209, %v3003, %v3290
        %v3292 = vsel %vm3211, %v3010, %v3291
        %v3293 = vsel %vm3213, %v3017, %v3292
        %v3294 = vsel %vm3215, %v3024, %v3293
        %v3295 = vsel %vm3217, %v3031, %v3294
        %v3296 = vsel %vm3205, %v3045, %v3038
        %v3297 = vsel %vm3207, %v3052, %v3296
        %v3298 = vsel %vm3209, %v3059, %v3297
        %v3299 = vsel %vm3211, %v3066, %v3298
        %v3300 = vsel %vm3213, %v3073, %v3299
        %v3301 = vsel %vm3215, %v3080, %v3300
        %v3302 = vsel %vm3217, %v3087, %v3301
        %v3316 = vsub.f32 %v3088, %v3218
        %v3317 = vsub.f32 %v3089, %v3225
        %v3318 = vsub.f32 %v3090, %v3232
        %v3319 = vsub.f32 %v3091, %v3239
        %v3320 = vsub.f32 %v3092, %v3246
        %v3321 = vsub.f32 %v3093, %v3253
        %v3322 = vsub.f32 %v3094, %v3260
        %v3323 = vsub.f32 %v3095, %v3267
        %v3324 = vsub.f32 %v3096, %v3274
        %v3325 = vsub.f32 %v3097, %v3281
        %v3326 = vsub.f32 %v3098, %v3288
        %v3327 = vsub.f32 %v3099, %v3295
        %v3328 = vsub.f32 %v3100, %v3302
        %v3329 = vmul.f32 %v3316, %v3316
        %v3330 = vmul.f32 %v3317, %v3317
        %v3331 = vmul.f32 %v3318, %v3318
        %v3332 = vmul.f32 %v3319, %v3319
        %v3333 = vmul.f32 %v3320, %v3320
        %v3334 = vmul.f32 %v3321, %v3321
        %v3335 = vmul.f32 %v3322, %v3322
        %v3336 = vmul.f32 %v3323, %v3323
        %v3337 = vmul.f32 %v3324, %v3324
        %v3338 = vmul.f32 %v3325, %v3325
        %v3339 = vmul.f32 %v3326, %v3326
        %v3340 = vmul.f32 %v3327, %v3327
        %v3341 = vmul.f32 %v3328, %v3328
        %vm3342 = vcmask 195584
        %v3343 = vsel %vm3342, %v3329, 0.0
        %3344 = vadd.xlane.f32.xlu0 %v3343
        %v3345 = vpop.xlane.xlu0 %3344
        %v3346 = vsel %vm3342, %v3330, 0.0
        %3347 = vadd.xlane.f32.xlu0 %v3346
        %v3348 = vpop.xlane.xlu0 %3347
        %v3349 = vsel %vm3342, %v3331, 0.0
        %3350 = vadd.xlane.f32.xlu0 %v3349
        %v3351 = vpop.xlane.xlu0 %3350
        %v3352 = vsel %vm3342, %v3332, 0.0
        %3353 = vadd.xlane.f32.xlu0 %v3352
        %v3354 = vpop.xlane.xlu0 %3353
        %v3355 = vsel %vm3342, %v3333, 0.0
        %3356 = vadd.xlane.f32.xlu0 %v3355
        %v3357 = vpop.xlane.xlu0 %3356
        %v3358 = vsel %vm3342, %v3334, 0.0
        %3359 = vadd.xlane.f32.xlu0 %v3358
        %v3360 = vpop.xlane.xlu0 %3359
        %v3361 = vsel %vm3342, %v3335, 0.0
        %3362 = vadd.xlane.f32.xlu0 %v3361
        %v3363 = vpop.xlane.xlu0 %3362
        %v3364 = vsel %vm3342, %v3336, 0.0
        %3365 = vadd.xlane.f32.xlu0 %v3364
        %v3366 = vpop.xlane.xlu0 %3365
        %v3367 = vsel %vm3342, %v3337, 0.0
        %3368 = vadd.xlane.f32.xlu0 %v3367
        %v3369 = vpop.xlane.xlu0 %3368
        %v3370 = vsel %vm3342, %v3338, 0.0
        %3371 = vadd.xlane.f32.xlu0 %v3370
        %v3372 = vpop.xlane.xlu0 %3371
        %v3373 = vsel %vm3342, %v3339, 0.0
        %3374 = vadd.xlane.f32.xlu0 %v3373
        %v3375 = vpop.xlane.xlu0 %3374
        %v3376 = vsel %vm3342, %v3340, 0.0
        %3377 = vadd.xlane.f32.xlu0 %v3376
        %v3378 = vpop.xlane.xlu0 %3377
        %v3379 = vsel %vm3342, %v3341, 0.0
        %3380 = vadd.xlane.f32.xlu0 %v3379
        %v3381 = vpop.xlane.xlu0 %3380
        %vm3382 = vcmask 7168
        %3383 = vst.msk [vmem:[%s563] sm:$0xff] %vm3382, %v3345
        %3384 = vst.msk [vmem:[%s563 + $0x8] sm:$0xff] %vm3382, %v3348
        %3385 = vst.msk [vmem:[%s563 + $0x10] sm:$0xff] %vm3382, %v3351
        %3386 = vst.msk [vmem:[%s563 + $0x18] sm:$0xff] %vm3382, %v3354
        %3387 = vst.msk [vmem:[%s563 + $0x20] sm:$0xff] %vm3382, %v3357
        %3388 = vst.msk [vmem:[%s563 + $0x28] sm:$0xff] %vm3382, %v3360
        %3389 = vst.msk [vmem:[%s563 + $0x30] sm:$0xff] %vm3382, %v3363
        %3390 = vst.msk [vmem:[%s563 + $0x38] sm:$0xff] %vm3382, %v3366
        %3391 = vst.msk [vmem:[%s563 + $0x40] sm:$0xff] %vm3382, %v3369
        %3392 = vst.msk [vmem:[%s563 + $0x48] sm:$0xff] %vm3382, %v3372
        %3393 = vst.msk [vmem:[%s563 + $0x50] sm:$0xff] %vm3382, %v3375
        %3394 = vst.msk [vmem:[%s563 + $0x58] sm:$0xff] %vm3382, %v3378
        %3395 = vst.msk [vmem:[%s563 + $0x60] sm:$0xff] %vm3382, %v3381
        %s3396 = smul.u32 13, %s27
        %p3397 = scmp.lt.s32.totalorder %s3396, 25
        %s3398 = scalar_select %p3397, %s3396, 25
        %s3399 = smul.addr %s3398, 8
        %s3400 = scalar_lea.vmem %s13, %s3399
        %s3401 = smul.u32 13, %s27
        %p3402 = scmp.lt.s32.totalorder %s3401, 25
        %s3403 = scalar_select %p3402, %s3401, 25
        %s3404 = smul.addr %s3403, 8
        %s3405 = scalar_lea.vmem %s14, %s3404
        // Predicated region
        $region77: #{fcnet_pallas_forward.1} parent=71 // pred_check
          %p3406 = pneg %p338
        $region78: #{fcnet_pallas_forward.1} parent=71 // pred_check_branch
          %3408 = sbr.rel (%p3406) target = $region80
        $region79: #{fcnet_pallas_forward.1} parent=71 // pred_region
          %s3409 = smul.u32 13, %s27
        $region80: #{fcnet_pallas_forward.1} parent=71 // pred_fallthru
          _
        // Predicated region
        $region81: #{fcnet_pallas_forward.1} parent=71 // pred_check
          %p3410 = pneg %p364
        $region82: #{fcnet_pallas_forward.1} parent=71 // pred_check_branch
          %3412 = sbr.rel (%p3410) target = $region84
        $region83: #{fcnet_pallas_forward.1} parent=71 // pred_region
          %s3413 = smul.u32 13, %s27
        $region84: #{fcnet_pallas_forward.1} parent=71 // pred_fallthru
          _
      $region72: #{fcnet_pallas_forward.1} parent=5 // pred_fallthru
        _
      %p3414 = scmp.le.s32.totalorder 2, %s22
      // Predicated region
      $region85: #{fcnet_pallas_forward.1} parent=5 // pred_check
        %p3415 = pneg %p3414
      $region86: #{fcnet_pallas_forward.1} parent=5 // pred_check_branch
        %3417 = sbr.rel (%p3415) target = $region88
      $region87: #{fcnet_pallas_forward.1} parent=5 // pred_region
        %s3418 = ssub.s32 %s22, 2
        // Predicated region
        $region89: #{fcnet_pallas_forward.1} parent=87 // pred_check
          %p3419 = pneg %p344
        $region90: #{fcnet_pallas_forward.1} parent=87 // pred_check_branch
          %3421 = sbr.rel (%p3419) target = $region92
        $region91: #{fcnet_pallas_forward.1} parent=87 // pred_region
          %s3422 = smul.u32 13, %s28
          %p3423 = scmp.lt.s32.totalorder %s3422, 25
          %s3424 = scalar_select %p3423, %s3422, 25
          %s3425 = smul.addr %s3424, 8
          %s3426 = scalar_lea.vmem %s13, %s3425
        $region92: #{fcnet_pallas_forward.1} parent=87 // pred_fallthru
          _
        // Predicated region
        $region93: #{fcnet_pallas_forward.1} parent=87 // pred_check
          %p3427 = pneg %p370
        $region94: #{fcnet_pallas_forward.1} parent=87 // pred_check_branch
          %3429 = sbr.rel (%p3427) target = $region96
        $region95: #{fcnet_pallas_forward.1} parent=87 // pred_region
          %s3430 = smul.u32 13, %s28
          %p3431 = scmp.lt.s32.totalorder %s3430, 25
          %s3432 = scalar_select %p3431, %s3430, 25
          %s3433 = smul.addr %s3432, 8
          %s3434 = scalar_lea.vmem %s14, %s3433
        $region96: #{fcnet_pallas_forward.1} parent=87 // pred_fallthru
          _
      $region88: #{fcnet_pallas_forward.1} parent=5 // pred_fallthru
        _
    $region6: #{fcnet_pallas_forward.1} parent=1 // loop_footer
      %s26 = sadd.s32 1, %s22
    $region7: #{fcnet_pallas_forward.1} parent=1 // loop_footer_branch
      %21 = sbr.rel target = $region3
    $region8: #{fcnet_pallas_forward.1} parent=1 // loop_exit
      _
    %3435 = vsyncpa [#allocation3], 1
    %s3436 = scalar_lea.sflag [#allocation3], 1
    %3437 = vsyncpa %s3436, 1

</llo_original>
